<compile_context>
chip_gen: v5e
topology: v5e:2x2
jax: 0.10.0
libtpu: 0.0.40
codegen_flags: <defaults>
</compile_context>

<pallas_src>
import functools

import numpy as np
import jax
import jax.numpy as jnp
from jax.experimental import pallas as pl
from jax.experimental.pallas import tpu as pltpu

EPS = 1e-5
EXPANSION = 4
LANE = 128                   # channel dims padded to a multiple of this
TM_TARGET = 512              # rows per tile for the row-tiled kernels
MXU_DTYPE = jnp.bfloat16     # MXU input dtype (f32 accumulation)
ACT_DTYPE = jnp.bfloat16     # storage dtype of the c1 / c2 activation slabs


def _pick_vmem_limit():
    """~half the chip's VMEM: 64 MiB on v5e/v6e (128 MiB), 32 MiB on v7x."""
    try:
        info = pltpu.get_tpu_info()
        cap = (getattr(info, "vmem_capacity_bytes", None)
               or getattr(info, "vmem_size_bytes", None))
        if cap:
            return int(max(32 << 20, min(100 << 20, int(cap) // 2)))
    except Exception:
        pass
    return 48 << 20


VMEM_LIMIT = _pick_vmem_limit()


# ---------------------------------------------------------------------------
# small helpers
# ---------------------------------------------------------------------------
def _round_up(x, m):
    return (x + m - 1) // m * m


def _row_tile(m):
    tm = min(TM_TARGET, _round_up(m, 8))
    return tm, _round_up(m, tm)


def _pad_axis(x, axis, new_size):
    pad = new_size - x.shape[axis]
    if pad == 0:
        return x
    widths = [(0, 0)] * x.ndim
    widths[axis] = (0, pad)
    return jnp.pad(x, widths)


def _finalize_stats(psum, psq, m_real):
    """(T,1,C) partial sums -> BN (mean, rsqrt(var+eps)), each (1,C) f32
    (biased variance over the M_real real rows = PyTorch training-mode BN)."""
    mean = jnp.sum(psum, axis=0) / m_real
    ex2 = jnp.sum(psq, axis=0) / m_real
    var = jnp.maximum(ex2 - mean * mean, 0.0)
    # TODO(synk): Welford-style merge of per-tile (mean, M2) would avoid the
    # E[x^2]-E[x]^2 cancellation for very large row counts.
    return mean, jax.lax.rsqrt(var + EPS)


# ---------------------------------------------------------------------------
# Kernel 1: bn1 statistics — "parallel" per-tile partial sums + tiny reduce
# ---------------------------------------------------------------------------
def _bn_partial_stats_kernel(x_ref, sum_ref, sq_ref):
    x = x_ref[...].astype(jnp.float32)
    sum_ref[0] = jnp.sum(x, axis=0, keepdims=True)
    sq_ref[0] = jnp.sum(x * x, axis=0, keepdims=True)


def bn_stats(x2d_p, m_real, tm):
    """x2d_p: (M_pad, C); padded rows must be exactly zero (jnp.pad), so no
    row masking is needed. Per-tile partials keep both v7x TCs busy."""
    m_pad, c = x2d_p.shape
    nt = m_pad // tm
    psum, psq = pl.pallas_call(
        _bn_partial_stats_kernel,
        grid=(nt,),
        in_specs=[pl.BlockSpec((tm, c), lambda i: (i, 0))],
        out_specs=[pl.BlockSpec((1, 1, c), lambda i: (i, 0, 0)),
                   pl.BlockSpec((1, 1, c), lambda i: (i, 0, 0))],
        out_shape=[jax.ShapeDtypeStruct((nt, 1, c), jnp.float32),
                   jax.ShapeDtypeStruct((nt, 1, c), jnp.float32)],
        compiler_params=pltpu.CompilerParams(
            dimension_semantics=("parallel",), vmem_limit_bytes=VMEM_LIMIT),
        cost_estimate=pl.CostEstimate(
            flops=3 * m_pad * c, transcendentals=0,
            bytes_accessed=x2d_p.dtype.itemsize * m_pad * c + 8 * nt * c),
    )(x2d_p)
    return _finalize_stats(psum, psq, m_real)


# ---------------------------------------------------------------------------
# Kernel 2: fused  relu(bn(x)) @ W   [+ residual | + next-BN partial stats]
# ---------------------------------------------------------------------------
def _bn_relu_matmul_kernel(x_ref, mean_ref, inv_ref, g_ref, b_ref, w_ref,
                           o_ref, *, mxu_dtype):
    scale = inv_ref[...] * g_ref[...]
    shift = b_ref[...] - mean_ref[...] * scale
    a = jnp.maximum(x_ref[...].astype(jnp.float32) * scale + shift, 0.0)
    o_ref[...] = jnp.dot(a.astype(mxu_dtype), w_ref[...],
                         preferred_element_type=jnp.float32).astype(o_ref.dtype)


def _bn_relu_matmul_stats_kernel(x_ref, mean_ref, inv_ref, g_ref, b_ref, w_ref,
                                 o_ref, sum_ref, sq_ref, *, mxu_dtype, m_real,
                                 tm, mask_rows):
    scale = inv_ref[...] * g_ref[...]
    shift = b_ref[...] - mean_ref[...] * scale
    a = jnp.maximum(x_ref[...].astype(jnp.float32) * scale + shift, 0.0)
    acc = jnp.dot(a.astype(mxu_dtype), w_ref[...],
                  preferred_element_type=jnp.float32)
    o_ref[...] = acc.astype(o_ref.dtype)
    # fused partial BN statistics of this kernel's output (feeds the next BN).
    if mask_rows:   # padded rows are relu(shift) @ W != 0 -> exclude them
        row = pl.program_id(0) * tm + jax.lax.broadcasted_iota(
            jnp.int32, (acc.shape[0], 1), 0)
        acc = jnp.where(row < m_real, acc, 0.0)
    sum_ref[0] = jnp.sum(acc, axis=0, keepdims=True)
    sq_ref[0] = jnp.sum(acc * acc, axis=0, keepdims=True)


def _bn_relu_matmul_add_kernel(x_ref, mean_ref, inv_ref, g_ref, b_ref, w_ref,
                               r_ref, o_ref, *, mxu_dtype):
    scale = inv_ref[...] * g_ref[...]
    shift = b_ref[...] - mean_ref[...] * scale
    a = jnp.maximum(x_ref[...].astype(jnp.float32) * scale + shift, 0.0)
    acc = jnp.dot(a.astype(mxu_dtype), w_ref[...],
                  preferred_element_type=jnp.float32)
    o_ref[...] = (acc + r_ref[...].astype(jnp.float32)).astype(o_ref.dtype)


def bn_relu_matmul(x2d_p, mean, inv, gamma, beta, w, tm, *,
                   out_dtype=jnp.float32, residual=None,
                   emit_stats=False, m_real=None):
    """o = relu((x - mean) * inv * gamma + beta) @ w   [+ residual]
    Row-tiled "parallel" grid; BN+ReLU fused as the matmul prologue. Either
    emits per-tile (sum, sum-sq) of the output (fused next-BN statistics) or
    fuses a residual add with the residual buffer aliased to the output."""
    m_pad, cin = x2d_p.shape
    cout = w.shape[1]
    nt = m_pad // tm
    grid = (nt,)
    row_spec = pl.BlockSpec((tm, cin), lambda i: (i, 0))
    vec_spec = pl.BlockSpec((1, cin), lambda i: (0, 0))
    w_spec = pl.BlockSpec((cin, cout), lambda i: (0, 0))
    out_spec = pl.BlockSpec((tm, cout), lambda i: (i, 0))
    bytes_acc = (x2d_p.dtype.itemsize * m_pad * cin
                 + jnp.dtype(out_dtype).itemsize * m_pad * cout
                 + w.dtype.itemsize * cin * cout
                 + (4 * m_pad * cout if residual is not None else 0))
    cost = pl.CostEstimate(flops=2 * m_pad * cin * cout, transcendentals=0,
                           bytes_accessed=bytes_acc)
    params = pltpu.CompilerParams(dimension_semantics=("parallel",),
                                  vmem_limit_bytes=VMEM_LIMIT)

    if residual is not None:
        return pl.pallas_call(
            functools.partial(_bn_relu_matmul_add_kernel, mxu_dtype=w.dtype),
            grid=grid,
            in_specs=[row_spec, vec_spec, vec_spec, vec_spec, vec_spec, w_spec,
                      pl.BlockSpec((tm, cout), lambda i: (i, 0))],
            out_specs=out_spec,
            out_shape=jax.ShapeDtypeStruct((m_pad, cout), out_dtype),
            input_output_aliases={6: 0},     # residual buffer -> output buffer
            compiler_params=params, cost_estimate=cost,
        )(x2d_p, mean, inv, gamma, beta, w, residual)

    if emit_stats:
        kernel = functools.partial(
            _bn_relu_matmul_stats_kernel, mxu_dtype=w.dtype, m_real=m_real,
            tm=tm, mask_rows=(m_pad != m_real))
        return pl.pallas_call(
            kernel, grid=grid,
            in_specs=[row_spec, vec_spec, vec_spec, vec_spec, vec_spec, w_spec],
            out_specs=[out_spec,
                       pl.BlockSpec((1, 1, cout), lambda i: (i, 0, 0)),
                       pl.BlockSpec((1, 1, cout), lambda i: (i, 0, 0))],
            out_shape=[jax.ShapeDtypeStruct((m_pad, cout), out_dtype),
                       jax.ShapeDtypeStruct((nt, 1, cout), jnp.float32),
                       jax.ShapeDtypeStruct((nt, 1, cout), jnp.float32)],
            compiler_params=params, cost_estimate=cost,
        )(x2d_p, mean, inv, gamma, beta, w)

    return pl.pallas_call(
        functools.partial(_bn_relu_matmul_kernel, mxu_dtype=w.dtype),
        grid=grid,
        in_specs=[row_spec, vec_spec, vec_spec, vec_spec, vec_spec, w_spec],
        out_specs=out_spec,
        out_shape=jax.ShapeDtypeStruct((m_pad, cout), out_dtype),
        compiler_params=params, cost_estimate=cost,
    )(x2d_p, mean, inv, gamma, beta, w)


# ---------------------------------------------------------------------------
# Kernel 3: shortcut 1x1 / stride-s projection with the strided subsample
#           expressed directly in the BlockSpec (DMA does the strided read)
# ---------------------------------------------------------------------------
def _strided_1x1_kernel(x_ref, mean_ref, inv_ref, g_ref, b_ref, w_ref, o_ref,
                        *, mxu_dtype):
    scale = inv_ref[...] * g_ref[...]
    shift = b_ref[...] - mean_ref[...] * scale
    v = x_ref[0, :, 0, :, :].astype(jnp.float32)            # (Ho, Wo, Cin)
    a = jnp.maximum(v * scale + shift, 0.0)
    ho, wo, cin = a.shape
    o_ref[0] = jnp.dot(a.reshape(ho * wo, cin).astype(mxu_dtype), w_ref[...],
                       preferred_element_type=jnp.float32).astype(o_ref.dtype)


def strided_shortcut(x_nhwc, mean, inv, gamma, beta, w, stride):
    """Shortcut = conv1x1_stride_s(relu(bn1(x))). The stride-s subsample is a
    strided DMA (BlockSpec over a metadata-only reshape), not an XLA gather.
    Requires H % s == 0 and W % s == 0. Returns (N, Ho*Wo, Cout) f32."""
    n, h, w_dim, cin = x_nhwc.shape
    s = stride
    ho, wo = h // s, w_dim // s
    cout = w.shape[1]
    x5 = x_nhwc.reshape(n, ho, s, wo, s * cin)               # free reshape
    vec_spec = pl.BlockSpec((1, cin), lambda i: (0, 0))
    return pl.pallas_call(
        functools.partial(_strided_1x1_kernel, mxu_dtype=w.dtype),
        grid=(n,),
        in_specs=[pl.BlockSpec((1, ho, 1, wo, cin), lambda i: (i, 0, 0, 0, 0)),
                  vec_spec, vec_spec, vec_spec, vec_spec,
                  pl.BlockSpec((cin, cout), lambda i: (0, 0))],
        out_specs=pl.BlockSpec((1, ho * wo, cout), lambda i: (i, 0, 0)),
        out_shape=jax.ShapeDtypeStruct((n, ho * wo, cout), jnp.float32),
        compiler_params=pltpu.CompilerParams(
            dimension_semantics=("parallel",), vmem_limit_bytes=VMEM_LIMIT),
        cost_estimate=pl.CostEstimate(
            flops=2 * n * ho * wo * cin * cout, transcendentals=0,
            bytes_accessed=(x_nhwc.dtype.itemsize * n * ho * wo * cin
                            + w.dtype.itemsize * cin * cout
                            + 4 * n * ho * wo * cout)),
    )(x5, mean, inv, gamma, beta, w)


# ---------------------------------------------------------------------------
# Kernel 4: conv3x3(relu(bn(x)), stride, pad=1) without im2col;
#           BN/ReLU/mask/cast hoisted to one pass; bn3 partial stats fused
# ---------------------------------------------------------------------------
def _conv3x3_bn_relu_kernel(sub_ref, mask_ref, mean_ref, inv_ref, g_ref, b_ref,
                            w_ref, o_ref, sum_ref, sq_ref, a_scr,
                            *, stride, Ho, Wo, hsub, cin, cout, mxu_dtype):
    s = stride
    scale = inv_ref[...] * g_ref[...]                        # (1, cin)
    shift = b_ref[...] - mean_ref[...] * scale
    # BN2 + ReLU + zero-padding-ring mask + bf16 cast, ONCE for the whole
    # parity slab (hoisted out of the 9-tap loop).
    v = sub_ref[0].astype(jnp.float32)                       # (s*s*hsub, wsub, cin)
    a_scr[...] = (jnp.maximum(v * scale + shift, 0.0)
                  * mask_ref[...]).astype(mxu_dtype)
    # 9 tap matmuls: pure static slices of the normalized slab + MXU dots.
    acc = jnp.zeros((Ho * Wo, cout), jnp.float32)
    for kh in range(3):
        for kw in range(3):
            parity = (kh % s) * s + (kw % s)
            row0 = parity * hsub + kh // s
            qw0 = kw // s
            at = a_scr[row0:row0 + Ho, qw0:qw0 + Wo, :].reshape(Ho * Wo, cin)
            t = kh * 3 + kw
            acc = acc + jnp.dot(at, w_ref[t * cin:(t + 1) * cin, :],
                                preferred_element_type=jnp.float32)
    o_ref[0] = acc.astype(o_ref.dtype)
    # fused partial BN3 statistics of this image's output rows (all real).
    sum_ref[0] = jnp.sum(acc, axis=0, keepdims=True)
    sq_ref[0] = jnp.sum(acc * acc, axis=0, keepdims=True)


def _ring_mask(s, hsub, wsub, h, w):
    """(s*s*hsub, wsub, 1) f32 mask: 1 on real pixels of the zero-padded image
    in stride-parity layout, 0 on the conv padding ring / alignment padding."""
    r = np.arange(s * s * hsub)[:, None]
    q = np.arange(wsub)[None, :]
    parity = r // hsub
    hh = (r % hsub) * s + parity // s
    ww = q * s + parity % s
    ok = (hh >= 1) & (hh <= h) & (ww >= 1) & (ww <= w)
    return jnp.asarray(ok.astype(np.float32)[:, :, None])


def conv3x3_bn_relu(c1, mean, inv, gamma, beta, w_taps, stride, *,
                    out_dtype=jnp.float32):
    """c1: (N, H, W, Cin) *pre-BN* activations; w_taps: (9*Cin, Cout), tap =
    kh*3+kw. Returns conv3x3_stride_pad1(relu(bn2(c1))) as (N, Ho*Wo, Cout)
    plus per-image partial (sum, sum-sq) of the output for bn3."""
    n, h, w_dim, cin = c1.shape
    cout = w_taps.shape[1]
    s = stride
    ho = (h - 1) // s + 1
    wo = (w_dim - 1) // s + 1
    hsub = -(-(h + 2) // s)
    wsub = _round_up(-(-(w_dim + 2) // s), 8)    # sublane-friendly tap slices
    hp, wp = s * hsub, s * wsub

    # Stride-parity re-layout of the zero-padded pre-BN input (~1x traffic in
    # ACT_DTYPE, vs 9x for im2col): every tap becomes a static contiguous slice.
    # TODO(synk): have conv1 emit this parity layout directly (or fuse the
    # relayout into a Pallas pass) to remove this XLA copy entirely.
    c1p = jnp.pad(c1, ((0, 0), (1, hp - h - 1), (1, wp - w_dim - 1), (0, 0)))
    sub = c1p.reshape(n, hsub, s, wsub, s, cin)
    sub = sub.transpose(0, 2, 4, 1, 3, 5).reshape(n, s * s * hsub, wsub, cin)
    mask = _ring_mask(s, hsub, wsub, h, w_dim)

    vec_spec = pl.BlockSpec((1, cin), lambda i: (0, 0))
    kernel = functools.partial(
        _conv3x3_bn_relu_kernel, stride=s, Ho=ho, Wo=wo, hsub=hsub,
        cin=cin, cout=cout, mxu_dtype=w_taps.dtype)
    # TODO(synk): for large feature maps (or v7x's 64 MiB VMEM), add an Ho tile
    # axis to the grid with a 2-row halo instead of one whole image per step.
    return pl.pallas_call(
        kernel,
        grid=(n,),
        in_specs=[
            pl.BlockSpec((1, s * s * hsub, wsub, cin), lambda i: (i, 0, 0, 0)),
            pl.BlockSpec((s * s * hsub, wsub, 1), lambda i: (0, 0, 0)),
            vec_spec, vec_spec, vec_spec, vec_spec,
            pl.BlockSpec((9 * cin, cout), lambda i: (0, 0)),
        ],
        out_specs=[pl.BlockSpec((1, ho * wo, cout), lambda i: (i, 0, 0)),
                   pl.BlockSpec((1, 1, cout), lambda i: (i, 0, 0)),
                   pl.BlockSpec((1, 1, cout), lambda i: (i, 0, 0))],
        out_shape=[jax.ShapeDtypeStruct((n, ho * wo, cout), out_dtype),
                   jax.ShapeDtypeStruct((n, 1, cout), jnp.float32),
                   jax.ShapeDtypeStruct((n, 1, cout), jnp.float32)],
        scratch_shapes=[pltpu.VMEM((s * s * hsub, wsub, cin), w_taps.dtype)],
        compiler_params=pltpu.CompilerParams(
            dimension_semantics=("parallel",), vmem_limit_bytes=VMEM_LIMIT),
        cost_estimate=pl.CostEstimate(
            flops=2 * n * ho * wo * 9 * cin * cout, transcendentals=0,
            bytes_accessed=(c1.dtype.itemsize * n * s * s * hsub * wsub * cin
                            + w_taps.dtype.itemsize * 9 * cin * cout
                            + jnp.dtype(out_dtype).itemsize * n * ho * wo * cout)),
    )(sub, mask, mean, inv, gamma, beta, w_taps)


# ---------------------------------------------------------------------------
# PreActBottleneck forward (Pallas)
# ---------------------------------------------------------------------------
def preact_bottleneck_pallas(x_nchw, p, *, planes, stride, has_shortcut):
    n, cin, h, w = x_nchw.shape
    out_planes = EXPANSION * planes
    s = stride
    ho = (h - 1) // s + 1
    wo = (w - 1) // s + 1

    cin_p = _round_up(cin, LANE)
    pp = _round_up(planes, LANE)
    cout_p = _round_up(out_planes, LANE)

    # NCHW -> NHWC, channels zero-padded to lane multiples (lane-dense stores).
    # TODO(synk): for a stack of bottleneck blocks, keep activations in this
    # NHWC lane-padded layout across blocks instead of converting per block.
    x = jnp.transpose(x_nchw, (0, 2, 3, 1))
    x = _pad_axis(x, 3, cin_p)                               # (N, H, W, Cin_p)

    m1 = n * h * w
    tm1, m1p = _row_tile(m1)
    m2 = n * ho * wo
    tm2, m2p = _row_tile(m2)
    x2d = _pad_axis(x.reshape(m1, cin_p), 0, m1p)            # (M1p, Cin_p)

    # ---- bn1 statistics: parallel per-tile partial sums + tiny reduce -------
    mean1, inv1 = bn_stats(x2d, m1, tm1)

    # ---- conv1 (1x1): relu(bn1(x)) @ w1, bn2 partial stats fused, bf16 out --
    c1_2d, s2, q2 = bn_relu_matmul(x2d, mean1, inv1, p["g1"], p["b1"], p["w1"],
                                   tm1, out_dtype=ACT_DTYPE,
                                   emit_stats=True, m_real=m1)
    mean2, inv2 = _finalize_stats(s2, q2, m1)

    # ---- shortcut ------------------------------------------------------------
    if has_shortcut:
        if s == 1:
            sc2d = bn_relu_matmul(x2d, mean1, inv1, p["g1"], p["b1"],
                                  p["w_sc"], tm1)
        elif h % s == 0 and w % s == 0:
            sc = strided_shortcut(x, mean1, inv1, p["g1"], p["b1"],
                                  p["w_sc"], s)
            sc2d = _pad_axis(sc.reshape(m2, cout_p), 0, m2p)
        else:
            # TODO(synk): odd spatial extents fall back to an XLA strided gather.
            xs = x[:, ::s, ::s, :]
            xs2d = _pad_axis(xs.reshape(m2, cin_p), 0, m2p)
            sc2d = bn_relu_matmul(xs2d, mean1, inv1, p["g1"], p["b1"],
                                  p["w_sc"], tm2)
    else:
        # identity shortcut (stride == 1 and cin == EXPANSION*planes)
        sc2d = _pad_axis(x.reshape(m1, cin_p), 0, m2p)

    # ---- conv2 (3x3, stride, pad 1): hoisted BN2+ReLU, no im2col, bn3 fused --
    c1 = c1_2d[:m1].reshape(n, h, w, pp)
    c2, s3, q3 = conv3x3_bn_relu(c1, mean2, inv2, p["g2"], p["b2"], p["w2"], s,
                                 out_dtype=ACT_DTYPE)
    mean3, inv3 = _finalize_stats(s3, q3, m2)
    c2_2d = _pad_axis(c2.reshape(m2, pp), 0, m2p)

    # ---- conv3 (1x1) + residual: BN3+ReLU prologue, add fused, aliased out ---
    out2d = bn_relu_matmul(c2_2d, mean3, inv3, p["g3"], p["b3"], p["w3"], tm2,
                           residual=sc2d)

    out = out2d[:m2, :out_planes].reshape(n, ho, wo, out_planes)
    return jnp.transpose(out, (0, 3, 1, 2))                  # back to NCHW


# ---------------------------------------------------------------------------
# Pure-JAX reference (NCHW, mirrors the PyTorch forward in training mode)
# ---------------------------------------------------------------------------
def reference_forward(x, p, stride, has_shortcut):
    def bn_relu(x, g, b):
        mean = x.mean(axis=(0, 2, 3), keepdims=True)
        var = ((x - mean) ** 2).mean(axis=(0, 2, 3), keepdims=True)
        y = (x - mean) * jax.lax.rsqrt(var + EPS)
        y = y * g.reshape(1, -1, 1, 1) + b.reshape(1, -1, 1, 1)
        return jnp.maximum(y, 0.0)

    def conv(x, w_oihw, stride=1, pad=0):
        return jax.lax.conv_general_dilated(
            x, w_oihw, (stride, stride), [(pad, pad), (pad, pad)],
            dimension_numbers=("NCHW", "OIHW", "NCHW"))

    out = bn_relu(x, p["bn1_g"], p["bn1_b"])
    sc = conv(out, p["w_sc_oihw"], stride) if has_shortcut else x
    out = conv(out, p["w1_oihw"])
    out = conv(bn_relu(out, p["bn2_g"], p["bn2_b"]), p["w2_oihw"], stride, 1)
    out = conv(bn_relu(out, p["bn3_g"], p["bn3_b"]), p["w3_oihw"])
    return out + sc


# ---------------------------------------------------------------------------
# Deterministic parameter init + Pallas-layout preparation
# ---------------------------------------------------------------------------
def init_reference_params(key, in_planes, planes):
    out_planes = EXPANSION * planes
    ks = jax.random.split(key, 10)
    return {
        "bn1_g": 1.0 + 0.1 * jax.random.normal(ks[0], (in_planes,), jnp.float32),
        "bn1_b": 0.1 * jax.random.normal(ks[1], (in_planes,), jnp.float32),
        "bn2_g": 1.0 + 0.1 * jax.random.normal(ks[2], (planes,), jnp.float32),
        "bn2_b": 0.1 * jax.random.normal(ks[3], (planes,), jnp.float32),
        "bn3_g": 1.0 + 0.1 * jax.random.normal(ks[4], (planes,), jnp.float32),
        "bn3_b": 0.1 * jax.random.normal(ks[5], (planes,), jnp.float32),
        # PyTorch conv weights are OIHW, bias=False
        "w1_oihw": 0.1 * jax.random.normal(ks[6], (planes, in_planes, 1, 1), jnp.float32),
        "w2_oihw": 0.1 * jax.random.normal(ks[7], (planes, planes, 3, 3), jnp.float32),
        "w3_oihw": 0.1 * jax.random.normal(ks[8], (out_planes, planes, 1, 1), jnp.float32),
        "w_sc_oihw": 0.1 * jax.random.normal(ks[9], (out_planes, in_planes, 1, 1), jnp.float32),
    }


def prepare_pallas_params(p, in_planes, planes):
    """Zero-pad channels to lane multiples, lay weights out for matmul
    (lane-dense output channels), cast MXU operands to MXU_DTYPE.
    BN gamma/beta stay f32 as (1, C) rows (padding is zero)."""
    out_planes = EXPANSION * planes
    cin_p = _round_up(in_planes, LANE)
    pp = _round_up(planes, LANE)
    cout_p = _round_up(out_planes, LANE)

    def vec(v, cp):
        return _pad_axis(v.reshape(1, -1), 1, cp).astype(jnp.float32)

    def mat1x1(w_oihw, ci_p, co_p):                 # (O, I, 1, 1) -> (I_p, O_p)
        w = w_oihw[:, :, 0, 0].T
        return _pad_axis(_pad_axis(w, 0, ci_p), 1, co_p).astype(MXU_DTYPE)

    # 3x3 taps: (O, I, 3, 3) -> (kh, kw, I, O) -> (9*I_p, O_p), tap t = kh*3+kw
    w2 = jnp.transpose(p["w2_oihw"], (2, 3, 1, 0))
    w2 = _pad_axis(_pad_axis(w2, 2, pp), 3, pp)
    w2 = w2.reshape(9 * pp, pp).astype(MXU_DTYPE)

    return {
        "g1": vec(p["bn1_g"], cin_p), "b1": vec(p["bn1_b"], cin_p),
        "g2": vec(p["bn2_g"], pp),    "b2": vec(p["bn2_b"], pp),
        "g3": vec(p["bn3_g"], pp),    "b3": vec(p["bn3_b"], pp),
        "w1": mat1x1(p["w1_oihw"], cin_p, pp),
        "w2": w2,
        "w3": mat1x1(p["w3_oihw"], pp, cout_p),
        "w_sc": mat1x1(p["w_sc_oihw"], cin_p, cout_p),
    }


if __name__ == "__main__":
    # Small shapes consistent with the module: batch=2, in_planes=16, planes=8,
    # stride=2 (projection shortcut exercised), 16x16 spatial.
    N, in_planes, planes, stride, H, W = 2, 16, 8, 2, 16, 16
    has_shortcut = (stride != 1) or (in_planes != EXPANSION * planes)

    key = jax.random.PRNGKey(0)
    kx, kp = jax.random.split(key)
    x = jax.random.normal(kx, (N, in_planes, H, W), jnp.float32)   # NCHW input
    ref_params = init_reference_params(kp, in_planes, planes)
    pallas_params = prepare_pallas_params(ref_params, in_planes, planes)

    fwd = jax.jit(functools.partial(
        preact_bottleneck_pallas,
        planes=planes, stride=stride, has_shortcut=has_shortcut))
    out = jax.block_until_ready(fwd(x, pallas_params))

    ref = jax.block_until_ready(
        reference_forward(x, ref_params, stride, has_shortcut))

    assert out.shape == ref.shape, (out.shape, ref.shape)
    # bf16 MXU inputs + bf16 c1/c2 slabs (f32 accumulation / f32 BN statistics)
    tol = 1e-3 if MXU_DTYPE == jnp.float32 else 5e-2
    max_err = float(jnp.max(jnp.abs(out - ref)))
    assert jnp.allclose(out, ref, atol=tol, rtol=tol), max_err

    print("KERNEL_OK")
</pallas_src>

<mosaic_0001>
module attributes {stable_mosaic.version = 11 : i64} {
  func.func @_bn_partial_stats_kernel(%arg0: i32, %arg1: memref<512x128xf32, #tpu.memory_space<vmem>>, %arg2: memref<1x1x128xf32, #tpu.memory_space<vmem>>, %arg3: memref<1x1x128xf32, #tpu.memory_space<vmem>>) attributes {dimension_semantics = [#tpu.dimension_semantics<parallel>], iteration_bounds = array<i64: 1>, scalar_prefetch = 0 : i64, scratch_operands = 0 : i64, tpu.core_type = #tpu.core_type<tc>, window_params = [{transform_indices = @transform_0, window_bounds = array<i64: 512, 128>}, {transform_indices = @transform_1, window_bounds = array<i64: 1, 1, 128>}, {transform_indices = @transform_2, window_bounds = array<i64: 1, 1, 128>}]} {
    %c0 = arith.constant 0 : index
    %c0_0 = arith.constant 0 : index
    %0 = vector.load %arg1[%c0, %c0_0] : memref<512x128xf32, #tpu.memory_space<vmem>>, vector<512x128xf32>
    %cst = arith.constant dense<0.000000e+00> : vector<128xf32>
    %1 = vector.multi_reduction <add>, %0, %cst [0] : vector<512x128xf32> to vector<128xf32>
    %2 = vector.shape_cast %1 : vector<128xf32> to vector<1x128xf32>
    %c0_1 = arith.constant 0 : index
    %c0_2 = arith.constant 0 : index
    %c0_3 = arith.constant 0 : index
    %3 = vector.load %arg2[%c0_1, %c0_2, %c0_3] : memref<1x1x128xf32, #tpu.memory_space<vmem>>, vector<1x1x128xf32>
    %4 = vector.shape_cast %3 : vector<1x1x128xf32> to vector<1x128xf32>
    %5 = vector.shape_cast %2 : vector<1x128xf32> to vector<1x1x128xf32>
    tpu.vector_store %arg2[%c0_1, %c0_2, %c0_3], %5 {strides = array<i32>} : memref<1x1x128xf32, #tpu.memory_space<vmem>>, vector<1x1x128xf32>,
    %6 = arith.mulf %0, %0 : vector<512x128xf32>
    %cst_4 = arith.constant dense<0.000000e+00> : vector<128xf32>
    %7 = vector.multi_reduction <add>, %6, %cst_4 [0] : vector<512x128xf32> to vector<128xf32>
    %8 = vector.shape_cast %7 : vector<128xf32> to vector<1x128xf32>
    %c0_5 = arith.constant 0 : index
    %c0_6 = arith.constant 0 : index
    %c0_7 = arith.constant 0 : index
    %9 = vector.load %arg3[%c0_5, %c0_6, %c0_7] : memref<1x1x128xf32, #tpu.memory_space<vmem>>, vector<1x1x128xf32>
    %10 = vector.shape_cast %9 : vector<1x1x128xf32> to vector<1x128xf32>
    %11 = vector.shape_cast %8 : vector<1x128xf32> to vector<1x1x128xf32>
    tpu.vector_store %arg3[%c0_5, %c0_6, %c0_7], %11 {strides = array<i32>} : memref<1x1x128xf32, #tpu.memory_space<vmem>>, vector<1x1x128xf32>,
    return
  }
  func.func @transform_0(%arg0: i32) -> (i32, i32) {
    %c0_i32 = arith.constant 0 : i32
    %c0_i32_0 = arith.constant 0 : i32
    return %arg0, %c0_i32 : i32, i32
  }
  func.func @transform_1(%arg0: i32) -> (i32, i32, i32) {
    %c0_i32 = arith.constant 0 : i32
    %c0_i32_0 = arith.constant 0 : i32
    %c0_i32_1 = arith.constant 0 : i32
    return %arg0, %c0_i32, %c0_i32_0 : i32, i32, i32
  }
  func.func @transform_2(%arg0: i32) -> (i32, i32, i32) {
    %c0_i32 = arith.constant 0 : i32
    %c0_i32_0 = arith.constant 0 : i32
    %c0_i32_1 = arith.constant 0 : i32
    return %arg0, %c0_i32, %c0_i32_0 : i32, i32, i32
  }
}

module attributes {stable_mosaic.version = 11 : i64} {
  func.func @_bn_relu_matmul_stats_kernel(%arg0: i32, %arg1: memref<512x128xf32, #tpu.memory_space<vmem>>, %arg2: memref<1x128xf32, #tpu.memory_space<vmem>>, %arg3: memref<1x128xf32, #tpu.memory_space<vmem>>, %arg4: memref<1x128xf32, #tpu.memory_space<vmem>>, %arg5: memref<1x128xf32, #tpu.memory_space<vmem>>, %arg6: memref<128x128xbf16, #tpu.memory_space<vmem>>, %arg7: memref<512x128xbf16, #tpu.memory_space<vmem>>, %arg8: memref<1x1x128xf32, #tpu.memory_space<vmem>>, %arg9: memref<1x1x128xf32, #tpu.memory_space<vmem>>) attributes {dimension_semantics = [#tpu.dimension_semantics<parallel>], iteration_bounds = array<i64: 1>, scalar_prefetch = 0 : i64, scratch_operands = 0 : i64, tpu.core_type = #tpu.core_type<tc>, window_params = [{transform_indices = @transform_0, window_bounds = array<i64: 512, 128>}, {pipeline_mode = #tpu.pipeline_mode<synchronous>, transform_indices = @transform_1, window_bounds = array<i64: 1, 128>}, {pipeline_mode = #tpu.pipeline_mode<synchronous>, transform_indices = @transform_2, window_bounds = array<i64: 1, 128>}, {pipeline_mode = #tpu.pipeline_mode<synchronous>, transform_indices = @transform_3, window_bounds = array<i64: 1, 128>}, {pipeline_mode = #tpu.pipeline_mode<synchronous>, transform_indices = @transform_4, window_bounds = array<i64: 1, 128>}, {pipeline_mode = #tpu.pipeline_mode<synchronous>, transform_indices = @transform_5, window_bounds = array<i64: 128, 128>}, {transform_indices = @transform_6, window_bounds = array<i64: 512, 128>}, {transform_indices = @transform_7, window_bounds = array<i64: 1, 1, 128>}, {transform_indices = @transform_8, window_bounds = array<i64: 1, 1, 128>}]} {
    %c0 = arith.constant 0 : index
    %c0_0 = arith.constant 0 : index
    %0 = vector.load %arg3[%c0, %c0_0] : memref<1x128xf32, #tpu.memory_space<vmem>>, vector<1x128xf32>
    %c0_1 = arith.constant 0 : index
    %c0_2 = arith.constant 0 : index
    %1 = vector.load %arg4[%c0_1, %c0_2] : memref<1x128xf32, #tpu.memory_space<vmem>>, vector<1x128xf32>
    %2 = arith.mulf %0, %1 : vector<1x128xf32>
    %c0_3 = arith.constant 0 : index
    %c0_4 = arith.constant 0 : index
    %3 = vector.load %arg5[%c0_3, %c0_4] : memref<1x128xf32, #tpu.memory_space<vmem>>, vector<1x128xf32>
    %c0_5 = arith.constant 0 : index
    %c0_6 = arith.constant 0 : index
    %4 = vector.load %arg2[%c0_5, %c0_6] : memref<1x128xf32, #tpu.memory_space<vmem>>, vector<1x128xf32>
    %5 = arith.mulf %4, %2 : vector<1x128xf32>
    %6 = arith.subf %3, %5 : vector<1x128xf32>
    %c0_7 = arith.constant 0 : index
    %c0_8 = arith.constant 0 : index
    %7 = vector.load %arg1[%c0_7, %c0_8] : memref<512x128xf32, #tpu.memory_space<vmem>>, vector<512x128xf32>
    %8 = vector.broadcast %2 : vector<1x128xf32> to vector<512x128xf32>
    %9 = arith.mulf %7, %8 : vector<512x128xf32>
    %10 = vector.broadcast %6 : vector<1x128xf32> to vector<512x128xf32>
    %11 = arith.addf %9, %10 : vector<512x128xf32>
    %cst = arith.constant 0.000000e+00 : f32
    %12 = vector.broadcast %cst : f32 to vector<512x128xf32>
    %13 = arith.maximumf %11, %12 : vector<512x128xf32>
    %14 = arith.truncf %13 : vector<512x128xf32> to vector<512x128xbf16>
    %c0_9 = arith.constant 0 : index
    %c0_10 = arith.constant 0 : index
    %15 = vector.load %arg6[%c0_9, %c0_10] : memref<128x128xbf16, #tpu.memory_space<vmem>>, vector<128x128xbf16>
    %cst_11 = arith.constant dense<0.000000e+00> : vector<512x128xf32>
    %16 = tpu.matmul %14, %15, %cst_11 {dimension_numbers = #tpu.dot_dimension_numbers<[1], [0], [0], [1], [0, 0, 1, 1], [], []>} : vector<512x128xbf16>, vector<128x128xbf16>, vector<512x128xf32> -> vector<512x128xf32>
    %17 = arith.truncf %16 : vector<512x128xf32> to vector<512x128xbf16>
    %c0_12 = arith.constant 0 : index
    %c0_13 = arith.constant 0 : index
    %18 = vector.load %arg7[%c0_12, %c0_13] : memref<512x128xbf16, #tpu.memory_space<vmem>>, vector<512x128xbf16>
    tpu.vector_store %arg7[%c0_12, %c0_13], %17 {strides = array<i32>} : memref<512x128xbf16, #tpu.memory_space<vmem>>, vector<512x128xbf16>,
    %cst_14 = arith.constant dense<0.000000e+00> : vector<128xf32>
    %19 = vector.multi_reduction <add>, %16, %cst_14 [0] : vector<512x128xf32> to vector<128xf32>
    %20 = vector.shape_cast %19 : vector<128xf32> to vector<1x128xf32>
    %c0_15 = arith.constant 0 : index
    %c0_16 = arith.constant 0 : index
    %c0_17 = arith.constant 0 : index
    %21 = vector.load %arg8[%c0_15, %c0_16, %c0_17] : memref<1x1x128xf32, #tpu.memory_space<vmem>>, vector<1x1x128xf32>
    %22 = vector.shape_cast %21 : vector<1x1x128xf32> to vector<1x128xf32>
    %23 = vector.shape_cast %20 : vector<1x128xf32> to vector<1x1x128xf32>
    tpu.vector_store %arg8[%c0_15, %c0_16, %c0_17], %23 {strides = array<i32>} : memref<1x1x128xf32, #tpu.memory_space<vmem>>, vector<1x1x128xf32>,
    %24 = arith.mulf %16, %16 : vector<512x128xf32>
    %cst_18 = arith.constant dense<0.000000e+00> : vector<128xf32>
    %25 = vector.multi_reduction <add>, %24, %cst_18 [0] : vector<512x128xf32> to vector<128xf32>
    %26 = vector.shape_cast %25 : vector<128xf32> to vector<1x128xf32>
    %c0_19 = arith.constant 0 : index
    %c0_20 = arith.constant 0 : index
    %c0_21 = arith.constant 0 : index
    %27 = vector.load %arg9[%c0_19, %c0_20, %c0_21] : memref<1x1x128xf32, #tpu.memory_space<vmem>>, vector<1x1x128xf32>
    %28 = vector.shape_cast %27 : vector<1x1x128xf32> to vector<1x128xf32>
    %29 = vector.shape_cast %26 : vector<1x128xf32> to vector<1x1x128xf32>
    tpu.vector_store %arg9[%c0_19, %c0_20, %c0_21], %29 {strides = array<i32>} : memref<1x1x128xf32, #tpu.memory_space<vmem>>, vector<1x1x128xf32>,
    return
  }
  func.func @transform_0(%arg0: i32) -> (i32, i32) {
    %c0_i32 = arith.constant 0 : i32
    %c0_i32_0 = arith.constant 0 : i32
    return %arg0, %c0_i32 : i32, i32
  }
  func.func @transform_1(%arg0: i32) -> (i32, i32) {
    %c0_i32 = arith.constant 0 : i32
    %c0_i32_0 = arith.constant 0 : i32
    %c0_i32_1 = arith.constant 0 : i32
    return %c0_i32, %c0_i32_0 : i32, i32
  }
  func.func @transform_2(%arg0: i32) -> (i32, i32) {
    %c0_i32 = arith.constant 0 : i32
    %c0_i32_0 = arith.constant 0 : i32
    %c0_i32_1 = arith.constant 0 : i32
    return %c0_i32, %c0_i32_0 : i32, i32
  }
  func.func @transform_3(%arg0: i32) -> (i32, i32) {
    %c0_i32 = arith.constant 0 : i32
    %c0_i32_0 = arith.constant 0 : i32
    %c0_i32_1 = arith.constant 0 : i32
    return %c0_i32, %c0_i32_0 : i32, i32
  }
  func.func @transform_4(%arg0: i32) -> (i32, i32) {
    %c0_i32 = arith.constant 0 : i32
    %c0_i32_0 = arith.constant 0 : i32
    %c0_i32_1 = arith.constant 0 : i32
    return %c0_i32, %c0_i32_0 : i32, i32
  }
  func.func @transform_5(%arg0: i32) -> (i32, i32) {
    %c0_i32 = arith.constant 0 : i32
    %c0_i32_0 = arith.constant 0 : i32
    %c0_i32_1 = arith.constant 0 : i32
    return %c0_i32, %c0_i32_0 : i32, i32
  }
  func.func @transform_6(%arg0: i32) -> (i32, i32) {
    %c0_i32 = arith.constant 0 : i32
    %c0_i32_0 = arith.constant 0 : i32
    return %arg0, %c0_i32 : i32, i32
  }
  func.func @transform_7(%arg0: i32) -> (i32, i32, i32) {
    %c0_i32 = arith.constant 0 : i32
    %c0_i32_0 = arith.constant 0 : i32
    %c0_i32_1 = arith.constant 0 : i32
    return %arg0, %c0_i32, %c0_i32_0 : i32, i32, i32
  }
  func.func @transform_8(%arg0: i32) -> (i32, i32, i32) {
    %c0_i32 = arith.constant 0 : i32
    %c0_i32_0 = arith.constant 0 : i32
    %c0_i32_1 = arith.constant 0 : i32
    return %arg0, %c0_i32, %c0_i32_0 : i32, i32, i32
  }
}

module attributes {stable_mosaic.version = 11 : i64} {
  func.func @_conv3x3_bn_relu_kernel(%arg0: i32, %arg1: memref<1x36x16x128xbf16, #tpu.memory_space<vmem>>, %arg2: memref<36x16x1xf32, #tpu.memory_space<vmem>>, %arg3: memref<1x128xf32, #tpu.memory_space<vmem>>, %arg4: memref<1x128xf32, #tpu.memory_space<vmem>>, %arg5: memref<1x128xf32, #tpu.memory_space<vmem>>, %arg6: memref<1x128xf32, #tpu.memory_space<vmem>>, %arg7: memref<1152x128xbf16, #tpu.memory_space<vmem>>, %arg8: memref<1x64x128xbf16, #tpu.memory_space<vmem>>, %arg9: memref<1x1x128xf32, #tpu.memory_space<vmem>>, %arg10: memref<1x1x128xf32, #tpu.memory_space<vmem>>, %arg11: memref<36x16x128xbf16, #tpu.memory_space<vmem>>) attributes {dimension_semantics = [#tpu.dimension_semantics<parallel>], iteration_bounds = array<i64: 2>, scalar_prefetch = 0 : i64, scratch_operands = 1 : i64, tpu.core_type = #tpu.core_type<tc>, window_params = [{transform_indices = @transform_0, window_bounds = array<i64: 1, 36, 16, 128>}, {pipeline_mode = #tpu.pipeline_mode<synchronous>, transform_indices = @transform_1, window_bounds = array<i64: 36, 16, 1>}, {pipeline_mode = #tpu.pipeline_mode<synchronous>, transform_indices = @transform_2, window_bounds = array<i64: 1, 128>}, {pipeline_mode = #tpu.pipeline_mode<synchronous>, transform_indices = @transform_3, window_bounds = array<i64: 1, 128>}, {pipeline_mode = #tpu.pipeline_mode<synchronous>, transform_indices = @transform_4, window_bounds = array<i64: 1, 128>}, {pipeline_mode = #tpu.pipeline_mode<synchronous>, transform_indices = @transform_5, window_bounds = array<i64: 1, 128>}, {pipeline_mode = #tpu.pipeline_mode<synchronous>, transform_indices = @transform_6, window_bounds = array<i64: 1152, 128>}, {transform_indices = @transform_7, window_bounds = array<i64: 1, 64, 128>}, {transform_indices = @transform_8, window_bounds = array<i64: 1, 1, 128>}, {transform_indices = @transform_9, window_bounds = array<i64: 1, 1, 128>}]} {
    %c0 = arith.constant 0 : index
    %c0_0 = arith.constant 0 : index
    %0 = vector.load %arg4[%c0, %c0_0] : memref<1x128xf32, #tpu.memory_space<vmem>>, vector<1x128xf32>
    %c0_1 = arith.constant 0 : index
    %c0_2 = arith.constant 0 : index
    %1 = vector.load %arg5[%c0_1, %c0_2] : memref<1x128xf32, #tpu.memory_space<vmem>>, vector<1x128xf32>
    %2 = arith.mulf %0, %1 : vector<1x128xf32>
    %c0_3 = arith.constant 0 : index
    %c0_4 = arith.constant 0 : index
    %3 = vector.load %arg6[%c0_3, %c0_4] : memref<1x128xf32, #tpu.memory_space<vmem>>, vector<1x128xf32>
    %c0_5 = arith.constant 0 : index
    %c0_6 = arith.constant 0 : index
    %4 = vector.load %arg3[%c0_5, %c0_6] : memref<1x128xf32, #tpu.memory_space<vmem>>, vector<1x128xf32>
    %5 = arith.mulf %4, %2 : vector<1x128xf32>
    %6 = arith.subf %3, %5 : vector<1x128xf32>
    %c0_7 = arith.constant 0 : index
    %c0_8 = arith.constant 0 : index
    %c0_9 = arith.constant 0 : index
    %c0_10 = arith.constant 0 : index
    %7 = vector.load %arg1[%c0_7, %c0_8, %c0_9, %c0_10] : memref<1x36x16x128xbf16, #tpu.memory_space<vmem>>, vector<1x36x16x128xbf16>
    %8 = vector.shape_cast %7 : vector<1x36x16x128xbf16> to vector<36x16x128xbf16>
    %9 = arith.extf %8 : vector<36x16x128xbf16> to vector<36x16x128xf32>
    %10 = vector.shape_cast %2 : vector<1x128xf32> to vector<1x1x128xf32>
    %11 = vector.broadcast %10 : vector<1x1x128xf32> to vector<36x16x128xf32>
    %12 = arith.mulf %9, %11 : vector<36x16x128xf32>
    %13 = vector.shape_cast %6 : vector<1x128xf32> to vector<1x1x128xf32>
    %14 = vector.broadcast %13 : vector<1x1x128xf32> to vector<36x16x128xf32>
    %15 = arith.addf %12, %14 : vector<36x16x128xf32>
    %cst = arith.constant 0.000000e+00 : f32
    %16 = vector.broadcast %cst : f32 to vector<36x16x128xf32>
    %17 = arith.maximumf %15, %16 : vector<36x16x128xf32>
    %c0_11 = arith.constant 0 : index
    %c0_12 = arith.constant 0 : index
    %c0_13 = arith.constant 0 : index
    %18 = vector.load %arg2[%c0_11, %c0_12, %c0_13] : memref<36x16x1xf32, #tpu.memory_space<vmem>>, vector<36x16x1xf32>
    %19 = vector.broadcast %18 : vector<36x16x1xf32> to vector<36x16x128xf32>
    %20 = arith.mulf %17, %19 : vector<36x16x128xf32>
    %21 = arith.truncf %20 : vector<36x16x128xf32> to vector<36x16x128xbf16>
    %c0_14 = arith.constant 0 : index
    %c0_15 = arith.constant 0 : index
    %c0_16 = arith.constant 0 : index
    %22 = vector.load %arg11[%c0_14, %c0_15, %c0_16] : memref<36x16x128xbf16, #tpu.memory_space<vmem>>, vector<36x16x128xbf16>
    tpu.vector_store %arg11[%c0_14, %c0_15, %c0_16], %21 {strides = array<i32>} : memref<36x16x128xbf16, #tpu.memory_space<vmem>>, vector<36x16x128xbf16>,
    %cst_17 = arith.constant 0.000000e+00 : f32
    %23 = vector.broadcast %cst_17 : f32 to vector<64x128xf32>
    %c0_18 = arith.constant 0 : index
    %c0_19 = arith.constant 0 : index
    %c0_20 = arith.constant 0 : index
    %24 = vector.load %arg11[%c0_18, %c0_19, %c0_20] : memref<36x16x128xbf16, #tpu.memory_space<vmem>>, vector<8x8x128xbf16>
    %25 = vector.shape_cast %24 : vector<8x8x128xbf16> to vector<64x128xbf16>
    %c0_21 = arith.constant 0 : index
    %c0_22 = arith.constant 0 : index
    %26 = vector.load %arg7[%c0_21, %c0_22] : memref<1152x128xbf16, #tpu.memory_space<vmem>>, vector<128x128xbf16>
    %cst_23 = arith.constant dense<0.000000e+00> : vector<64x128xf32>
    %27 = tpu.matmul %25, %26, %cst_23 {dimension_numbers = #tpu.dot_dimension_numbers<[1], [0], [0], [1], [0, 0, 1, 1], [], []>} : vector<64x128xbf16>, vector<128x128xbf16>, vector<64x128xf32> -> vector<64x128xf32>
    %28 = arith.addf %23, %27 : vector<64x128xf32>
    %c9 = arith.constant 9 : index
    %c0_24 = arith.constant 0 : index
    %c0_25 = arith.constant 0 : index
    %29 = vector.load %arg11[%c9, %c0_24, %c0_25] : memref<36x16x128xbf16, #tpu.memory_space<vmem>>, vector<8x8x128xbf16>
    %30 = vector.shape_cast %29 : vector<8x8x128xbf16> to vector<64x128xbf16>
    %c128 = arith.constant 128 : index
    %c0_26 = arith.constant 0 : index
    %31 = vector.load %arg7[%c128, %c0_26] : memref<1152x128xbf16, #tpu.memory_space<vmem>>, vector<128x128xbf16>
    %cst_27 = arith.constant dense<0.000000e+00> : vector<64x128xf32>
    %32 = tpu.matmul %30, %31, %cst_27 {dimension_numbers = #tpu.dot_dimension_numbers<[1], [0], [0], [1], [0, 0, 1, 1], [], []>} : vector<64x128xbf16>, vector<128x128xbf16>, vector<64x128xf32> -> vector<64x128xf32>
    %33 = arith.addf %28, %32 : vector<64x128xf32>
    %c0_28 = arith.constant 0 : index
    %c1 = arith.constant 1 : index
    %c0_29 = arith.constant 0 : index
    %34 = vector.load %arg11[%c0_28, %c1, %c0_29] : memref<36x16x128xbf16, #tpu.memory_space<vmem>>, vector<8x8x128xbf16>
    %35 = vector.shape_cast %34 : vector<8x8x128xbf16> to vector<64x128xbf16>
    %c256 = arith.constant 256 : index
    %c0_30 = arith.constant 0 : index
    %36 = vector.load %arg7[%c256, %c0_30] : memref<1152x128xbf16, #tpu.memory_space<vmem>>, vector<128x128xbf16>
    %cst_31 = arith.constant dense<0.000000e+00> : vector<64x128xf32>
    %37 = tpu.matmul %35, %36, %cst_31 {dimension_numbers = #tpu.dot_dimension_numbers<[1], [0], [0], [1], [0, 0, 1, 1], [], []>} : vector<64x128xbf16>, vector<128x128xbf16>, vector<64x128xf32> -> vector<64x128xf32>
    %38 = arith.addf %33, %37 : vector<64x128xf32>
    %c18 = arith.constant 18 : index
    %c0_32 = arith.constant 0 : index
    %c0_33 = arith.constant 0 : index
    %39 = vector.load %arg11[%c18, %c0_32, %c0_33] : memref<36x16x128xbf16, #tpu.memory_space<vmem>>, vector<8x8x128xbf16>
    %40 = vector.shape_cast %39 : vector<8x8x128xbf16> to vector<64x128xbf16>
    %c384 = arith.constant 384 : index
    %c0_34 = arith.constant 0 : index
    %41 = vector.load %arg7[%c384, %c0_34] : memref<1152x128xbf16, #tpu.memory_space<vmem>>, vector<128x128xbf16>
    %cst_35 = arith.constant dense<0.000000e+00> : vector<64x128xf32>
    %42 = tpu.matmul %40, %41, %cst_35 {dimension_numbers = #tpu.dot_dimension_numbers<[1], [0], [0], [1], [0, 0, 1, 1], [], []>} : vector<64x128xbf16>, vector<128x128xbf16>, vector<64x128xf32> -> vector<64x128xf32>
    %43 = arith.addf %38, %42 : vector<64x128xf32>
    %c27 = arith.constant 27 : index
    %c0_36 = arith.constant 0 : index
    %c0_37 = arith.constant 0 : index
    %44 = vector.load %arg11[%c27, %c0_36, %c0_37] : memref<36x16x128xbf16, #tpu.memory_space<vmem>>, vector<8x8x128xbf16>
    %45 = vector.shape_cast %44 : vector<8x8x128xbf16> to vector<64x128xbf16>
    %c512 = arith.constant 512 : index
    %c0_38 = arith.constant 0 : index
    %46 = vector.load %arg7[%c512, %c0_38] : memref<1152x128xbf16, #tpu.memory_space<vmem>>, vector<128x128xbf16>
    %cst_39 = arith.constant dense<0.000000e+00> : vector<64x128xf32>
    %47 = tpu.matmul %45, %46, %cst_39 {dimension_numbers = #tpu.dot_dimension_numbers<[1], [0], [0], [1], [0, 0, 1, 1], [], []>} : vector<64x128xbf16>, vector<128x128xbf16>, vector<64x128xf32> -> vector<64x128xf32>
    %48 = arith.addf %43, %47 : vector<64x128xf32>
    %c18_40 = arith.constant 18 : index
    %c1_41 = arith.constant 1 : index
    %c0_42 = arith.constant 0 : index
    %49 = vector.load %arg11[%c18_40, %c1_41, %c0_42] : memref<36x16x128xbf16, #tpu.memory_space<vmem>>, vector<8x8x128xbf16>
    %50 = vector.shape_cast %49 : vector<8x8x128xbf16> to vector<64x128xbf16>
    %c640 = arith.constant 640 : index
    %c0_43 = arith.constant 0 : index
    %51 = vector.load %arg7[%c640, %c0_43] : memref<1152x128xbf16, #tpu.memory_space<vmem>>, vector<128x128xbf16>
    %cst_44 = arith.constant dense<0.000000e+00> : vector<64x128xf32>
    %52 = tpu.matmul %50, %51, %cst_44 {dimension_numbers = #tpu.dot_dimension_numbers<[1], [0], [0], [1], [0, 0, 1, 1], [], []>} : vector<64x128xbf16>, vector<128x128xbf16>, vector<64x128xf32> -> vector<64x128xf32>
    %53 = arith.addf %48, %52 : vector<64x128xf32>
    %c1_45 = arith.constant 1 : index
    %c0_46 = arith.constant 0 : index
    %c0_47 = arith.constant 0 : index
    %54 = vector.load %arg11[%c1_45, %c0_46, %c0_47] : memref<36x16x128xbf16, #tpu.memory_space<vmem>>, vector<8x8x128xbf16>
    %55 = vector.shape_cast %54 : vector<8x8x128xbf16> to vector<64x128xbf16>
    %c768 = arith.constant 768 : index
    %c0_48 = arith.constant 0 : index
    %56 = vector.load %arg7[%c768, %c0_48] : memref<1152x128xbf16, #tpu.memory_space<vmem>>, vector<128x128xbf16>
    %cst_49 = arith.constant dense<0.000000e+00> : vector<64x128xf32>
    %57 = tpu.matmul %55, %56, %cst_49 {dimension_numbers = #tpu.dot_dimension_numbers<[1], [0], [0], [1], [0, 0, 1, 1], [], []>} : vector<64x128xbf16>, vector<128x128xbf16>, vector<64x128xf32> -> vector<64x128xf32>
    %58 = arith.addf %53, %57 : vector<64x128xf32>
    %c10 = arith.constant 10 : index
    %c0_50 = arith.constant 0 : index
    %c0_51 = arith.constant 0 : index
    %59 = vector.load %arg11[%c10, %c0_50, %c0_51] : memref<36x16x128xbf16, #tpu.memory_space<vmem>>, vector<8x8x128xbf16>
    %60 = vector.shape_cast %59 : vector<8x8x128xbf16> to vector<64x128xbf16>
    %c896 = arith.constant 896 : index
    %c0_52 = arith.constant 0 : index
    %61 = vector.load %arg7[%c896, %c0_52] : memref<1152x128xbf16, #tpu.memory_space<vmem>>, vector<128x128xbf16>
    %cst_53 = arith.constant dense<0.000000e+00> : vector<64x128xf32>
    %62 = tpu.matmul %60, %61, %cst_53 {dimension_numbers = #tpu.dot_dimension_numbers<[1], [0], [0], [1], [0, 0, 1, 1], [], []>} : vector<64x128xbf16>, vector<128x128xbf16>, vector<64x128xf32> -> vector<64x128xf32>
    %63 = arith.addf %58, %62 : vector<64x128xf32>
    %c1_54 = arith.constant 1 : index
    %c1_55 = arith.constant 1 : index
    %c0_56 = arith.constant 0 : index
    %64 = vector.load %arg11[%c1_54, %c1_55, %c0_56] : memref<36x16x128xbf16, #tpu.memory_space<vmem>>, vector<8x8x128xbf16>
    %65 = vector.shape_cast %64 : vector<8x8x128xbf16> to vector<64x128xbf16>
    %c1024 = arith.constant 1024 : index
    %c0_57 = arith.constant 0 : index
    %66 = vector.load %arg7[%c1024, %c0_57] : memref<1152x128xbf16, #tpu.memory_space<vmem>>, vector<128x128xbf16>
    %cst_58 = arith.constant dense<0.000000e+00> : vector<64x128xf32>
    %67 = tpu.matmul %65, %66, %cst_58 {dimension_numbers = #tpu.dot_dimension_numbers<[1], [0], [0], [1], [0, 0, 1, 1], [], []>} : vector<64x128xbf16>, vector<128x128xbf16>, vector<64x128xf32> -> vector<64x128xf32>
    %68 = arith.addf %63, %67 : vector<64x128xf32>
    %69 = arith.truncf %68 : vector<64x128xf32> to vector<64x128xbf16>
    %c0_59 = arith.constant 0 : index
    %c0_60 = arith.constant 0 : index
    %c0_61 = arith.constant 0 : index
    %70 = vector.load %arg8[%c0_59, %c0_60, %c0_61] : memref<1x64x128xbf16, #tpu.memory_space<vmem>>, vector<1x64x128xbf16>
    %71 = vector.shape_cast %70 : vector<1x64x128xbf16> to vector<64x128xbf16>
    %72 = vector.shape_cast %69 : vector<64x128xbf16> to vector<1x64x128xbf16>
    tpu.vector_store %arg8[%c0_59, %c0_60, %c0_61], %72 {strides = array<i32>} : memref<1x64x128xbf16, #tpu.memory_space<vmem>>, vector<1x64x128xbf16>,
    %cst_62 = arith.constant dense<0.000000e+00> : vector<128xf32>
    %73 = vector.multi_reduction <add>, %68, %cst_62 [0] : vector<64x128xf32> to vector<128xf32>
    %74 = vector.shape_cast %73 : vector<128xf32> to vector<1x128xf32>
    %c0_63 = arith.constant 0 : index
    %c0_64 = arith.constant 0 : index
    %c0_65 = arith.constant 0 : index
    %75 = vector.load %arg9[%c0_63, %c0_64, %c0_65] : memref<1x1x128xf32, #tpu.memory_space<vmem>>, vector<1x1x128xf32>
    %76 = vector.shape_cast %75 : vector<1x1x128xf32> to vector<1x128xf32>
    %77 = vector.shape_cast %74 : vector<1x128xf32> to vector<1x1x128xf32>
    tpu.vector_store %arg9[%c0_63, %c0_64, %c0_65], %77 {strides = array<i32>} : memref<1x1x128xf32, #tpu.memory_space<vmem>>, vector<1x1x128xf32>,
    %78 = arith.mulf %68, %68 : vector<64x128xf32>
    %cst_66 = arith.constant dense<0.000000e+00> : vector<128xf32>
    %79 = vector.multi_reduction <add>, %78, %cst_66 [0] : vector<64x128xf32> to vector<128xf32>
    %80 = vector.shape_cast %79 : vector<128xf32> to vector<1x128xf32>
    %c0_67 = arith.constant 0 : index
    %c0_68 = arith.constant 0 : index
    %c0_69 = arith.constant 0 : index
    %81 = vector.load %arg10[%c0_67, %c0_68, %c0_69] : memref<1x1x128xf32, #tpu.memory_space<vmem>>, vector<1x1x128xf32>
    %82 = vector.shape_cast %81 : vector<1x1x128xf32> to vector<1x128xf32>
    %83 = vector.shape_cast %80 : vector<1x128xf32> to vector<1x1x128xf32>
    tpu.vector_store %arg10[%c0_67, %c0_68, %c0_69], %83 {strides = array<i32>} : memref<1x1x128xf32, #tpu.memory_space<vmem>>, vector<1x1x128xf32>,
    return
  }
  func.func @transform_0(%arg0: i32) -> (i32, i32, i32, i32) {
    %c0_i32 = arith.constant 0 : i32
    %c0_i32_0 = arith.constant 0 : i32
    %c0_i32_1 = arith.constant 0 : i32
    %c0_i32_2 = arith.constant 0 : i32
    return %arg0, %c0_i32, %c0_i32_0, %c0_i32_1 : i32, i32, i32, i32
  }
  func.func @transform_1(%arg0: i32) -> (i32, i32, i32) {
    %c0_i32 = arith.constant 0 : i32
    %c0_i32_0 = arith.constant 0 : i32
    %c0_i32_1 = arith.constant 0 : i32
    %c0_i32_2 = arith.constant 0 : i32
    return %c0_i32, %c0_i32_0, %c0_i32_1 : i32, i32, i32
  }
  func.func @transform_2(%arg0: i32) -> (i32, i32) {
    %c0_i32 = arith.constant 0 : i32
    %c0_i32_0 = arith.constant 0 : i32
    %c0_i32_1 = arith.constant 0 : i32
    return %c0_i32, %c0_i32_0 : i32, i32
  }
  func.func @transform_3(%arg0: i32) -> (i32, i32) {
    %c0_i32 = arith.constant 0 : i32
    %c0_i32_0 = arith.constant 0 : i32
    %c0_i32_1 = arith.constant 0 : i32
    return %c0_i32, %c0_i32_0 : i32, i32
  }
  func.func @transform_4(%arg0: i32) -> (i32, i32) {
    %c0_i32 = arith.constant 0 : i32
    %c0_i32_0 = arith.constant 0 : i32
    %c0_i32_1 = arith.constant 0 : i32
    return %c0_i32, %c0_i32_0 : i32, i32
  }
  func.func @transform_5(%arg0: i32) -> (i32, i32) {
    %c0_i32 = arith.constant 0 : i32
    %c0_i32_0 = arith.constant 0 : i32
    %c0_i32_1 = arith.constant 0 : i32
    return %c0_i32, %c0_i32_0 : i32, i32
  }
  func.func @transform_6(%arg0: i32) -> (i32, i32) {
    %c0_i32 = arith.constant 0 : i32
    %c0_i32_0 = arith.constant 0 : i32
    %c0_i32_1 = arith.constant 0 : i32
    return %c0_i32, %c0_i32_0 : i32, i32
  }
  func.func @transform_7(%arg0: i32) -> (i32, i32, i32) {
    %c0_i32 = arith.constant 0 : i32
    %c0_i32_0 = arith.constant 0 : i32
    %c0_i32_1 = arith.constant 0 : i32
    return %arg0, %c0_i32, %c0_i32_0 : i32, i32, i32
  }
  func.func @transform_8(%arg0: i32) -> (i32, i32, i32) {
    %c0_i32 = arith.constant 0 : i32
    %c0_i32_0 = arith.constant 0 : i32
    %c0_i32_1 = arith.constant 0 : i32
    return %arg0, %c0_i32, %c0_i32_0 : i32, i32, i32
  }
  func.func @transform_9(%arg0: i32) -> (i32, i32, i32) {
    %c0_i32 = arith.constant 0 : i32
    %c0_i32_0 = arith.constant 0 : i32
    %c0_i32_1 = arith.constant 0 : i32
    return %arg0, %c0_i32, %c0_i32_0 : i32, i32, i32
  }
}

module attributes {stable_mosaic.version = 11 : i64} {
  func.func @_strided_1x1_kernel(%arg0: i32, %arg1: memref<1x8x1x8x128xf32, #tpu.memory_space<vmem>>, %arg2: memref<1x128xf32, #tpu.memory_space<vmem>>, %arg3: memref<1x128xf32, #tpu.memory_space<vmem>>, %arg4: memref<1x128xf32, #tpu.memory_space<vmem>>, %arg5: memref<1x128xf32, #tpu.memory_space<vmem>>, %arg6: memref<128x128xbf16, #tpu.memory_space<vmem>>, %arg7: memref<1x64x128xf32, #tpu.memory_space<vmem>>) attributes {dimension_semantics = [#tpu.dimension_semantics<parallel>], iteration_bounds = array<i64: 2>, scalar_prefetch = 0 : i64, scratch_operands = 0 : i64, tpu.core_type = #tpu.core_type<tc>, window_params = [{transform_indices = @transform_0, window_bounds = array<i64: 1, 8, 1, 8, 128>}, {pipeline_mode = #tpu.pipeline_mode<synchronous>, transform_indices = @transform_1, window_bounds = array<i64: 1, 128>}, {pipeline_mode = #tpu.pipeline_mode<synchronous>, transform_indices = @transform_2, window_bounds = array<i64: 1, 128>}, {pipeline_mode = #tpu.pipeline_mode<synchronous>, transform_indices = @transform_3, window_bounds = array<i64: 1, 128>}, {pipeline_mode = #tpu.pipeline_mode<synchronous>, transform_indices = @transform_4, window_bounds = array<i64: 1, 128>}, {pipeline_mode = #tpu.pipeline_mode<synchronous>, transform_indices = @transform_5, window_bounds = array<i64: 128, 128>}, {transform_indices = @transform_6, window_bounds = array<i64: 1, 64, 128>}]} {
    %c0 = arith.constant 0 : index
    %c0_0 = arith.constant 0 : index
    %0 = vector.load %arg3[%c0, %c0_0] : memref<1x128xf32, #tpu.memory_space<vmem>>, vector<1x128xf32>
    %c0_1 = arith.constant 0 : index
    %c0_2 = arith.constant 0 : index
    %1 = vector.load %arg4[%c0_1, %c0_2] : memref<1x128xf32, #tpu.memory_space<vmem>>, vector<1x128xf32>
    %2 = arith.mulf %0, %1 : vector<1x128xf32>
    %c0_3 = arith.constant 0 : index
    %c0_4 = arith.constant 0 : index
    %3 = vector.load %arg5[%c0_3, %c0_4] : memref<1x128xf32, #tpu.memory_space<vmem>>, vector<1x128xf32>
    %c0_5 = arith.constant 0 : index
    %c0_6 = arith.constant 0 : index
    %4 = vector.load %arg2[%c0_5, %c0_6] : memref<1x128xf32, #tpu.memory_space<vmem>>, vector<1x128xf32>
    %5 = arith.mulf %4, %2 : vector<1x128xf32>
    %6 = arith.subf %3, %5 : vector<1x128xf32>
    %c0_7 = arith.constant 0 : index
    %c0_8 = arith.constant 0 : index
    %c0_9 = arith.constant 0 : index
    %c0_10 = arith.constant 0 : index
    %c0_11 = arith.constant 0 : index
    %7 = vector.load %arg1[%c0_7, %c0_8, %c0_9, %c0_10, %c0_11] : memref<1x8x1x8x128xf32, #tpu.memory_space<vmem>>, vector<1x8x1x8x128xf32>
    %8 = vector.shape_cast %7 : vector<1x8x1x8x128xf32> to vector<8x8x128xf32>
    %9 = vector.shape_cast %2 : vector<1x128xf32> to vector<1x1x128xf32>
    %10 = vector.broadcast %9 : vector<1x1x128xf32> to vector<8x8x128xf32>
    %11 = arith.mulf %8, %10 : vector<8x8x128xf32>
    %12 = vector.shape_cast %6 : vector<1x128xf32> to vector<1x1x128xf32>
    %13 = vector.broadcast %12 : vector<1x1x128xf32> to vector<8x8x128xf32>
    %14 = arith.addf %11, %13 : vector<8x8x128xf32>
    %cst = arith.constant 0.000000e+00 : f32
    %15 = vector.broadcast %cst : f32 to vector<8x8x128xf32>
    %16 = arith.maximumf %14, %15 : vector<8x8x128xf32>
    %17 = vector.shape_cast %16 : vector<8x8x128xf32> to vector<64x128xf32>
    %18 = arith.truncf %17 : vector<64x128xf32> to vector<64x128xbf16>
    %c0_12 = arith.constant 0 : index
    %c0_13 = arith.constant 0 : index
    %19 = vector.load %arg6[%c0_12, %c0_13] : memref<128x128xbf16, #tpu.memory_space<vmem>>, vector<128x128xbf16>
    %cst_14 = arith.constant dense<0.000000e+00> : vector<64x128xf32>
    %20 = tpu.matmul %18, %19, %cst_14 {dimension_numbers = #tpu.dot_dimension_numbers<[1], [0], [0], [1], [0, 0, 1, 1], [], []>} : vector<64x128xbf16>, vector<128x128xbf16>, vector<64x128xf32> -> vector<64x128xf32>
    %c0_15 = arith.constant 0 : index
    %c0_16 = arith.constant 0 : index
    %c0_17 = arith.constant 0 : index
    %21 = vector.load %arg7[%c0_15, %c0_16, %c0_17] : memref<1x64x128xf32, #tpu.memory_space<vmem>>, vector<1x64x128xf32>
    %22 = vector.shape_cast %21 : vector<1x64x128xf32> to vector<64x128xf32>
    %23 = vector.shape_cast %20 : vector<64x128xf32> to vector<1x64x128xf32>
    tpu.vector_store %arg7[%c0_15, %c0_16, %c0_17], %23 {strides = array<i32>} : memref<1x64x128xf32, #tpu.memory_space<vmem>>, vector<1x64x128xf32>,
    return
  }
  func.func @transform_0(%arg0: i32) -> (i32, i32, i32, i32, i32) {
    %c0_i32 = arith.constant 0 : i32
    %c0_i32_0 = arith.constant 0 : i32
    %c0_i32_1 = arith.constant 0 : i32
    %c0_i32_2 = arith.constant 0 : i32
    %c0_i32_3 = arith.constant 0 : i32
    return %arg0, %c0_i32, %c0_i32_0, %c0_i32_1, %c0_i32_2 : i32, i32, i32, i32, i32
  }
  func.func @transform_1(%arg0: i32) -> (i32, i32) {
    %c0_i32 = arith.constant 0 : i32
    %c0_i32_0 = arith.constant 0 : i32
    %c0_i32_1 = arith.constant 0 : i32
    return %c0_i32, %c0_i32_0 : i32, i32
  }
  func.func @transform_2(%arg0: i32) -> (i32, i32) {
    %c0_i32 = arith.constant 0 : i32
    %c0_i32_0 = arith.constant 0 : i32
    %c0_i32_1 = arith.constant 0 : i32
    return %c0_i32, %c0_i32_0 : i32, i32
  }
  func.func @transform_3(%arg0: i32) -> (i32, i32) {
    %c0_i32 = arith.constant 0 : i32
    %c0_i32_0 = arith.constant 0 : i32
    %c0_i32_1 = arith.constant 0 : i32
    return %c0_i32, %c0_i32_0 : i32, i32
  }
  func.func @transform_4(%arg0: i32) -> (i32, i32) {
    %c0_i32 = arith.constant 0 : i32
    %c0_i32_0 = arith.constant 0 : i32
    %c0_i32_1 = arith.constant 0 : i32
    return %c0_i32, %c0_i32_0 : i32, i32
  }
  func.func @transform_5(%arg0: i32) -> (i32, i32) {
    %c0_i32 = arith.constant 0 : i32
    %c0_i32_0 = arith.constant 0 : i32
    %c0_i32_1 = arith.constant 0 : i32
    return %c0_i32, %c0_i32_0 : i32, i32
  }
  func.func @transform_6(%arg0: i32) -> (i32, i32, i32) {
    %c0_i32 = arith.constant 0 : i32
    %c0_i32_0 = arith.constant 0 : i32
    %c0_i32_1 = arith.constant 0 : i32
    return %arg0, %c0_i32, %c0_i32_0 : i32, i32, i32
  }
}

module attributes {stable_mosaic.version = 11 : i64} {
  func.func @_bn_relu_matmul_add_kernel(%arg0: i32, %arg1: memref<128x128xbf16, #tpu.memory_space<vmem>>, %arg2: memref<1x128xf32, #tpu.memory_space<vmem>>, %arg3: memref<1x128xf32, #tpu.memory_space<vmem>>, %arg4: memref<1x128xf32, #tpu.memory_space<vmem>>, %arg5: memref<1x128xf32, #tpu.memory_space<vmem>>, %arg6: memref<128x128xbf16, #tpu.memory_space<vmem>>, %arg7: memref<128x128xf32, #tpu.memory_space<vmem>>, %arg8: memref<128x128xf32, #tpu.memory_space<vmem>>) attributes {dimension_semantics = [#tpu.dimension_semantics<parallel>], iteration_bounds = array<i64: 1>, scalar_prefetch = 0 : i64, scratch_operands = 0 : i64, tpu.core_type = #tpu.core_type<tc>, window_params = [{transform_indices = @transform_0, window_bounds = array<i64: 128, 128>}, {pipeline_mode = #tpu.pipeline_mode<synchronous>, transform_indices = @transform_1, window_bounds = array<i64: 1, 128>}, {pipeline_mode = #tpu.pipeline_mode<synchronous>, transform_indices = @transform_2, window_bounds = array<i64: 1, 128>}, {pipeline_mode = #tpu.pipeline_mode<synchronous>, transform_indices = @transform_3, window_bounds = array<i64: 1, 128>}, {pipeline_mode = #tpu.pipeline_mode<synchronous>, transform_indices = @transform_4, window_bounds = array<i64: 1, 128>}, {pipeline_mode = #tpu.pipeline_mode<synchronous>, transform_indices = @transform_5, window_bounds = array<i64: 128, 128>}, {transform_indices = @transform_6, window_bounds = array<i64: 128, 128>}, {transform_indices = @transform_7, window_bounds = array<i64: 128, 128>}]} {
    %c0 = arith.constant 0 : index
    %c0_0 = arith.constant 0 : index
    %0 = vector.load %arg3[%c0, %c0_0] : memref<1x128xf32, #tpu.memory_space<vmem>>, vector<1x128xf32>
    %c0_1 = arith.constant 0 : index
    %c0_2 = arith.constant 0 : index
    %1 = vector.load %arg4[%c0_1, %c0_2] : memref<1x128xf32, #tpu.memory_space<vmem>>, vector<1x128xf32>
    %2 = arith.mulf %0, %1 : vector<1x128xf32>
    %c0_3 = arith.constant 0 : index
    %c0_4 = arith.constant 0 : index
    %3 = vector.load %arg5[%c0_3, %c0_4] : memref<1x128xf32, #tpu.memory_space<vmem>>, vector<1x128xf32>
    %c0_5 = arith.constant 0 : index
    %c0_6 = arith.constant 0 : index
    %4 = vector.load %arg2[%c0_5, %c0_6] : memref<1x128xf32, #tpu.memory_space<vmem>>, vector<1x128xf32>
    %5 = arith.mulf %4, %2 : vector<1x128xf32>
    %6 = arith.subf %3, %5 : vector<1x128xf32>
    %c0_7 = arith.constant 0 : index
    %c0_8 = arith.constant 0 : index
    %7 = vector.load %arg1[%c0_7, %c0_8] : memref<128x128xbf16, #tpu.memory_space<vmem>>, vector<128x128xbf16>
    %8 = arith.extf %7 : vector<128x128xbf16> to vector<128x128xf32>
    %9 = vector.broadcast %2 : vector<1x128xf32> to vector<128x128xf32>
    %10 = arith.mulf %8, %9 : vector<128x128xf32>
    %11 = vector.broadcast %6 : vector<1x128xf32> to vector<128x128xf32>
    %12 = arith.addf %10, %11 : vector<128x128xf32>
    %cst = arith.constant 0.000000e+00 : f32
    %13 = vector.broadcast %cst : f32 to vector<128x128xf32>
    %14 = arith.maximumf %12, %13 : vector<128x128xf32>
    %15 = arith.truncf %14 : vector<128x128xf32> to vector<128x128xbf16>
    %c0_9 = arith.constant 0 : index
    %c0_10 = arith.constant 0 : index
    %16 = vector.load %arg6[%c0_9, %c0_10] : memref<128x128xbf16, #tpu.memory_space<vmem>>, vector<128x128xbf16>
    %cst_11 = arith.constant dense<0.000000e+00> : vector<128x128xf32>
    %17 = tpu.matmul %15, %16, %cst_11 {dimension_numbers = #tpu.dot_dimension_numbers<[1], [0], [0], [1], [0, 0, 1, 1], [], []>} : vector<128x128xbf16>, vector<128x128xbf16>, vector<128x128xf32> -> vector<128x128xf32>
    %c0_12 = arith.constant 0 : index
    %c0_13 = arith.constant 0 : index
    %18 = vector.load %arg7[%c0_12, %c0_13] : memref<128x128xf32, #tpu.memory_space<vmem>>, vector<128x128xf32>
    %19 = arith.addf %17, %18 : vector<128x128xf32>
    %c0_14 = arith.constant 0 : index
    %c0_15 = arith.constant 0 : index
    %20 = vector.load %arg8[%c0_14, %c0_15] : memref<128x128xf32, #tpu.memory_space<vmem>>, vector<128x128xf32>
    tpu.vector_store %arg8[%c0_14, %c0_15], %19 {strides = array<i32>} : memref<128x128xf32, #tpu.memory_space<vmem>>, vector<128x128xf32>,
    return
  }
  func.func @transform_0(%arg0: i32) -> (i32, i32) {
    %c0_i32 = arith.constant 0 : i32
    %c0_i32_0 = arith.constant 0 : i32
    return %arg0, %c0_i32 : i32, i32
  }
  func.func @transform_1(%arg0: i32) -> (i32, i32) {
    %c0_i32 = arith.constant 0 : i32
    %c0_i32_0 = arith.constant 0 : i32
    %c0_i32_1 = arith.constant 0 : i32
    return %c0_i32, %c0_i32_0 : i32, i32
  }
  func.func @transform_2(%arg0: i32) -> (i32, i32) {
    %c0_i32 = arith.constant 0 : i32
    %c0_i32_0 = arith.constant 0 : i32
    %c0_i32_1 = arith.constant 0 : i32
    return %c0_i32, %c0_i32_0 : i32, i32
  }
  func.func @transform_3(%arg0: i32) -> (i32, i32) {
    %c0_i32 = arith.constant 0 : i32
    %c0_i32_0 = arith.constant 0 : i32
    %c0_i32_1 = arith.constant 0 : i32
    return %c0_i32, %c0_i32_0 : i32, i32
  }
  func.func @transform_4(%arg0: i32) -> (i32, i32) {
    %c0_i32 = arith.constant 0 : i32
    %c0_i32_0 = arith.constant 0 : i32
    %c0_i32_1 = arith.constant 0 : i32
    return %c0_i32, %c0_i32_0 : i32, i32
  }
  func.func @transform_5(%arg0: i32) -> (i32, i32) {
    %c0_i32 = arith.constant 0 : i32
    %c0_i32_0 = arith.constant 0 : i32
    %c0_i32_1 = arith.constant 0 : i32
    return %c0_i32, %c0_i32_0 : i32, i32
  }
  func.func @transform_6(%arg0: i32) -> (i32, i32) {
    %c0_i32 = arith.constant 0 : i32
    %c0_i32_0 = arith.constant 0 : i32
    return %arg0, %c0_i32 : i32, i32
  }
  func.func @transform_7(%arg0: i32) -> (i32, i32) {
    %c0_i32 = arith.constant 0 : i32
    %c0_i32_0 = arith.constant 0 : i32
    return %arg0, %c0_i32 : i32, i32
  }
}

</mosaic_0001>

<llo_original>
// kernel: preact_bottleneck_pallas.5
$region0: #{preact_bottleneck_pallas.5}
  #allocation0 [shape = 'u32[]', space=smem, size = 0x4, offset = 0x4, fixed_abs, tag = 'smem constant byte address 0x4 - core index']
  #allocation1 [shape = 'u32[72,128]{1,0:T(1,128)}', space=vmem, size = 0x9000, scoped, tag = 'internal scratch']
  %s0 = inlined_call_operand.vmem [shape: f32[512,128], index: 0, kind: input, shape index: {}]
  %s1 = inlined_call_operand.vmem [shape: f32[1,1,128], index: 1, kind: output, shape index: {0}]
  %s2 = inlined_call_operand.vmem [shape: f32[1,1,128], index: 2, kind: output, shape index: {1}]
  %3 = xla_tuple %s1, %s2
  %s4 = sld [smem:[#allocation0]]
  $region22: #{preact_bottleneck_pallas.5} parent=0
    _
  %s6 = ssub.s32 1, %s4
  %s7 = scalar_select 0, %s6, %s4
  // Predicated region
  $region2: #{preact_bottleneck_pallas.5} parent=0 // pred_check
    _
  $region3: #{preact_bottleneck_pallas.5} parent=0 // pred_check_branch
    %9 = sbr.rel (0) target = $region5
  $region4: #{preact_bottleneck_pallas.5} parent=0 // pred_region
    _
  $region5: #{preact_bottleneck_pallas.5} parent=0 // pred_fallthru
    _
  %v10 = vld [vmem:[%s0] sm:$0xff]
  %v11 = vld [vmem:[%s0 + $0x8] sm:$0xff]
  %v12 = vld [vmem:[%s0 + $0x10] sm:$0xff]
  %v13 = vld [vmem:[%s0 + $0x18] sm:$0xff]
  %v14 = vld [vmem:[%s0 + $0x20] sm:$0xff]
  %v15 = vld [vmem:[%s0 + $0x28] sm:$0xff]
  %v16 = vld [vmem:[%s0 + $0x30] sm:$0xff]
  %v17 = vld [vmem:[%s0 + $0x38] sm:$0xff]
  %v18 = vld [vmem:[%s0 + $0x40] sm:$0xff]
  %v19 = vld [vmem:[%s0 + $0x48] sm:$0xff]
  %v20 = vld [vmem:[%s0 + $0x50] sm:$0xff]
  %v21 = vld [vmem:[%s0 + $0x58] sm:$0xff]
  %v22 = vld [vmem:[%s0 + $0x60] sm:$0xff]
  %v23 = vld [vmem:[%s0 + $0x68] sm:$0xff]
  %v24 = vld [vmem:[%s0 + $0x70] sm:$0xff]
  %v25 = vld [vmem:[%s0 + $0x78] sm:$0xff]
  %v26 = vld [vmem:[%s0 + $0x80] sm:$0xff]
  %v27 = vld [vmem:[%s0 + $0x88] sm:$0xff]
  %v28 = vld [vmem:[%s0 + $0x90] sm:$0xff]
  %v29 = vld [vmem:[%s0 + $0x98] sm:$0xff]
  %v30 = vld [vmem:[%s0 + $0xa0] sm:$0xff]
  %v31 = vld [vmem:[%s0 + $0xa8] sm:$0xff]
  %v32 = vld [vmem:[%s0 + $0xb0] sm:$0xff]
  %v33 = vld [vmem:[%s0 + $0xb8] sm:$0xff]
  %v34 = vld [vmem:[%s0 + $0xc0] sm:$0xff]
  %v35 = vld [vmem:[%s0 + $0xc8] sm:$0xff]
  %v36 = vld [vmem:[%s0 + $0xd0] sm:$0xff]
  %v37 = vld [vmem:[%s0 + $0xd8] sm:$0xff]
  %v38 = vld [vmem:[%s0 + $0xe0] sm:$0xff]
  %v39 = vld [vmem:[%s0 + $0xe8] sm:$0xff]
  %v40 = vld [vmem:[%s0 + $0xf0] sm:$0xff]
  %v41 = vld [vmem:[%s0 + $0xf8] sm:$0xff]
  %v42 = vld [vmem:[%s0 + $0x100] sm:$0xff]
  %v43 = vld [vmem:[%s0 + $0x108] sm:$0xff]
  %v44 = vld [vmem:[%s0 + $0x110] sm:$0xff]
  %v45 = vld [vmem:[%s0 + $0x118] sm:$0xff]
  %v46 = vld [vmem:[%s0 + $0x120] sm:$0xff]
  %v47 = vld [vmem:[%s0 + $0x128] sm:$0xff]
  %v48 = vld [vmem:[%s0 + $0x130] sm:$0xff]
  %v49 = vld [vmem:[%s0 + $0x138] sm:$0xff]
  %v50 = vld [vmem:[%s0 + $0x140] sm:$0xff]
  %v51 = vld [vmem:[%s0 + $0x148] sm:$0xff]
  %v52 = vld [vmem:[%s0 + $0x150] sm:$0xff]
  %v53 = vld [vmem:[%s0 + $0x158] sm:$0xff]
  %v54 = vld [vmem:[%s0 + $0x160] sm:$0xff]
  %v55 = vld [vmem:[%s0 + $0x168] sm:$0xff]
  %v56 = vld [vmem:[%s0 + $0x170] sm:$0xff]
  %v57 = vld [vmem:[%s0 + $0x178] sm:$0xff]
  %v58 = vld [vmem:[%s0 + $0x180] sm:$0xff]
  %v59 = vld [vmem:[%s0 + $0x188] sm:$0xff]
  %v60 = vld [vmem:[%s0 + $0x190] sm:$0xff]
  %v61 = vld [vmem:[%s0 + $0x198] sm:$0xff]
  %v62 = vld [vmem:[%s0 + $0x1a0] sm:$0xff]
  %v63 = vld [vmem:[%s0 + $0x1a8] sm:$0xff]
  %v64 = vld [vmem:[%s0 + $0x1b0] sm:$0xff]
  %v65 = vld [vmem:[%s0 + $0x1b8] sm:$0xff]
  %v66 = vld [vmem:[%s0 + $0x1c0] sm:$0xff]
  %v67 = vld [vmem:[%s0 + $0x1c8] sm:$0xff]
  %v68 = vld [vmem:[%s0 + $0x1d0] sm:$0xff]
  %v69 = vld [vmem:[%s0 + $0x1d8] sm:$0xff]
  %v70 = vld [vmem:[%s0 + $0x1e0] sm:$0xff]
  %v71 = vld [vmem:[%s0 + $0x1e8] sm:$0xff]
  %v72 = vld [vmem:[%s0 + $0x1f0] sm:$0xff]
  %v73 = vld [vmem:[%s0 + $0x1f8] sm:$0xff]
  %v74 = vadd.f32 %v10, %v11
  %v75 = vadd.f32 %v74, %v12
  %v76 = vadd.f32 %v75, %v13
  %v77 = vadd.f32 %v76, %v14
  %v78 = vadd.f32 %v77, %v15
  %v79 = vadd.f32 %v78, %v16
  %v80 = vadd.f32 %v79, %v17
  %v81 = vadd.f32 %v80, %v18
  %v82 = vadd.f32 %v81, %v19
  %v83 = vadd.f32 %v82, %v20
  %v84 = vadd.f32 %v83, %v21
  %v85 = vadd.f32 %v84, %v22
  %v86 = vadd.f32 %v85, %v23
  %v87 = vadd.f32 %v86, %v24
  %v88 = vadd.f32 %v87, %v25
  %v89 = vadd.f32 %v88, %v26
  %v90 = vadd.f32 %v89, %v27
  %v91 = vadd.f32 %v90, %v28
  %v92 = vadd.f32 %v91, %v29
  %v93 = vadd.f32 %v92, %v30
  %v94 = vadd.f32 %v93, %v31
  %v95 = vadd.f32 %v94, %v32
  %v96 = vadd.f32 %v95, %v33
  %v97 = vadd.f32 %v96, %v34
  %v98 = vadd.f32 %v97, %v35
  %v99 = vadd.f32 %v98, %v36
  %v100 = vadd.f32 %v99, %v37
  %v101 = vadd.f32 %v100, %v38
  %v102 = vadd.f32 %v101, %v39
  %v103 = vadd.f32 %v102, %v40
  %v104 = vadd.f32 %v103, %v41
  %v105 = vadd.f32 %v104, %v42
  %v106 = vadd.f32 %v105, %v43
  %v107 = vadd.f32 %v106, %v44
  %v108 = vadd.f32 %v107, %v45
  %v109 = vadd.f32 %v108, %v46
  %v110 = vadd.f32 %v109, %v47
  %v111 = vadd.f32 %v110, %v48
  %v112 = vadd.f32 %v111, %v49
  %v113 = vadd.f32 %v112, %v50
  %v114 = vadd.f32 %v113, %v51
  %v115 = vadd.f32 %v114, %v52
  %v116 = vadd.f32 %v115, %v53
  %v117 = vadd.f32 %v116, %v54
  %v118 = vadd.f32 %v117, %v55
  %v119 = vadd.f32 %v118, %v56
  %v120 = vadd.f32 %v119, %v57
  %v121 = vadd.f32 %v120, %v58
  %v122 = vadd.f32 %v121, %v59
  %v123 = vadd.f32 %v122, %v60
  %v124 = vadd.f32 %v123, %v61
  %v125 = vadd.f32 %v124, %v62
  %v126 = vadd.f32 %v125, %v63
  %v127 = vadd.f32 %v126, %v64
  %v128 = vadd.f32 %v127, %v65
  %v129 = vadd.f32 %v128, %v66
  %v130 = vadd.f32 %v129, %v67
  %v131 = vadd.f32 %v130, %v68
  %v132 = vadd.f32 %v131, %v69
  %v133 = vadd.f32 %v132, %v70
  %v134 = vadd.f32 %v133, %v71
  %v135 = vadd.f32 %v134, %v72
  %v136 = vadd.f32 %v135, %v73
  %v137 = vrot.slane %v136, 4
  %v138 = vadd.f32 %v136, %v137
  %v139 = vrot.slane %v138, 2
  %v140 = vadd.f32 %v138, %v139
  %v141 = vrot.slane %v140, 1
  %v142 = vadd.f32 %v140, %v141
  %143 = vst [vmem:[%s1] sm:$0x1] %v142
  %v144 = vmul.f32 %v10, %v10
  %v145 = vmul.f32 %v11, %v11
  %v146 = vmul.f32 %v12, %v12
  %v147 = vmul.f32 %v13, %v13
  %v148 = vmul.f32 %v14, %v14
  %v149 = vmul.f32 %v15, %v15
  %v150 = vmul.f32 %v16, %v16
  %v151 = vmul.f32 %v17, %v17
  %v152 = vmul.f32 %v18, %v18
  %v153 = vmul.f32 %v19, %v19
  %v154 = vmul.f32 %v20, %v20
  %v155 = vmul.f32 %v21, %v21
  %v156 = vmul.f32 %v22, %v22
  %v157 = vmul.f32 %v23, %v23
  %v158 = vmul.f32 %v24, %v24
  %v159 = vmul.f32 %v25, %v25
  %v160 = vmul.f32 %v26, %v26
  %v161 = vmul.f32 %v27, %v27
  %v162 = vmul.f32 %v28, %v28
  %v163 = vmul.f32 %v29, %v29
  %v164 = vmul.f32 %v30, %v30
  %v165 = vmul.f32 %v31, %v31
  %v166 = vmul.f32 %v32, %v32
  %v167 = vmul.f32 %v33, %v33
  %v168 = vmul.f32 %v34, %v34
  %v169 = vmul.f32 %v35, %v35
  %v170 = vmul.f32 %v36, %v36
  %v171 = vmul.f32 %v37, %v37
  %v172 = vmul.f32 %v38, %v38
  %v173 = vmul.f32 %v39, %v39
  %v174 = vmul.f32 %v40, %v40
  %v175 = vmul.f32 %v41, %v41
  %v176 = vmul.f32 %v42, %v42
  %v177 = vmul.f32 %v43, %v43
  %v178 = vmul.f32 %v44, %v44
  %v179 = vmul.f32 %v45, %v45
  %v180 = vmul.f32 %v46, %v46
  %v181 = vmul.f32 %v47, %v47
  %v182 = vmul.f32 %v48, %v48
  %v183 = vmul.f32 %v49, %v49
  %v184 = vmul.f32 %v50, %v50
  %v185 = vmul.f32 %v51, %v51
  %v186 = vmul.f32 %v52, %v52
  %v187 = vmul.f32 %v53, %v53
  %v188 = vmul.f32 %v54, %v54
  %v189 = vmul.f32 %v55, %v55
  %v190 = vmul.f32 %v56, %v56
  %v191 = vmul.f32 %v57, %v57
  %v192 = vmul.f32 %v58, %v58
  %v193 = vmul.f32 %v59, %v59
  %v194 = vmul.f32 %v60, %v60
  %v195 = vmul.f32 %v61, %v61
  %v196 = vmul.f32 %v62, %v62
  %v197 = vmul.f32 %v63, %v63
  %v198 = vmul.f32 %v64, %v64
  %v199 = vmul.f32 %v65, %v65
  %v200 = vmul.f32 %v66, %v66
  %v201 = vmul.f32 %v67, %v67
  %v202 = vmul.f32 %v68, %v68
  %v203 = vmul.f32 %v69, %v69
  %v204 = vmul.f32 %v70, %v70
  %v205 = vmul.f32 %v71, %v71
  %v206 = vmul.f32 %v72, %v72
  %v207 = vmul.f32 %v73, %v73
  %v208 = vadd.f32 %v144, %v145
  %v209 = vadd.f32 %v208, %v146
  %v210 = vadd.f32 %v209, %v147
  %v211 = vadd.f32 %v210, %v148
  %v212 = vadd.f32 %v211, %v149
  %v213 = vadd.f32 %v212, %v150
  %v214 = vadd.f32 %v213, %v151
  %v215 = vadd.f32 %v214, %v152
  %v216 = vadd.f32 %v215, %v153
  %v217 = vadd.f32 %v216, %v154
  %v218 = vadd.f32 %v217, %v155
  %v219 = vadd.f32 %v218, %v156
  %v220 = vadd.f32 %v219, %v157
  %v221 = vadd.f32 %v220, %v158
  %v222 = vadd.f32 %v221, %v159
  %v223 = vadd.f32 %v222, %v160
  %v224 = vadd.f32 %v223, %v161
  %v225 = vadd.f32 %v224, %v162
  %v226 = vadd.f32 %v225, %v163
  %v227 = vadd.f32 %v226, %v164
  %v228 = vadd.f32 %v227, %v165
  %v229 = vadd.f32 %v228, %v166
  %v230 = vadd.f32 %v229, %v167
  %v231 = vadd.f32 %v230, %v168
  %v232 = vadd.f32 %v231, %v169
  %v233 = vadd.f32 %v232, %v170
  %v234 = vadd.f32 %v233, %v171
  %v235 = vadd.f32 %v234, %v172
  %v236 = vadd.f32 %v235, %v173
  %v237 = vadd.f32 %v236, %v174
  %v238 = vadd.f32 %v237, %v175
  %v239 = vadd.f32 %v238, %v176
  %v240 = vadd.f32 %v239, %v177
  %v241 = vadd.f32 %v240, %v178
  %v242 = vadd.f32 %v241, %v179
  %v243 = vadd.f32 %v242, %v180
  %v244 = vadd.f32 %v243, %v181
  %v245 = vadd.f32 %v244, %v182
  %v246 = vadd.f32 %v245, %v183
  %v247 = vadd.f32 %v246, %v184
  %v248 = vadd.f32 %v247, %v185
  %v249 = vadd.f32 %v248, %v186
  %v250 = vadd.f32 %v249, %v187
  %v251 = vadd.f32 %v250, %v188
  %v252 = vadd.f32 %v251, %v189
  %v253 = vadd.f32 %v252, %v190
  %v254 = vadd.f32 %v253, %v191
  %v255 = vadd.f32 %v254, %v192
  %v256 = vadd.f32 %v255, %v193
  %v257 = vadd.f32 %v256, %v194
  %v258 = vadd.f32 %v257, %v195
  %v259 = vadd.f32 %v258, %v196
  %v260 = vadd.f32 %v259, %v197
  %v261 = vadd.f32 %v260, %v198
  %v262 = vadd.f32 %v261, %v199
  %v263 = vadd.f32 %v262, %v200
  %v264 = vadd.f32 %v263, %v201
  %v265 = vadd.f32 %v264, %v202
  %v266 = vadd.f32 %v265, %v203
  %v267 = vadd.f32 %v266, %v204
  %v268 = vadd.f32 %v267, %v205
  %v269 = vadd.f32 %v268, %v206
  %v270 = vadd.f32 %v269, %v207
  %v271 = vrot.slane %v270, 4
  %v272 = vadd.f32 %v270, %v271
  %v273 = vrot.slane %v272, 2
  %v274 = vadd.f32 %v272, %v273
  %v275 = vrot.slane %v274, 1
  %v276 = vadd.f32 %v274, %v275
  %277 = vst [vmem:[%s2] sm:$0x1] %v276
  // Predicated region
  $region6: #{preact_bottleneck_pallas.5} parent=0 // pred_check
    _
  $region7: #{preact_bottleneck_pallas.5} parent=0 // pred_check_branch
    %279 = sbr.rel (0) target = $region9
  $region8: #{preact_bottleneck_pallas.5} parent=0 // pred_region
    _
  $region9: #{preact_bottleneck_pallas.5} parent=0 // pred_fallthru
    _
  // Predicated region
  $region10: #{preact_bottleneck_pallas.5} parent=0 // pred_check
    _
  $region11: #{preact_bottleneck_pallas.5} parent=0 // pred_check_branch
    %281 = sbr.rel (0) target = $region13
  $region12: #{preact_bottleneck_pallas.5} parent=0 // pred_region
    _
  $region13: #{preact_bottleneck_pallas.5} parent=0 // pred_fallthru
    _
  // Predicated region
  $region14: #{preact_bottleneck_pallas.5} parent=0 // pred_check
    _
  $region15: #{preact_bottleneck_pallas.5} parent=0 // pred_check_branch
    %283 = sbr.rel (0) target = $region17
  $region16: #{preact_bottleneck_pallas.5} parent=0 // pred_region
    _
  $region17: #{preact_bottleneck_pallas.5} parent=0 // pred_fallthru
    _
  // Predicated region
  $region18: #{preact_bottleneck_pallas.5} parent=0 // pred_check
    _
  $region19: #{preact_bottleneck_pallas.5} parent=0 // pred_check_branch
    %285 = sbr.rel (0) target = $region21
  $region20: #{preact_bottleneck_pallas.5} parent=0 // pred_region
    _
  $region21: #{preact_bottleneck_pallas.5} parent=0 // pred_fallthru
    _

// kernel: preact_bottleneck_pallas.6
$region0: #{preact_bottleneck_pallas.6}
  #allocation0 [shape = 'u32[]', space=smem, size = 0x4, offset = 0x4, fixed_abs, tag = 'smem constant byte address 0x4 - core index']
  #allocation1 [shape = 'u32[72,128]{1,0:T(1,128)}', space=vmem, size = 0x9000, scoped, tag = 'internal scratch']
  %s0 = inlined_call_operand.vmem [shape: f32[512,128], index: 0, kind: input, shape index: {}]
  %s1 = inlined_call_operand.vmem [shape: f32[1,128], index: 1, kind: input, shape index: {}]
  %s2 = inlined_call_operand.vmem [shape: f32[1,128], index: 2, kind: input, shape index: {}]
  %s3 = inlined_call_operand.vmem [shape: f32[1,128], index: 3, kind: input, shape index: {}]
  %s4 = inlined_call_operand.vmem [shape: f32[1,128], index: 4, kind: input, shape index: {}]
  %s5 = inlined_call_operand.vmem [shape: bf16[128,128], index: 5, kind: input, shape index: {}]
  %s6 = inlined_call_operand.vmem [shape: bf16[512,128], index: 6, kind: output, shape index: {0}]
  %s7 = inlined_call_operand.vmem [shape: f32[1,1,128], index: 7, kind: output, shape index: {1}]
  %s8 = inlined_call_operand.vmem [shape: f32[1,1,128], index: 8, kind: output, shape index: {2}]
  %9 = xla_tuple %s6, %s7, %s8
  %s10 = sld [smem:[#allocation0]]
  $region50: #{preact_bottleneck_pallas.6} parent=0
    _
  %s12 = ssub.s32 1, %s10
  %s13 = scalar_select 0, %s12, %s10
  // Predicated region
  $region2: #{preact_bottleneck_pallas.6} parent=0 // pred_check
    _
  $region3: #{preact_bottleneck_pallas.6} parent=0 // pred_check_branch
    %15 = sbr.rel (0) target = $region5
  $region4: #{preact_bottleneck_pallas.6} parent=0 // pred_region
    _
  $region5: #{preact_bottleneck_pallas.6} parent=0 // pred_fallthru
    _
  // Predicated region
  $region6: #{preact_bottleneck_pallas.6} parent=0 // pred_check
    _
  $region7: #{preact_bottleneck_pallas.6} parent=0 // pred_check_branch
    %17 = sbr.rel (0) target = $region9
  $region8: #{preact_bottleneck_pallas.6} parent=0 // pred_region
    _
  $region9: #{preact_bottleneck_pallas.6} parent=0 // pred_fallthru
    _
  // Predicated region
  $region10: #{preact_bottleneck_pallas.6} parent=0 // pred_check
    _
  $region11: #{preact_bottleneck_pallas.6} parent=0 // pred_check_branch
    %19 = sbr.rel (0) target = $region13
  $region12: #{preact_bottleneck_pallas.6} parent=0 // pred_region
    _
  $region13: #{preact_bottleneck_pallas.6} parent=0 // pred_fallthru
    _
  // Predicated region
  $region14: #{preact_bottleneck_pallas.6} parent=0 // pred_check
    _
  $region15: #{preact_bottleneck_pallas.6} parent=0 // pred_check_branch
    %21 = sbr.rel (0) target = $region17
  $region16: #{preact_bottleneck_pallas.6} parent=0 // pred_region
    _
  $region17: #{preact_bottleneck_pallas.6} parent=0 // pred_fallthru
    _
  // Predicated region
  $region18: #{preact_bottleneck_pallas.6} parent=0 // pred_check
    _
  $region19: #{preact_bottleneck_pallas.6} parent=0 // pred_check_branch
    %23 = sbr.rel (0) target = $region21
  $region20: #{preact_bottleneck_pallas.6} parent=0 // pred_region
    _
  $region21: #{preact_bottleneck_pallas.6} parent=0 // pred_fallthru
    _
  // Predicated region
  $region22: #{preact_bottleneck_pallas.6} parent=0 // pred_check
    _
  $region23: #{preact_bottleneck_pallas.6} parent=0 // pred_check_branch
    %25 = sbr.rel (0) target = $region25
  $region24: #{preact_bottleneck_pallas.6} parent=0 // pred_region
    _
  $region25: #{preact_bottleneck_pallas.6} parent=0 // pred_fallthru
    _
  %v26 = vld [vmem:[%s2] sm:$0x1]
  %v27 = vld [vmem:[%s3] sm:$0x1]
  %v28 = vmul.f32 %v26, %v27
  %v29 = vld [vmem:[%s4] sm:$0x1]
  %v30 = vld [vmem:[%s1] sm:$0x1]
  %v31 = vmul.f32 %v30, %v28
  %v32 = vsub.f32 %v29, %v31
  %v33 = vld [vmem:[%s0] sm:$0xff]
  %v34 = vld [vmem:[%s0 + $0x8] sm:$0xff]
  %v35 = vld [vmem:[%s0 + $0x10] sm:$0xff]
  %v36 = vld [vmem:[%s0 + $0x18] sm:$0xff]
  %v37 = vld [vmem:[%s0 + $0x20] sm:$0xff]
  %v38 = vld [vmem:[%s0 + $0x28] sm:$0xff]
  %v39 = vld [vmem:[%s0 + $0x30] sm:$0xff]
  %v40 = vld [vmem:[%s0 + $0x38] sm:$0xff]
  %v41 = vld [vmem:[%s0 + $0x40] sm:$0xff]
  %v42 = vld [vmem:[%s0 + $0x48] sm:$0xff]
  %v43 = vld [vmem:[%s0 + $0x50] sm:$0xff]
  %v44 = vld [vmem:[%s0 + $0x58] sm:$0xff]
  %v45 = vld [vmem:[%s0 + $0x60] sm:$0xff]
  %v46 = vld [vmem:[%s0 + $0x68] sm:$0xff]
  %v47 = vld [vmem:[%s0 + $0x70] sm:$0xff]
  %v48 = vld [vmem:[%s0 + $0x78] sm:$0xff]
  %v49 = vld [vmem:[%s0 + $0x80] sm:$0xff]
  %v50 = vld [vmem:[%s0 + $0x88] sm:$0xff]
  %v51 = vld [vmem:[%s0 + $0x90] sm:$0xff]
  %v52 = vld [vmem:[%s0 + $0x98] sm:$0xff]
  %v53 = vld [vmem:[%s0 + $0xa0] sm:$0xff]
  %v54 = vld [vmem:[%s0 + $0xa8] sm:$0xff]
  %v55 = vld [vmem:[%s0 + $0xb0] sm:$0xff]
  %v56 = vld [vmem:[%s0 + $0xb8] sm:$0xff]
  %v57 = vld [vmem:[%s0 + $0xc0] sm:$0xff]
  %v58 = vld [vmem:[%s0 + $0xc8] sm:$0xff]
  %v59 = vld [vmem:[%s0 + $0xd0] sm:$0xff]
  %v60 = vld [vmem:[%s0 + $0xd8] sm:$0xff]
  %v61 = vld [vmem:[%s0 + $0xe0] sm:$0xff]
  %v62 = vld [vmem:[%s0 + $0xe8] sm:$0xff]
  %v63 = vld [vmem:[%s0 + $0xf0] sm:$0xff]
  %v64 = vld [vmem:[%s0 + $0xf8] sm:$0xff]
  %v65 = vld [vmem:[%s0 + $0x100] sm:$0xff]
  %v66 = vld [vmem:[%s0 + $0x108] sm:$0xff]
  %v67 = vld [vmem:[%s0 + $0x110] sm:$0xff]
  %v68 = vld [vmem:[%s0 + $0x118] sm:$0xff]
  %v69 = vld [vmem:[%s0 + $0x120] sm:$0xff]
  %v70 = vld [vmem:[%s0 + $0x128] sm:$0xff]
  %v71 = vld [vmem:[%s0 + $0x130] sm:$0xff]
  %v72 = vld [vmem:[%s0 + $0x138] sm:$0xff]
  %v73 = vld [vmem:[%s0 + $0x140] sm:$0xff]
  %v74 = vld [vmem:[%s0 + $0x148] sm:$0xff]
  %v75 = vld [vmem:[%s0 + $0x150] sm:$0xff]
  %v76 = vld [vmem:[%s0 + $0x158] sm:$0xff]
  %v77 = vld [vmem:[%s0 + $0x160] sm:$0xff]
  %v78 = vld [vmem:[%s0 + $0x168] sm:$0xff]
  %v79 = vld [vmem:[%s0 + $0x170] sm:$0xff]
  %v80 = vld [vmem:[%s0 + $0x178] sm:$0xff]
  %v81 = vld [vmem:[%s0 + $0x180] sm:$0xff]
  %v82 = vld [vmem:[%s0 + $0x188] sm:$0xff]
  %v83 = vld [vmem:[%s0 + $0x190] sm:$0xff]
  %v84 = vld [vmem:[%s0 + $0x198] sm:$0xff]
  %v85 = vld [vmem:[%s0 + $0x1a0] sm:$0xff]
  %v86 = vld [vmem:[%s0 + $0x1a8] sm:$0xff]
  %v87 = vld [vmem:[%s0 + $0x1b0] sm:$0xff]
  %v88 = vld [vmem:[%s0 + $0x1b8] sm:$0xff]
  %v89 = vld [vmem:[%s0 + $0x1c0] sm:$0xff]
  %v90 = vld [vmem:[%s0 + $0x1c8] sm:$0xff]
  %v91 = vld [vmem:[%s0 + $0x1d0] sm:$0xff]
  %v92 = vld [vmem:[%s0 + $0x1d8] sm:$0xff]
  %v93 = vld [vmem:[%s0 + $0x1e0] sm:$0xff]
  %v94 = vld [vmem:[%s0 + $0x1e8] sm:$0xff]
  %v95 = vld [vmem:[%s0 + $0x1f0] sm:$0xff]
  %v96 = vld [vmem:[%s0 + $0x1f8] sm:$0xff]
  %v98 = vperm.slane %v28, 0
  %v100 = vmul.f32 %v33, %v98
  %v101 = vmul.f32 %v34, %v98
  %v102 = vmul.f32 %v35, %v98
  %v103 = vmul.f32 %v36, %v98
  %v104 = vmul.f32 %v37, %v98
  %v105 = vmul.f32 %v38, %v98
  %v106 = vmul.f32 %v39, %v98
  %v107 = vmul.f32 %v40, %v98
  %v108 = vmul.f32 %v41, %v98
  %v109 = vmul.f32 %v42, %v98
  %v110 = vmul.f32 %v43, %v98
  %v111 = vmul.f32 %v44, %v98
  %v112 = vmul.f32 %v45, %v98
  %v113 = vmul.f32 %v46, %v98
  %v114 = vmul.f32 %v47, %v98
  %v115 = vmul.f32 %v48, %v98
  %v116 = vmul.f32 %v49, %v98
  %v117 = vmul.f32 %v50, %v98
  %v118 = vmul.f32 %v51, %v98
  %v119 = vmul.f32 %v52, %v98
  %v120 = vmul.f32 %v53, %v98
  %v121 = vmul.f32 %v54, %v98
  %v122 = vmul.f32 %v55, %v98
  %v123 = vmul.f32 %v56, %v98
  %v124 = vmul.f32 %v57, %v98
  %v125 = vmul.f32 %v58, %v98
  %v126 = vmul.f32 %v59, %v98
  %v127 = vmul.f32 %v60, %v98
  %v128 = vmul.f32 %v61, %v98
  %v129 = vmul.f32 %v62, %v98
  %v130 = vmul.f32 %v63, %v98
  %v131 = vmul.f32 %v64, %v98
  %v132 = vmul.f32 %v65, %v98
  %v133 = vmul.f32 %v66, %v98
  %v134 = vmul.f32 %v67, %v98
  %v135 = vmul.f32 %v68, %v98
  %v136 = vmul.f32 %v69, %v98
  %v137 = vmul.f32 %v70, %v98
  %v138 = vmul.f32 %v71, %v98
  %v139 = vmul.f32 %v72, %v98
  %v140 = vmul.f32 %v73, %v98
  %v141 = vmul.f32 %v74, %v98
  %v142 = vmul.f32 %v75, %v98
  %v143 = vmul.f32 %v76, %v98
  %v144 = vmul.f32 %v77, %v98
  %v145 = vmul.f32 %v78, %v98
  %v146 = vmul.f32 %v79, %v98
  %v147 = vmul.f32 %v80, %v98
  %v148 = vmul.f32 %v81, %v98
  %v149 = vmul.f32 %v82, %v98
  %v150 = vmul.f32 %v83, %v98
  %v151 = vmul.f32 %v84, %v98
  %v152 = vmul.f32 %v85, %v98
  %v153 = vmul.f32 %v86, %v98
  %v154 = vmul.f32 %v87, %v98
  %v155 = vmul.f32 %v88, %v98
  %v156 = vmul.f32 %v89, %v98
  %v157 = vmul.f32 %v90, %v98
  %v158 = vmul.f32 %v91, %v98
  %v159 = vmul.f32 %v92, %v98
  %v160 = vmul.f32 %v93, %v98
  %v161 = vmul.f32 %v94, %v98
  %v162 = vmul.f32 %v95, %v98
  %v163 = vmul.f32 %v96, %v98
  %v165 = vperm.slane %v32, 0
  %v167 = vadd.f32 %v100, %v165
  %v168 = vadd.f32 %v101, %v165
  %v169 = vadd.f32 %v102, %v165
  %v170 = vadd.f32 %v103, %v165
  %v171 = vadd.f32 %v104, %v165
  %v172 = vadd.f32 %v105, %v165
  %v173 = vadd.f32 %v106, %v165
  %v174 = vadd.f32 %v107, %v165
  %v175 = vadd.f32 %v108, %v165
  %v176 = vadd.f32 %v109, %v165
  %v177 = vadd.f32 %v110, %v165
  %v178 = vadd.f32 %v111, %v165
  %v179 = vadd.f32 %v112, %v165
  %v180 = vadd.f32 %v113, %v165
  %v181 = vadd.f32 %v114, %v165
  %v182 = vadd.f32 %v115, %v165
  %v183 = vadd.f32 %v116, %v165
  %v184 = vadd.f32 %v117, %v165
  %v185 = vadd.f32 %v118, %v165
  %v186 = vadd.f32 %v119, %v165
  %v187 = vadd.f32 %v120, %v165
  %v188 = vadd.f32 %v121, %v165
  %v189 = vadd.f32 %v122, %v165
  %v190 = vadd.f32 %v123, %v165
  %v191 = vadd.f32 %v124, %v165
  %v192 = vadd.f32 %v125, %v165
  %v193 = vadd.f32 %v126, %v165
  %v194 = vadd.f32 %v127, %v165
  %v195 = vadd.f32 %v128, %v165
  %v196 = vadd.f32 %v129, %v165
  %v197 = vadd.f32 %v130, %v165
  %v198 = vadd.f32 %v131, %v165
  %v199 = vadd.f32 %v132, %v165
  %v200 = vadd.f32 %v133, %v165
  %v201 = vadd.f32 %v134, %v165
  %v202 = vadd.f32 %v135, %v165
  %v203 = vadd.f32 %v136, %v165
  %v204 = vadd.f32 %v137, %v165
  %v205 = vadd.f32 %v138, %v165
  %v206 = vadd.f32 %v139, %v165
  %v207 = vadd.f32 %v140, %v165
  %v208 = vadd.f32 %v141, %v165
  %v209 = vadd.f32 %v142, %v165
  %v210 = vadd.f32 %v143, %v165
  %v211 = vadd.f32 %v144, %v165
  %v212 = vadd.f32 %v145, %v165
  %v213 = vadd.f32 %v146, %v165
  %v214 = vadd.f32 %v147, %v165
  %v215 = vadd.f32 %v148, %v165
  %v216 = vadd.f32 %v149, %v165
  %v217 = vadd.f32 %v150, %v165
  %v218 = vadd.f32 %v151, %v165
  %v219 = vadd.f32 %v152, %v165
  %v220 = vadd.f32 %v153, %v165
  %v221 = vadd.f32 %v154, %v165
  %v222 = vadd.f32 %v155, %v165
  %v223 = vadd.f32 %v156, %v165
  %v224 = vadd.f32 %v157, %v165
  %v225 = vadd.f32 %v158, %v165
  %v226 = vadd.f32 %v159, %v165
  %v227 = vadd.f32 %v160, %v165
  %v228 = vadd.f32 %v161, %v165
  %v229 = vadd.f32 %v162, %v165
  %v230 = vadd.f32 %v163, %v165
  %v231 = vmax.f32 %v167, 0.0
  %v232 = vmax.f32 %v168, 0.0
  %v233 = vmax.f32 %v169, 0.0
  %v234 = vmax.f32 %v170, 0.0
  %v235 = vmax.f32 %v171, 0.0
  %v236 = vmax.f32 %v172, 0.0
  %v237 = vmax.f32 %v173, 0.0
  %v238 = vmax.f32 %v174, 0.0
  %v239 = vmax.f32 %v175, 0.0
  %v240 = vmax.f32 %v176, 0.0
  %v241 = vmax.f32 %v177, 0.0
  %v242 = vmax.f32 %v178, 0.0
  %v243 = vmax.f32 %v179, 0.0
  %v244 = vmax.f32 %v180, 0.0
  %v245 = vmax.f32 %v181, 0.0
  %v246 = vmax.f32 %v182, 0.0
  %v247 = vmax.f32 %v183, 0.0
  %v248 = vmax.f32 %v184, 0.0
  %v249 = vmax.f32 %v185, 0.0
  %v250 = vmax.f32 %v186, 0.0
  %v251 = vmax.f32 %v187, 0.0
  %v252 = vmax.f32 %v188, 0.0
  %v253 = vmax.f32 %v189, 0.0
  %v254 = vmax.f32 %v190, 0.0
  %v255 = vmax.f32 %v191, 0.0
  %v256 = vmax.f32 %v192, 0.0
  %v257 = vmax.f32 %v193, 0.0
  %v258 = vmax.f32 %v194, 0.0
  %v259 = vmax.f32 %v195, 0.0
  %v260 = vmax.f32 %v196, 0.0
  %v261 = vmax.f32 %v197, 0.0
  %v262 = vmax.f32 %v198, 0.0
  %v263 = vmax.f32 %v199, 0.0
  %v264 = vmax.f32 %v200, 0.0
  %v265 = vmax.f32 %v201, 0.0
  %v266 = vmax.f32 %v202, 0.0
  %v267 = vmax.f32 %v203, 0.0
  %v268 = vmax.f32 %v204, 0.0
  %v269 = vmax.f32 %v205, 0.0
  %v270 = vmax.f32 %v206, 0.0
  %v271 = vmax.f32 %v207, 0.0
  %v272 = vmax.f32 %v208, 0.0
  %v273 = vmax.f32 %v209, 0.0
  %v274 = vmax.f32 %v210, 0.0
  %v275 = vmax.f32 %v211, 0.0
  %v276 = vmax.f32 %v212, 0.0
  %v277 = vmax.f32 %v213, 0.0
  %v278 = vmax.f32 %v214, 0.0
  %v279 = vmax.f32 %v215, 0.0
  %v280 = vmax.f32 %v216, 0.0
  %v281 = vmax.f32 %v217, 0.0
  %v282 = vmax.f32 %v218, 0.0
  %v283 = vmax.f32 %v219, 0.0
  %v284 = vmax.f32 %v220, 0.0
  %v285 = vmax.f32 %v221, 0.0
  %v286 = vmax.f32 %v222, 0.0
  %v287 = vmax.f32 %v223, 0.0
  %v288 = vmax.f32 %v224, 0.0
  %v289 = vmax.f32 %v225, 0.0
  %v290 = vmax.f32 %v226, 0.0
  %v291 = vmax.f32 %v227, 0.0
  %v292 = vmax.f32 %v228, 0.0
  %v293 = vmax.f32 %v229, 0.0
  %v294 = vmax.f32 %v230, 0.0
  %v295 = vpack.c.bf16 %v232, %v231
  %v296 = vpack.c.bf16 %v234, %v233
  %v297 = vpack.c.bf16 %v236, %v235
  %v298 = vpack.c.bf16 %v238, %v237
  %v299 = vpack.c.bf16 %v240, %v239
  %v300 = vpack.c.bf16 %v242, %v241
  %v301 = vpack.c.bf16 %v244, %v243
  %v302 = vpack.c.bf16 %v246, %v245
  %v303 = vpack.c.bf16 %v248, %v247
  %v304 = vpack.c.bf16 %v250, %v249
  %v305 = vpack.c.bf16 %v252, %v251
  %v306 = vpack.c.bf16 %v254, %v253
  %v307 = vpack.c.bf16 %v256, %v255
  %v308 = vpack.c.bf16 %v258, %v257
  %v309 = vpack.c.bf16 %v260, %v259
  %v310 = vpack.c.bf16 %v262, %v261
  %v311 = vpack.c.bf16 %v264, %v263
  %v312 = vpack.c.bf16 %v266, %v265
  %v313 = vpack.c.bf16 %v268, %v267
  %v314 = vpack.c.bf16 %v270, %v269
  %v315 = vpack.c.bf16 %v272, %v271
  %v316 = vpack.c.bf16 %v274, %v273
  %v317 = vpack.c.bf16 %v276, %v275
  %v318 = vpack.c.bf16 %v278, %v277
  %v319 = vpack.c.bf16 %v280, %v279
  %v320 = vpack.c.bf16 %v282, %v281
  %v321 = vpack.c.bf16 %v284, %v283
  %v322 = vpack.c.bf16 %v286, %v285
  %v323 = vpack.c.bf16 %v288, %v287
  %v324 = vpack.c.bf16 %v290, %v289
  %v325 = vpack.c.bf16 %v292, %v291
  %v326 = vpack.c.bf16 %v294, %v293
  %v327 = vld [vmem:[%s5] sm:$0xf]
  %v328 = vld [vmem:[%s5 + $0x4] sm:$0xf]
  %v329 = vld [vmem:[%s5 + $0x8] sm:$0xf]
  %v330 = vld [vmem:[%s5 + $0xc] sm:$0xf]
  %v331 = vld [vmem:[%s5 + $0x10] sm:$0xf]
  %v332 = vld [vmem:[%s5 + $0x14] sm:$0xf]
  %v333 = vld [vmem:[%s5 + $0x18] sm:$0xf]
  %v334 = vld [vmem:[%s5 + $0x1c] sm:$0xf]
  %v335 = vld [vmem:[%s5 + $0x20] sm:$0xf]
  %v336 = vld [vmem:[%s5 + $0x24] sm:$0xf]
  %v337 = vld [vmem:[%s5 + $0x28] sm:$0xf]
  %v338 = vld [vmem:[%s5 + $0x2c] sm:$0xf]
  %v339 = vld [vmem:[%s5 + $0x30] sm:$0xf]
  %v340 = vld [vmem:[%s5 + $0x34] sm:$0xf]
  %v341 = vld [vmem:[%s5 + $0x38] sm:$0xf]
  %v342 = vld [vmem:[%s5 + $0x3c] sm:$0xf]
  %v359 = vunpack.c.l.b16 %v327
  %v360 = vunpack.c.l.b16 %v328
  %v361 = vunpack.c.l.b16 %v329
  %v362 = vunpack.c.l.b16 %v330
  %v363 = vunpack.c.l.b16 %v331
  %v364 = vunpack.c.l.b16 %v332
  %v365 = vunpack.c.l.b16 %v333
  %v366 = vunpack.c.l.b16 %v334
  %v367 = vunpack.c.l.b16 %v335
  %v368 = vunpack.c.l.b16 %v336
  %v369 = vunpack.c.l.b16 %v337
  %v370 = vunpack.c.l.b16 %v338
  %v371 = vunpack.c.l.b16 %v339
  %v372 = vunpack.c.l.b16 %v340
  %v373 = vunpack.c.l.b16 %v341
  %v374 = vunpack.c.l.b16 %v342
  %v375 = vpack.c.b16 %v360, %v359
  %v376 = vpack.c.b16 %v362, %v361
  %v377 = vpack.c.b16 %v364, %v363
  %v378 = vpack.c.b16 %v366, %v365
  %v379 = vpack.c.b16 %v368, %v367
  %v380 = vpack.c.b16 %v370, %v369
  %v381 = vpack.c.b16 %v372, %v371
  %v382 = vpack.c.b16 %v374, %v373
  %391 = vmatpush.bf16.msra.mxu0 %v382
  %392 = vmatpush.bf16.msra.mxu0 %v381
  %393 = vmatpush.bf16.msra.mxu0 %v380
  %394 = vmatpush.bf16.msra.mxu0 %v379
  %395 = vmatpush.bf16.msra.mxu0 %v378
  %396 = vmatpush.bf16.msra.mxu0 %v377
  %397 = vmatpush.bf16.msra.mxu0 %v376
  %398 = vmatpush.bf16.msra.mxu0 %v375
  %399 = vmatmul.bf16.gmra.mxu0 %v295
  %v400 = vpop.f32.mrf.mxu0
  %v401 = vadd.f32 0.0, %v400
  %v402 = vpop.f32.mrf.mxu0
  %v403 = vadd.f32 0.0, %v402
  %404 = vmatmul.bf16.gmra.mxu0 %v296
  %v405 = vpop.f32.mrf.mxu0
  %v406 = vadd.f32 0.0, %v405
  %v407 = vpop.f32.mrf.mxu0
  %v408 = vadd.f32 0.0, %v407
  %409 = vmatmul.bf16.gmra.mxu0 %v297
  %v410 = vpop.f32.mrf.mxu0
  %v411 = vadd.f32 0.0, %v410
  %v412 = vpop.f32.mrf.mxu0
  %v413 = vadd.f32 0.0, %v412
  %414 = vmatmul.bf16.gmra.mxu0 %v298
  %v415 = vpop.f32.mrf.mxu0
  %v416 = vadd.f32 0.0, %v415
  %v417 = vpop.f32.mrf.mxu0
  %v418 = vadd.f32 0.0, %v417
  %419 = vmatmul.bf16.gmra.mxu0 %v299
  %v420 = vpop.f32.mrf.mxu0
  %v421 = vadd.f32 0.0, %v420
  %v422 = vpop.f32.mrf.mxu0
  %v423 = vadd.f32 0.0, %v422
  %424 = vmatmul.bf16.gmra.mxu0 %v300
  %v425 = vpop.f32.mrf.mxu0
  %v426 = vadd.f32 0.0, %v425
  %v427 = vpop.f32.mrf.mxu0
  %v428 = vadd.f32 0.0, %v427
  %429 = vmatmul.bf16.gmra.mxu0 %v301
  %v430 = vpop.f32.mrf.mxu0
  %v431 = vadd.f32 0.0, %v430
  %v432 = vpop.f32.mrf.mxu0
  %v433 = vadd.f32 0.0, %v432
  %434 = vmatmul.bf16.gmra.mxu0 %v302
  %v435 = vpop.f32.mrf.mxu0
  %v436 = vadd.f32 0.0, %v435
  %v437 = vpop.f32.mrf.mxu0
  %v438 = vadd.f32 0.0, %v437
  %439 = vmatmul.bf16.gmra.mxu0 %v303
  %v440 = vpop.f32.mrf.mxu0
  %v441 = vadd.f32 0.0, %v440
  %v442 = vpop.f32.mrf.mxu0
  %v443 = vadd.f32 0.0, %v442
  %444 = vmatmul.bf16.gmra.mxu0 %v304
  %v445 = vpop.f32.mrf.mxu0
  %v446 = vadd.f32 0.0, %v445
  %v447 = vpop.f32.mrf.mxu0
  %v448 = vadd.f32 0.0, %v447
  %449 = vmatmul.bf16.gmra.mxu0 %v305
  %v450 = vpop.f32.mrf.mxu0
  %v451 = vadd.f32 0.0, %v450
  %v452 = vpop.f32.mrf.mxu0
  %v453 = vadd.f32 0.0, %v452
  %454 = vmatmul.bf16.gmra.mxu0 %v306
  %v455 = vpop.f32.mrf.mxu0
  %v456 = vadd.f32 0.0, %v455
  %v457 = vpop.f32.mrf.mxu0
  %v458 = vadd.f32 0.0, %v457
  %459 = vmatmul.bf16.gmra.mxu0 %v307
  %v460 = vpop.f32.mrf.mxu0
  %v461 = vadd.f32 0.0, %v460
  %v462 = vpop.f32.mrf.mxu0
  %v463 = vadd.f32 0.0, %v462
  %464 = vmatmul.bf16.gmra.mxu0 %v308
  %v465 = vpop.f32.mrf.mxu0
  %v466 = vadd.f32 0.0, %v465
  %v467 = vpop.f32.mrf.mxu0
  %v468 = vadd.f32 0.0, %v467
  %469 = vmatmul.bf16.gmra.mxu0 %v309
  %v470 = vpop.f32.mrf.mxu0
  %v471 = vadd.f32 0.0, %v470
  %v472 = vpop.f32.mrf.mxu0
  %v473 = vadd.f32 0.0, %v472
  %474 = vmatmul.bf16.gmra.mxu0 %v310
  %v475 = vpop.f32.mrf.mxu0
  %v476 = vadd.f32 0.0, %v475
  %v477 = vpop.f32.mrf.mxu0
  %v478 = vadd.f32 0.0, %v477
  %479 = vmatmul.bf16.gmra.mxu0 %v311
  %v480 = vpop.f32.mrf.mxu0
  %v481 = vadd.f32 0.0, %v480
  %v482 = vpop.f32.mrf.mxu0
  %v483 = vadd.f32 0.0, %v482
  %484 = vmatmul.bf16.gmra.mxu0 %v312
  %v485 = vpop.f32.mrf.mxu0
  %v486 = vadd.f32 0.0, %v485
  %v487 = vpop.f32.mrf.mxu0
  %v488 = vadd.f32 0.0, %v487
  %489 = vmatmul.bf16.gmra.mxu0 %v313
  %v490 = vpop.f32.mrf.mxu0
  %v491 = vadd.f32 0.0, %v490
  %v492 = vpop.f32.mrf.mxu0
  %v493 = vadd.f32 0.0, %v492
  %494 = vmatmul.bf16.gmra.mxu0 %v314
  %v495 = vpop.f32.mrf.mxu0
  %v496 = vadd.f32 0.0, %v495
  %v497 = vpop.f32.mrf.mxu0
  %v498 = vadd.f32 0.0, %v497
  %499 = vmatmul.bf16.gmra.mxu0 %v315
  %v500 = vpop.f32.mrf.mxu0
  %v501 = vadd.f32 0.0, %v500
  %v502 = vpop.f32.mrf.mxu0
  %v503 = vadd.f32 0.0, %v502
  %504 = vmatmul.bf16.gmra.mxu0 %v316
  %v505 = vpop.f32.mrf.mxu0
  %v506 = vadd.f32 0.0, %v505
  %v507 = vpop.f32.mrf.mxu0
  %v508 = vadd.f32 0.0, %v507
  %509 = vmatmul.bf16.gmra.mxu0 %v317
  %v510 = vpop.f32.mrf.mxu0
  %v511 = vadd.f32 0.0, %v510
  %v512 = vpop.f32.mrf.mxu0
  %v513 = vadd.f32 0.0, %v512
  %514 = vmatmul.bf16.gmra.mxu0 %v318
  %v515 = vpop.f32.mrf.mxu0
  %v516 = vadd.f32 0.0, %v515
  %v517 = vpop.f32.mrf.mxu0
  %v518 = vadd.f32 0.0, %v517
  %519 = vmatmul.bf16.gmra.mxu0 %v319
  %v520 = vpop.f32.mrf.mxu0
  %v521 = vadd.f32 0.0, %v520
  %v522 = vpop.f32.mrf.mxu0
  %v523 = vadd.f32 0.0, %v522
  %524 = vmatmul.bf16.gmra.mxu0 %v320
  %v525 = vpop.f32.mrf.mxu0
  %v526 = vadd.f32 0.0, %v525
  %v527 = vpop.f32.mrf.mxu0
  %v528 = vadd.f32 0.0, %v527
  %529 = vmatmul.bf16.gmra.mxu0 %v321
  %v530 = vpop.f32.mrf.mxu0
  %v531 = vadd.f32 0.0, %v530
  %v532 = vpop.f32.mrf.mxu0
  %v533 = vadd.f32 0.0, %v532
  %534 = vmatmul.bf16.gmra.mxu0 %v322
  %v535 = vpop.f32.mrf.mxu0
  %v536 = vadd.f32 0.0, %v535
  %v537 = vpop.f32.mrf.mxu0
  %v538 = vadd.f32 0.0, %v537
  %539 = vmatmul.bf16.gmra.mxu0 %v323
  %v540 = vpop.f32.mrf.mxu0
  %v541 = vadd.f32 0.0, %v540
  %v542 = vpop.f32.mrf.mxu0
  %v543 = vadd.f32 0.0, %v542
  %544 = vmatmul.bf16.gmra.mxu0 %v324
  %v545 = vpop.f32.mrf.mxu0
  %v546 = vadd.f32 0.0, %v545
  %v547 = vpop.f32.mrf.mxu0
  %v548 = vadd.f32 0.0, %v547
  %549 = vmatmul.bf16.gmra.mxu0 %v325
  %v550 = vpop.f32.mrf.mxu0
  %v551 = vadd.f32 0.0, %v550
  %v552 = vpop.f32.mrf.mxu0
  %v553 = vadd.f32 0.0, %v552
  %554 = vmatmul.bf16.gmra.mxu0 %v326
  %v555 = vpop.f32.mrf.mxu0
  %v556 = vadd.f32 0.0, %v555
  %v557 = vpop.f32.mrf.mxu0
  %v558 = vadd.f32 0.0, %v557
  %559 = vdwg.mxu0
  %v560 = vpack.c.bf16 %v401, %v401
  %v561 = vpack.c.bf16 %v403, %v403
  %v562 = vpack.c.bf16 %v406, %v406
  %v563 = vpack.c.bf16 %v408, %v408
  %v564 = vpack.c.bf16 %v411, %v411
  %v565 = vpack.c.bf16 %v413, %v413
  %v566 = vpack.c.bf16 %v416, %v416
  %v567 = vpack.c.bf16 %v418, %v418
  %v568 = vpack.c.bf16 %v421, %v421
  %v569 = vpack.c.bf16 %v423, %v423
  %v570 = vpack.c.bf16 %v426, %v426
  %v571 = vpack.c.bf16 %v428, %v428
  %v572 = vpack.c.bf16 %v431, %v431
  %v573 = vpack.c.bf16 %v433, %v433
  %v574 = vpack.c.bf16 %v436, %v436
  %v575 = vpack.c.bf16 %v438, %v438
  %v576 = vpack.c.bf16 %v441, %v441
  %v577 = vpack.c.bf16 %v443, %v443
  %v578 = vpack.c.bf16 %v446, %v446
  %v579 = vpack.c.bf16 %v448, %v448
  %v580 = vpack.c.bf16 %v451, %v451
  %v581 = vpack.c.bf16 %v453, %v453
  %v582 = vpack.c.bf16 %v456, %v456
  %v583 = vpack.c.bf16 %v458, %v458
  %v584 = vpack.c.bf16 %v461, %v461
  %v585 = vpack.c.bf16 %v463, %v463
  %v586 = vpack.c.bf16 %v466, %v466
  %v587 = vpack.c.bf16 %v468, %v468
  %v588 = vpack.c.bf16 %v471, %v471
  %v589 = vpack.c.bf16 %v473, %v473
  %v590 = vpack.c.bf16 %v476, %v476
  %v591 = vpack.c.bf16 %v478, %v478
  %v592 = vpack.c.bf16 %v481, %v481
  %v593 = vpack.c.bf16 %v483, %v483
  %v594 = vpack.c.bf16 %v486, %v486
  %v595 = vpack.c.bf16 %v488, %v488
  %v596 = vpack.c.bf16 %v491, %v491
  %v597 = vpack.c.bf16 %v493, %v493
  %v598 = vpack.c.bf16 %v496, %v496
  %v599 = vpack.c.bf16 %v498, %v498
  %v600 = vpack.c.bf16 %v501, %v501
  %v601 = vpack.c.bf16 %v503, %v503
  %v602 = vpack.c.bf16 %v506, %v506
  %v603 = vpack.c.bf16 %v508, %v508
  %v604 = vpack.c.bf16 %v511, %v511
  %v605 = vpack.c.bf16 %v513, %v513
  %v606 = vpack.c.bf16 %v516, %v516
  %v607 = vpack.c.bf16 %v518, %v518
  %v608 = vpack.c.bf16 %v521, %v521
  %v609 = vpack.c.bf16 %v523, %v523
  %v610 = vpack.c.bf16 %v526, %v526
  %v611 = vpack.c.bf16 %v528, %v528
  %v612 = vpack.c.bf16 %v531, %v531
  %v613 = vpack.c.bf16 %v533, %v533
  %v614 = vpack.c.bf16 %v536, %v536
  %v615 = vpack.c.bf16 %v538, %v538
  %v616 = vpack.c.bf16 %v541, %v541
  %v617 = vpack.c.bf16 %v543, %v543
  %v618 = vpack.c.bf16 %v546, %v546
  %v619 = vpack.c.bf16 %v548, %v548
  %v620 = vpack.c.bf16 %v551, %v551
  %v621 = vpack.c.bf16 %v553, %v553
  %v622 = vpack.c.bf16 %v556, %v556
  %v623 = vpack.c.bf16 %v558, %v558
  %624 = vst [vmem:[%s6] sm:$0xf] %v560
  %625 = vst [vmem:[%s6 + $0x4] sm:$0xf] %v561
  %626 = vst [vmem:[%s6 + $0x8] sm:$0xf] %v562
  %627 = vst [vmem:[%s6 + $0xc] sm:$0xf] %v563
  %628 = vst [vmem:[%s6 + $0x10] sm:$0xf] %v564
  %629 = vst [vmem:[%s6 + $0x14] sm:$0xf] %v565
  %630 = vst [vmem:[%s6 + $0x18] sm:$0xf] %v566
  %631 = vst [vmem:[%s6 + $0x1c] sm:$0xf] %v567
  %632 = vst [vmem:[%s6 + $0x20] sm:$0xf] %v568
  %633 = vst [vmem:[%s6 + $0x24] sm:$0xf] %v569
  %634 = vst [vmem:[%s6 + $0x28] sm:$0xf] %v570
  %635 = vst [vmem:[%s6 + $0x2c] sm:$0xf] %v571
  %636 = vst [vmem:[%s6 + $0x30] sm:$0xf] %v572
  %637 = vst [vmem:[%s6 + $0x34] sm:$0xf] %v573
  %638 = vst [vmem:[%s6 + $0x38] sm:$0xf] %v574
  %639 = vst [vmem:[%s6 + $0x3c] sm:$0xf] %v575
  %640 = vst [vmem:[%s6 + $0x40] sm:$0xf] %v576
  %641 = vst [vmem:[%s6 + $0x44] sm:$0xf] %v577
  %642 = vst [vmem:[%s6 + $0x48] sm:$0xf] %v578
  %643 = vst [vmem:[%s6 + $0x4c] sm:$0xf] %v579
  %644 = vst [vmem:[%s6 + $0x50] sm:$0xf] %v580
  %645 = vst [vmem:[%s6 + $0x54] sm:$0xf] %v581
  %646 = vst [vmem:[%s6 + $0x58] sm:$0xf] %v582
  %647 = vst [vmem:[%s6 + $0x5c] sm:$0xf] %v583
  %648 = vst [vmem:[%s6 + $0x60] sm:$0xf] %v584
  %649 = vst [vmem:[%s6 + $0x64] sm:$0xf] %v585
  %650 = vst [vmem:[%s6 + $0x68] sm:$0xf] %v586
  %651 = vst [vmem:[%s6 + $0x6c] sm:$0xf] %v587
  %652 = vst [vmem:[%s6 + $0x70] sm:$0xf] %v588
  %653 = vst [vmem:[%s6 + $0x74] sm:$0xf] %v589
  %654 = vst [vmem:[%s6 + $0x78] sm:$0xf] %v590
  %655 = vst [vmem:[%s6 + $0x7c] sm:$0xf] %v591
  %656 = vst [vmem:[%s6 + $0x80] sm:$0xf] %v592
  %657 = vst [vmem:[%s6 + $0x84] sm:$0xf] %v593
  %658 = vst [vmem:[%s6 + $0x88] sm:$0xf] %v594
  %659 = vst [vmem:[%s6 + $0x8c] sm:$0xf] %v595
  %660 = vst [vmem:[%s6 + $0x90] sm:$0xf] %v596
  %661 = vst [vmem:[%s6 + $0x94] sm:$0xf] %v597
  %662 = vst [vmem:[%s6 + $0x98] sm:$0xf] %v598
  %663 = vst [vmem:[%s6 + $0x9c] sm:$0xf] %v599
  %664 = vst [vmem:[%s6 + $0xa0] sm:$0xf] %v600
  %665 = vst [vmem:[%s6 + $0xa4] sm:$0xf] %v601
  %666 = vst [vmem:[%s6 + $0xa8] sm:$0xf] %v602
  %667 = vst [vmem:[%s6 + $0xac] sm:$0xf] %v603
  %668 = vst [vmem:[%s6 + $0xb0] sm:$0xf] %v604
  %669 = vst [vmem:[%s6 + $0xb4] sm:$0xf] %v605
  %670 = vst [vmem:[%s6 + $0xb8] sm:$0xf] %v606
  %671 = vst [vmem:[%s6 + $0xbc] sm:$0xf] %v607
  %672 = vst [vmem:[%s6 + $0xc0] sm:$0xf] %v608
  %673 = vst [vmem:[%s6 + $0xc4] sm:$0xf] %v609
  %674 = vst [vmem:[%s6 + $0xc8] sm:$0xf] %v610
  %675 = vst [vmem:[%s6 + $0xcc] sm:$0xf] %v611
  %676 = vst [vmem:[%s6 + $0xd0] sm:$0xf] %v612
  %677 = vst [vmem:[%s6 + $0xd4] sm:$0xf] %v613
  %678 = vst [vmem:[%s6 + $0xd8] sm:$0xf] %v614
  %679 = vst [vmem:[%s6 + $0xdc] sm:$0xf] %v615
  %680 = vst [vmem:[%s6 + $0xe0] sm:$0xf] %v616
  %681 = vst [vmem:[%s6 + $0xe4] sm:$0xf] %v617
  %682 = vst [vmem:[%s6 + $0xe8] sm:$0xf] %v618
  %683 = vst [vmem:[%s6 + $0xec] sm:$0xf] %v619
  %684 = vst [vmem:[%s6 + $0xf0] sm:$0xf] %v620
  %685 = vst [vmem:[%s6 + $0xf4] sm:$0xf] %v621
  %686 = vst [vmem:[%s6 + $0xf8] sm:$0xf] %v622
  %687 = vst [vmem:[%s6 + $0xfc] sm:$0xf] %v623
  %v688 = vadd.f32 %v401, %v403
  %v689 = vadd.f32 %v688, %v406
  %v690 = vadd.f32 %v689, %v408
  %v691 = vadd.f32 %v690, %v411
  %v692 = vadd.f32 %v691, %v413
  %v693 = vadd.f32 %v692, %v416
  %v694 = vadd.f32 %v693, %v418
  %v695 = vadd.f32 %v694, %v421
  %v696 = vadd.f32 %v695, %v423
  %v697 = vadd.f32 %v696, %v426
  %v698 = vadd.f32 %v697, %v428
  %v699 = vadd.f32 %v698, %v431
  %v700 = vadd.f32 %v699, %v433
  %v701 = vadd.f32 %v700, %v436
  %v702 = vadd.f32 %v701, %v438
  %v703 = vadd.f32 %v702, %v441
  %v704 = vadd.f32 %v703, %v443
  %v705 = vadd.f32 %v704, %v446
  %v706 = vadd.f32 %v705, %v448
  %v707 = vadd.f32 %v706, %v451
  %v708 = vadd.f32 %v707, %v453
  %v709 = vadd.f32 %v708, %v456
  %v710 = vadd.f32 %v709, %v458
  %v711 = vadd.f32 %v710, %v461
  %v712 = vadd.f32 %v711, %v463
  %v713 = vadd.f32 %v712, %v466
  %v714 = vadd.f32 %v713, %v468
  %v715 = vadd.f32 %v714, %v471
  %v716 = vadd.f32 %v715, %v473
  %v717 = vadd.f32 %v716, %v476
  %v718 = vadd.f32 %v717, %v478
  %v719 = vadd.f32 %v718, %v481
  %v720 = vadd.f32 %v719, %v483
  %v721 = vadd.f32 %v720, %v486
  %v722 = vadd.f32 %v721, %v488
  %v723 = vadd.f32 %v722, %v491
  %v724 = vadd.f32 %v723, %v493
  %v725 = vadd.f32 %v724, %v496
  %v726 = vadd.f32 %v725, %v498
  %v727 = vadd.f32 %v726, %v501
  %v728 = vadd.f32 %v727, %v503
  %v729 = vadd.f32 %v728, %v506
  %v730 = vadd.f32 %v729, %v508
  %v731 = vadd.f32 %v730, %v511
  %v732 = vadd.f32 %v731, %v513
  %v733 = vadd.f32 %v732, %v516
  %v734 = vadd.f32 %v733, %v518
  %v735 = vadd.f32 %v734, %v521
  %v736 = vadd.f32 %v735, %v523
  %v737 = vadd.f32 %v736, %v526
  %v738 = vadd.f32 %v737, %v528
  %v739 = vadd.f32 %v738, %v531
  %v740 = vadd.f32 %v739, %v533
  %v741 = vadd.f32 %v740, %v536
  %v742 = vadd.f32 %v741, %v538
  %v743 = vadd.f32 %v742, %v541
  %v744 = vadd.f32 %v743, %v543
  %v745 = vadd.f32 %v744, %v546
  %v746 = vadd.f32 %v745, %v548
  %v747 = vadd.f32 %v746, %v551
  %v748 = vadd.f32 %v747, %v553
  %v749 = vadd.f32 %v748, %v556
  %v750 = vadd.f32 %v749, %v558
  %v751 = vrot.slane %v750, 4
  %v752 = vadd.f32 %v750, %v751
  %v753 = vrot.slane %v752, 2
  %v754 = vadd.f32 %v752, %v753
  %v755 = vrot.slane %v754, 1
  %v756 = vadd.f32 %v754, %v755
  %757 = vst [vmem:[%s7] sm:$0x1] %v756
  %v758 = vmul.f32 %v401, %v401
  %v759 = vmul.f32 %v403, %v403
  %v760 = vmul.f32 %v406, %v406
  %v761 = vmul.f32 %v408, %v408
  %v762 = vmul.f32 %v411, %v411
  %v763 = vmul.f32 %v413, %v413
  %v764 = vmul.f32 %v416, %v416
  %v765 = vmul.f32 %v418, %v418
  %v766 = vmul.f32 %v421, %v421
  %v767 = vmul.f32 %v423, %v423
  %v768 = vmul.f32 %v426, %v426
  %v769 = vmul.f32 %v428, %v428
  %v770 = vmul.f32 %v431, %v431
  %v771 = vmul.f32 %v433, %v433
  %v772 = vmul.f32 %v436, %v436
  %v773 = vmul.f32 %v438, %v438
  %v774 = vmul.f32 %v441, %v441
  %v775 = vmul.f32 %v443, %v443
  %v776 = vmul.f32 %v446, %v446
  %v777 = vmul.f32 %v448, %v448
  %v778 = vmul.f32 %v451, %v451
  %v779 = vmul.f32 %v453, %v453
  %v780 = vmul.f32 %v456, %v456
  %v781 = vmul.f32 %v458, %v458
  %v782 = vmul.f32 %v461, %v461
  %v783 = vmul.f32 %v463, %v463
  %v784 = vmul.f32 %v466, %v466
  %v785 = vmul.f32 %v468, %v468
  %v786 = vmul.f32 %v471, %v471
  %v787 = vmul.f32 %v473, %v473
  %v788 = vmul.f32 %v476, %v476
  %v789 = vmul.f32 %v478, %v478
  %v790 = vmul.f32 %v481, %v481
  %v791 = vmul.f32 %v483, %v483
  %v792 = vmul.f32 %v486, %v486
  %v793 = vmul.f32 %v488, %v488
  %v794 = vmul.f32 %v491, %v491
  %v795 = vmul.f32 %v493, %v493
  %v796 = vmul.f32 %v496, %v496
  %v797 = vmul.f32 %v498, %v498
  %v798 = vmul.f32 %v501, %v501
  %v799 = vmul.f32 %v503, %v503
  %v800 = vmul.f32 %v506, %v506
  %v801 = vmul.f32 %v508, %v508
  %v802 = vmul.f32 %v511, %v511
  %v803 = vmul.f32 %v513, %v513
  %v804 = vmul.f32 %v516, %v516
  %v805 = vmul.f32 %v518, %v518
  %v806 = vmul.f32 %v521, %v521
  %v807 = vmul.f32 %v523, %v523
  %v808 = vmul.f32 %v526, %v526
  %v809 = vmul.f32 %v528, %v528
  %v810 = vmul.f32 %v531, %v531
  %v811 = vmul.f32 %v533, %v533
  %v812 = vmul.f32 %v536, %v536
  %v813 = vmul.f32 %v538, %v538
  %v814 = vmul.f32 %v541, %v541
  %v815 = vmul.f32 %v543, %v543
  %v816 = vmul.f32 %v546, %v546
  %v817 = vmul.f32 %v548, %v548
  %v818 = vmul.f32 %v551, %v551
  %v819 = vmul.f32 %v553, %v553
  %v820 = vmul.f32 %v556, %v556
  %v821 = vmul.f32 %v558, %v558
  %v822 = vadd.f32 %v758, %v759
  %v823 = vadd.f32 %v822, %v760
  %v824 = vadd.f32 %v823, %v761
  %v825 = vadd.f32 %v824, %v762
  %v826 = vadd.f32 %v825, %v763
  %v827 = vadd.f32 %v826, %v764
  %v828 = vadd.f32 %v827, %v765
  %v829 = vadd.f32 %v828, %v766
  %v830 = vadd.f32 %v829, %v767
  %v831 = vadd.f32 %v830, %v768
  %v832 = vadd.f32 %v831, %v769
  %v833 = vadd.f32 %v832, %v770
  %v834 = vadd.f32 %v833, %v771
  %v835 = vadd.f32 %v834, %v772
  %v836 = vadd.f32 %v835, %v773
  %v837 = vadd.f32 %v836, %v774
  %v838 = vadd.f32 %v837, %v775
  %v839 = vadd.f32 %v838, %v776
  %v840 = vadd.f32 %v839, %v777
  %v841 = vadd.f32 %v840, %v778
  %v842 = vadd.f32 %v841, %v779
  %v843 = vadd.f32 %v842, %v780
  %v844 = vadd.f32 %v843, %v781
  %v845 = vadd.f32 %v844, %v782
  %v846 = vadd.f32 %v845, %v783
  %v847 = vadd.f32 %v846, %v784
  %v848 = vadd.f32 %v847, %v785
  %v849 = vadd.f32 %v848, %v786
  %v850 = vadd.f32 %v849, %v787
  %v851 = vadd.f32 %v850, %v788
  %v852 = vadd.f32 %v851, %v789
  %v853 = vadd.f32 %v852, %v790
  %v854 = vadd.f32 %v853, %v791
  %v855 = vadd.f32 %v854, %v792
  %v856 = vadd.f32 %v855, %v793
  %v857 = vadd.f32 %v856, %v794
  %v858 = vadd.f32 %v857, %v795
  %v859 = vadd.f32 %v858, %v796
  %v860 = vadd.f32 %v859, %v797
  %v861 = vadd.f32 %v860, %v798
  %v862 = vadd.f32 %v861, %v799
  %v863 = vadd.f32 %v862, %v800
  %v864 = vadd.f32 %v863, %v801
  %v865 = vadd.f32 %v864, %v802
  %v866 = vadd.f32 %v865, %v803
  %v867 = vadd.f32 %v866, %v804
  %v868 = vadd.f32 %v867, %v805
  %v869 = vadd.f32 %v868, %v806
  %v870 = vadd.f32 %v869, %v807
  %v871 = vadd.f32 %v870, %v808
  %v872 = vadd.f32 %v871, %v809
  %v873 = vadd.f32 %v872, %v810
  %v874 = vadd.f32 %v873, %v811
  %v875 = vadd.f32 %v874, %v812
  %v876 = vadd.f32 %v875, %v813
  %v877 = vadd.f32 %v876, %v814
  %v878 = vadd.f32 %v877, %v815
  %v879 = vadd.f32 %v878, %v816
  %v880 = vadd.f32 %v879, %v817
  %v881 = vadd.f32 %v880, %v818
  %v882 = vadd.f32 %v881, %v819
  %v883 = vadd.f32 %v882, %v820
  %v884 = vadd.f32 %v883, %v821
  %v885 = vrot.slane %v884, 4
  %v886 = vadd.f32 %v884, %v885
  %v887 = vrot.slane %v886, 2
  %v888 = vadd.f32 %v886, %v887
  %v889 = vrot.slane %v888, 1
  %v890 = vadd.f32 %v888, %v889
  %891 = vst [vmem:[%s8] sm:$0x1] %v890
  // Predicated region
  $region26: #{preact_bottleneck_pallas.6} parent=0 // pred_check
    _
  $region27: #{preact_bottleneck_pallas.6} parent=0 // pred_check_branch
    %893 = sbr.rel (0) target = $region29
  $region28: #{preact_bottleneck_pallas.6} parent=0 // pred_region
    _
  $region29: #{preact_bottleneck_pallas.6} parent=0 // pred_fallthru
    _
  // Predicated region
  $region30: #{preact_bottleneck_pallas.6} parent=0 // pred_check
    _
  $region31: #{preact_bottleneck_pallas.6} parent=0 // pred_check_branch
    %895 = sbr.rel (0) target = $region33
  $region32: #{preact_bottleneck_pallas.6} parent=0 // pred_region
    _
  $region33: #{preact_bottleneck_pallas.6} parent=0 // pred_fallthru
    _
  // Predicated region
  $region34: #{preact_bottleneck_pallas.6} parent=0 // pred_check
    _
  $region35: #{preact_bottleneck_pallas.6} parent=0 // pred_check_branch
    %897 = sbr.rel (0) target = $region37
  $region36: #{preact_bottleneck_pallas.6} parent=0 // pred_region
    _
  $region37: #{preact_bottleneck_pallas.6} parent=0 // pred_fallthru
    _
  // Predicated region
  $region38: #{preact_bottleneck_pallas.6} parent=0 // pred_check
    _
  $region39: #{preact_bottleneck_pallas.6} parent=0 // pred_check_branch
    %899 = sbr.rel (0) target = $region41
  $region40: #{preact_bottleneck_pallas.6} parent=0 // pred_region
    _
  $region41: #{preact_bottleneck_pallas.6} parent=0 // pred_fallthru
    _
  // Predicated region
  $region42: #{preact_bottleneck_pallas.6} parent=0 // pred_check
    _
  $region43: #{preact_bottleneck_pallas.6} parent=0 // pred_check_branch
    %901 = sbr.rel (0) target = $region45
  $region44: #{preact_bottleneck_pallas.6} parent=0 // pred_region
    _
  $region45: #{preact_bottleneck_pallas.6} parent=0 // pred_fallthru
    _
  // Predicated region
  $region46: #{preact_bottleneck_pallas.6} parent=0 // pred_check
    _
  $region47: #{preact_bottleneck_pallas.6} parent=0 // pred_check_branch
    %903 = sbr.rel (0) target = $region49
  $region48: #{preact_bottleneck_pallas.6} parent=0 // pred_region
    _
  $region49: #{preact_bottleneck_pallas.6} parent=0 // pred_fallthru
    _

// kernel: preact_bottleneck_pallas.7
$region0: #{preact_bottleneck_pallas.7}
  #allocation0 [shape = 'u32[]', space=smem, size = 0x4, offset = 0x4, fixed_abs, tag = 'smem constant byte address 0x4 - core index']
  #allocation1 [shape = 'u32[72,128]{1,0:T(1,128)}', space=vmem, size = 0x9000, scoped, tag = 'internal scratch']
  %s0 = inlined_call_operand.vmem [shape: f32[2,8,2,8,256], index: 0, kind: input, shape index: {}]
  %s1 = inlined_call_operand.vmem [shape: f32[1,128], index: 1, kind: input, shape index: {}]
  %s2 = inlined_call_operand.vmem [shape: f32[1,128], index: 2, kind: input, shape index: {}]
  %s3 = inlined_call_operand.vmem [shape: f32[1,128], index: 3, kind: input, shape index: {}]
  %s4 = inlined_call_operand.vmem [shape: f32[1,128], index: 4, kind: input, shape index: {}]
  %s5 = inlined_call_operand.vmem [shape: bf16[128,128], index: 5, kind: input, shape index: {}]
  %s6 = inlined_call_operand.vmem [shape: f32[2,64,128], index: 6, kind: output, shape index: {}]
  %s7 = sld [smem:[#allocation0]]
  $region95: #{preact_bottleneck_pallas.7} parent=0
    _
  %s9 = ssub.s32 1, %s7
  %s10 = scalar_select 0, %s9, %s7
  $region1: #{preact_bottleneck_pallas.7} parent=0
    #allocation2 [shape = 'u8[65536]{0}', space=vmem, size = 0x10000, scoped, tag = 'input window, operand 0']
    loop: start=0, step=1, limit=4
    $region2: #{preact_bottleneck_pallas.7} parent=1 // loop_pre_header
      _
    $region3: #{preact_bottleneck_pallas.7} parent=1 // loop_header
      %s12 = sphi 0, %s16
      %p13 = scmp.ge.s32.totalorder %s12, 4
      %s22 = sphi 0, %s24
      %s25 = sphi 0, %s22
      %s26 = sphi 0, %s25
      %s42 = sphi 0, %s26
      %s46 = sphi 0, %s46
      %s48 = sphi 0, %s46
      %s49 = sphi 0, %s48
      %s63 = sphi 0, %s49
      %s67 = sphi 0, %s67
      %s69 = sphi 0, %s67
      %s70 = sphi 0, %s69
      %s84 = sphi 0, %s70
      %s88 = sphi 0, %s88
      %s90 = sphi 0, %s88
      %s91 = sphi 0, %s90
      %s105 = sphi 0, %s91
      %s109 = sphi 0, %s109
      %s111 = sphi 0, %s109
      %s112 = sphi 0, %s111
      %s126 = sphi 0, %s112
      %s130 = sphi 0, %s130
      %s132 = sphi 0, %s130
      %s133 = sphi 0, %s132
      %s147 = sphi 0, %s133
      %s153 = sphi 0, %s155
      %s156 = sphi 0, %s153
      %s157 = sphi 0, %s156
      %s173 = sphi 0, %s157
    $region4: #{preact_bottleneck_pallas.7} parent=1 // loop_header_branch
      %15 = sbr.rel (%p13) target = $region8
    $region5: #{preact_bottleneck_pallas.7} parent=1 // loop_body
      %s17 = ssub.s32 %s12, 1
      %s18 = ssub.s32 %s12, 2
      %s19 = sadd.s32 %s12, 1
      %s20 = ssub.s32 %s12, %s19
      %p21 = scmp.eq.s32.totalorder %s20, 0
      %s23 = sadd.s32 %s22, 1
      %s24 = scalar_select %p21, %s22, %s23
      %p27 = pneg %p21
      %p28 = scmp.eq.s32.totalorder %s12, 1
      %p29 = por %p27, %p28
      %p30 = scmp.ne.s32.totalorder %s22, %s25
      %p31 = scmp.eq.s32.totalorder %s12, 0
      %p32 = por %p30, %p31
      %p33 = scmp.ne.s32.totalorder %s22, %s25
      %p34 = scmp.eq.s32.totalorder %s17, 1
      %p35 = por %p33, %p34
      %p36 = scmp.ne.s32.totalorder %s25, %s26
      %p37 = scmp.eq.s32.totalorder %s17, 0
      %p38 = por %p36, %p37
      %p39 = scmp.ne.s32.totalorder %s25, %s26
      %p40 = scmp.eq.s32.totalorder %s18, 1
      %p41 = por %p39, %p40
      %p43 = scmp.ne.s32.totalorder %s26, %s42
      %p44 = scmp.eq.s32.totalorder %s18, 0
      %p45 = por %p43, %p44
      %s47 = sadd.s32 %s46, 1
      %p50 = scmp.eq.s32.totalorder %s12, 1
      %p51 = scmp.ne.s32.totalorder %s46, %s48
      %p52 = scmp.eq.s32.totalorder %s12, 0
      %p53 = por %p51, %p52
      %p54 = scmp.ne.s32.totalorder %s46, %s48
      %p55 = scmp.eq.s32.totalorder %s17, 1
      %p56 = por %p54, %p55
      %p57 = scmp.ne.s32.totalorder %s48, %s49
      %p58 = scmp.eq.s32.totalorder %s17, 0
      %p59 = por %p57, %p58
      %p60 = scmp.ne.s32.totalorder %s48, %s49
      %p61 = scmp.eq.s32.totalorder %s18, 1
      %p62 = por %p60, %p61
      %p64 = scmp.ne.s32.totalorder %s49, %s63
      %p65 = scmp.eq.s32.totalorder %s18, 0
      %p66 = por %p64, %p65
      %s68 = sadd.s32 %s67, 1
      %p71 = scmp.eq.s32.totalorder %s12, 1
      %p72 = scmp.ne.s32.totalorder %s67, %s69
      %p73 = scmp.eq.s32.totalorder %s12, 0
      %p74 = por %p72, %p73
      %p75 = scmp.ne.s32.totalorder %s67, %s69
      %p76 = scmp.eq.s32.totalorder %s17, 1
      %p77 = por %p75, %p76
      %p78 = scmp.ne.s32.totalorder %s69, %s70
      %p79 = scmp.eq.s32.totalorder %s17, 0
      %p80 = por %p78, %p79
      %p81 = scmp.ne.s32.totalorder %s69, %s70
      %p82 = scmp.eq.s32.totalorder %s18, 1
      %p83 = por %p81, %p82
      %p85 = scmp.ne.s32.totalorder %s70, %s84
      %p86 = scmp.eq.s32.totalorder %s18, 0
      %p87 = por %p85, %p86
      %s89 = sadd.s32 %s88, 1
      %p92 = scmp.eq.s32.totalorder %s12, 1
      %p93 = scmp.ne.s32.totalorder %s88, %s90
      %p94 = scmp.eq.s32.totalorder %s12, 0
      %p95 = por %p93, %p94
      %p96 = scmp.ne.s32.totalorder %s88, %s90
      %p97 = scmp.eq.s32.totalorder %s17, 1
      %p98 = por %p96, %p97
      %p99 = scmp.ne.s32.totalorder %s90, %s91
      %p100 = scmp.eq.s32.totalorder %s17, 0
      %p101 = por %p99, %p100
      %p102 = scmp.ne.s32.totalorder %s90, %s91
      %p103 = scmp.eq.s32.totalorder %s18, 1
      %p104 = por %p102, %p103
      %p106 = scmp.ne.s32.totalorder %s91, %s105
      %p107 = scmp.eq.s32.totalorder %s18, 0
      %p108 = por %p106, %p107
      %s110 = sadd.s32 %s109, 1
      %p113 = scmp.eq.s32.totalorder %s12, 1
      %p114 = scmp.ne.s32.totalorder %s109, %s111
      %p115 = scmp.eq.s32.totalorder %s12, 0
      %p116 = por %p114, %p115
      %p117 = scmp.ne.s32.totalorder %s109, %s111
      %p118 = scmp.eq.s32.totalorder %s17, 1
      %p119 = por %p117, %p118
      %p120 = scmp.ne.s32.totalorder %s111, %s112
      %p121 = scmp.eq.s32.totalorder %s17, 0
      %p122 = por %p120, %p121
      %p123 = scmp.ne.s32.totalorder %s111, %s112
      %p124 = scmp.eq.s32.totalorder %s18, 1
      %p125 = por %p123, %p124
      %p127 = scmp.ne.s32.totalorder %s112, %s126
      %p128 = scmp.eq.s32.totalorder %s18, 0
      %p129 = por %p127, %p128
      %s131 = sadd.s32 %s130, 1
      %p134 = scmp.eq.s32.totalorder %s12, 1
      %p135 = scmp.ne.s32.totalorder %s130, %s132
      %p136 = scmp.eq.s32.totalorder %s12, 0
      %p137 = por %p135, %p136
      %p138 = scmp.ne.s32.totalorder %s130, %s132
      %p139 = scmp.eq.s32.totalorder %s17, 1
      %p140 = por %p138, %p139
      %p141 = scmp.ne.s32.totalorder %s132, %s133
      %p142 = scmp.eq.s32.totalorder %s17, 0
      %p143 = por %p141, %p142
      %p144 = scmp.ne.s32.totalorder %s132, %s133
      %p145 = scmp.eq.s32.totalorder %s18, 1
      %p146 = por %p144, %p145
      %p148 = scmp.ne.s32.totalorder %s133, %s147
      %p149 = scmp.eq.s32.totalorder %s18, 0
      %p150 = por %p148, %p149
      %s151 = ssub.s32 %s12, %s19
      %p152 = scmp.eq.s32.totalorder %s151, 0
      %s154 = sadd.s32 %s153, 1
      %s155 = scalar_select %p152, %s153, %s154
      %p158 = pneg %p152
      %p159 = scmp.eq.s32.totalorder %s12, 1
      %p160 = por %p158, %p159
      %p161 = scmp.ne.s32.totalorder %s153, %s156
      %p162 = scmp.eq.s32.totalorder %s12, 0
      %p163 = por %p161, %p162
      %p164 = scmp.ne.s32.totalorder %s153, %s156
      %p165 = scmp.eq.s32.totalorder %s17, 1
      %p166 = por %p164, %p165
      %p167 = scmp.ne.s32.totalorder %s156, %s157
      %p168 = scmp.eq.s32.totalorder %s17, 0
      %p169 = por %p167, %p168
      %p170 = scmp.ne.s32.totalorder %s156, %s157
      %p171 = scmp.eq.s32.totalorder %s18, 1
      %p172 = por %p170, %p171
      %p174 = scmp.ne.s32.totalorder %s157, %s173
      %p175 = scmp.eq.s32.totalorder %s18, 0
      %p176 = por %p174, %p175
      %p177 = scmp.le.s32.totalorder 1, %s12
      %p178 = scmp.lt.s32.totalorder %s12, 3
      %p179 = pnand %p177, %p178
      %p180 = pneg %p179
      // Predicated region
      $region9: #{preact_bottleneck_pallas.7} parent=5 // pred_check
        _
      $region10: #{preact_bottleneck_pallas.7} parent=5 // pred_check_branch
        %182 = sbr.rel (%p179) target = $region12
      $region11: #{preact_bottleneck_pallas.7} parent=5 // pred_region
        %s183 = ssub.s32 %s12, 1
        // Predicated region
        $region13: #{preact_bottleneck_pallas.7} parent=11 // pred_check
          %p184 = pneg %p59
        $region14: #{preact_bottleneck_pallas.7} parent=11 // pred_check_branch
          %186 = sbr.rel (%p184) target = $region16
        $region15: #{preact_bottleneck_pallas.7} parent=11 // pred_region
          _
        $region16: #{preact_bottleneck_pallas.7} parent=11 // pred_fallthru
          _
        // Predicated region
        $region17: #{preact_bottleneck_pallas.7} parent=11 // pred_check
          %p187 = pneg %p80
        $region18: #{preact_bottleneck_pallas.7} parent=11 // pred_check_branch
          %189 = sbr.rel (%p187) target = $region20
        $region19: #{preact_bottleneck_pallas.7} parent=11 // pred_region
          _
        $region20: #{preact_bottleneck_pallas.7} parent=11 // pred_fallthru
          _
        // Predicated region
        $region21: #{preact_bottleneck_pallas.7} parent=11 // pred_check
          %p190 = pneg %p101
        $region22: #{preact_bottleneck_pallas.7} parent=11 // pred_check_branch
          %192 = sbr.rel (%p190) target = $region24
        $region23: #{preact_bottleneck_pallas.7} parent=11 // pred_region
          _
        $region24: #{preact_bottleneck_pallas.7} parent=11 // pred_fallthru
          _
        // Predicated region
        $region25: #{preact_bottleneck_pallas.7} parent=11 // pred_check
          %p193 = pneg %p122
        $region26: #{preact_bottleneck_pallas.7} parent=11 // pred_check_branch
          %195 = sbr.rel (%p193) target = $region28
        $region27: #{preact_bottleneck_pallas.7} parent=11 // pred_region
          _
        $region28: #{preact_bottleneck_pallas.7} parent=11 // pred_fallthru
          _
        // Predicated region
        $region29: #{preact_bottleneck_pallas.7} parent=11 // pred_check
          %p196 = pneg %p143
        $region30: #{preact_bottleneck_pallas.7} parent=11 // pred_check_branch
          %198 = sbr.rel (%p196) target = $region32
        $region31: #{preact_bottleneck_pallas.7} parent=11 // pred_region
          _
        $region32: #{preact_bottleneck_pallas.7} parent=11 // pred_fallthru
          _
      $region12: #{preact_bottleneck_pallas.7} parent=5 // pred_fallthru
        _
      %p199 = scmp.lt.s32.totalorder %s12, 2
      // Predicated region
      $region33: #{preact_bottleneck_pallas.7} parent=5 // pred_check
        %p200 = pneg %p199
      $region34: #{preact_bottleneck_pallas.7} parent=5 // pred_check_branch
        %202 = sbr.rel (%p200) target = $region36
      $region35: #{preact_bottleneck_pallas.7} parent=5 // pred_region
        // Predicated region
        $region37: #{preact_bottleneck_pallas.7} parent=35 // pred_check
          %p203 = pneg %p32
        $region38: #{preact_bottleneck_pallas.7} parent=35 // pred_check_branch
          %205 = sbr.rel (%p203) target = $region40
        $region39: #{preact_bottleneck_pallas.7} parent=35 // pred_region
          %s206 = sand.u32 %s22, 1
          %s207 = sand.u32 %s22, 1
          %s208 = smul.addr %s207, 64
          %s209 = scalar_lea.vmem [#allocation2], %s208
          %s210 = smul.addr %s12, 32
          %s211 = smul.addr %s210, 8
          %s212 = scalar_lea.vmem %s0, %s211
          // Predicated region
          $region41: #{preact_bottleneck_pallas.7} parent=39 // pred_check
            _
          $region42: #{preact_bottleneck_pallas.7} parent=39 // pred_check_branch
            %214 = sbr.rel (0) target = $region44
          $region43: #{preact_bottleneck_pallas.7} parent=39 // pred_region
            // Predicated region
            $region45: #{preact_bottleneck_pallas.7} parent=43 // pred_check
              _
            $region46: #{preact_bottleneck_pallas.7} parent=43 // pred_check_branch
              %216 = sbr.rel (0) target = $region48
            $region47: #{preact_bottleneck_pallas.7} parent=43 // pred_region
              // Predicated region
              $region60: #{preact_bottleneck_pallas.7} parent=47 // pred_check
                _
              $region61: #{preact_bottleneck_pallas.7} parent=47 // pred_check_branch
                %246 = sbr.rel (0) target = $region63
              $region62: #{preact_bottleneck_pallas.7} parent=47 // pred_region
                loop: start=0, step=1, limit=1
                $region64: #{preact_bottleneck_pallas.7} parent=62 // loop_pre_header
                  _
                $region65: #{preact_bottleneck_pallas.7} parent=62 // loop_header
                  %s248 = sphi 0, %s252
                  %p249 = scmp.ge.s32.totalorder %s248, 1
                  %s253 = sphi %s212, %s212
                  %s254 = sphi %s209, %s209
                $region66: #{preact_bottleneck_pallas.7} parent=62 // loop_header_branch
                  %251 = sbr.rel (%p249) target = $region70
                $region67: #{preact_bottleneck_pallas.7} parent=62 // loop_body
                  %v255 = vld [vmem:[%s253] sm:$0xff]
                  %256 = vst [vmem:[%s254] sm:$0xff] %v255
                  %v257 = vld [vmem:[%s253 + $0x20] sm:$0xff]
                  %258 = vst [vmem:[%s254 + $0x8] sm:$0xff] %v257
                  %v259 = vld [vmem:[%s253 + $0x40] sm:$0xff]
                  %260 = vst [vmem:[%s254 + $0x10] sm:$0xff] %v259
                  %v261 = vld [vmem:[%s253 + $0x60] sm:$0xff]
                  %262 = vst [vmem:[%s254 + $0x18] sm:$0xff] %v261
                  %v263 = vld [vmem:[%s253 + $0x80] sm:$0xff]
                  %264 = vst [vmem:[%s254 + $0x20] sm:$0xff] %v263
                  %v265 = vld [vmem:[%s253 + $0xa0] sm:$0xff]
                  %266 = vst [vmem:[%s254 + $0x28] sm:$0xff] %v265
                  %v267 = vld [vmem:[%s253 + $0xc0] sm:$0xff]
                  %268 = vst [vmem:[%s254 + $0x30] sm:$0xff] %v267
                  %v269 = vld [vmem:[%s253 + $0xe0] sm:$0xff]
                  %270 = vst [vmem:[%s254 + $0x38] sm:$0xff] %v269
                $region68: #{preact_bottleneck_pallas.7} parent=62 // loop_footer
                  %s252 = sadd.s32 1, %s248
                $region69: #{preact_bottleneck_pallas.7} parent=62 // loop_footer_branch
                  %247 = sbr.rel target = $region65
                $region70: #{preact_bottleneck_pallas.7} parent=62 // loop_exit
                  _
              $region63: #{preact_bottleneck_pallas.7} parent=47 // pred_fallthru
                _
              // Predicated region
              $region71: #{preact_bottleneck_pallas.7} parent=47 // pred_check
                _
              $region72: #{preact_bottleneck_pallas.7} parent=47 // pred_check_branch
                %272 = sbr.rel target = $region74
              $region73: #{preact_bottleneck_pallas.7} parent=47 // pred_region
                _
              $region74: #{preact_bottleneck_pallas.7} parent=47 // pred_fallthru
                _
            $region48: #{preact_bottleneck_pallas.7} parent=43 // pred_fallthru
              _
            // Predicated region
            $region49: #{preact_bottleneck_pallas.7} parent=43 // pred_check
              _
            $region50: #{preact_bottleneck_pallas.7} parent=43 // pred_check_branch
              %218 = sbr.rel target = $region52
            $region51: #{preact_bottleneck_pallas.7} parent=43 // pred_region
              %s220 = ssub.s32 256, 1
              loop: start=0, step=1, limit=1
              $region53: #{preact_bottleneck_pallas.7} parent=51 // loop_pre_header
                _
              $region54: #{preact_bottleneck_pallas.7} parent=51 // loop_header
                %s222 = sphi 0, %s226
                %p223 = scmp.ge.s32.totalorder %s222, 1
                %s227 = sphi %s212, %s212
                %s228 = sphi %s209, %s209
              $region55: #{preact_bottleneck_pallas.7} parent=51 // loop_header_branch
                %225 = sbr.rel (%p223) target = $region59
              $region56: #{preact_bottleneck_pallas.7} parent=51 // loop_body
                %v229 = vld [vmem:[%s227] sm:%s220]
                %230 = vst [vmem:[%s228] sm:%s220] %v229
                %v231 = vld [vmem:[%s227 + $0x20] sm:%s220]
                %232 = vst [vmem:[%s228 + $0x8] sm:%s220] %v231
                %v233 = vld [vmem:[%s227 + $0x40] sm:%s220]
                %234 = vst [vmem:[%s228 + $0x10] sm:%s220] %v233
                %v235 = vld [vmem:[%s227 + $0x60] sm:%s220]
                %236 = vst [vmem:[%s228 + $0x18] sm:%s220] %v235
                %v237 = vld [vmem:[%s227 + $0x80] sm:%s220]
                %238 = vst [vmem:[%s228 + $0x20] sm:%s220] %v237
                %v239 = vld [vmem:[%s227 + $0xa0] sm:%s220]
                %240 = vst [vmem:[%s228 + $0x28] sm:%s220] %v239
                %v241 = vld [vmem:[%s227 + $0xc0] sm:%s220]
                %242 = vst [vmem:[%s228 + $0x30] sm:%s220] %v241
                %v243 = vld [vmem:[%s227 + $0xe0] sm:%s220]
                %244 = vst [vmem:[%s228 + $0x38] sm:%s220] %v243
              $region57: #{preact_bottleneck_pallas.7} parent=51 // loop_footer
                %s226 = sadd.s32 1, %s222
              $region58: #{preact_bottleneck_pallas.7} parent=51 // loop_footer_branch
                %221 = sbr.rel target = $region54
              $region59: #{preact_bottleneck_pallas.7} parent=51 // loop_exit
                _
            $region52: #{preact_bottleneck_pallas.7} parent=43 // pred_fallthru
              _
          $region44: #{preact_bottleneck_pallas.7} parent=39 // pred_fallthru
            _
          %273 = vnop
        $region40: #{preact_bottleneck_pallas.7} parent=35 // pred_fallthru
          _
      $region36: #{preact_bottleneck_pallas.7} parent=5 // pred_fallthru
        _
      %p274 = scmp.le.s32.totalorder 1, %s12
      %p275 = scmp.lt.s32.totalorder %s12, 3
      %p276 = pnand %p274, %p275
      %p277 = pneg %p276
      // Predicated region
      $region75: #{preact_bottleneck_pallas.7} parent=5 // pred_check
        _
      $region76: #{preact_bottleneck_pallas.7} parent=5 // pred_check_branch
        %279 = sbr.rel (%p276) target = $region78
      $region77: #{preact_bottleneck_pallas.7} parent=5 // pred_region
        %s280 = ssub.s32 %s12, 1
        %s281 = sand.u32 %s25, 1
        %s282 = sand.u32 %s25, 1
        %s283 = smul.addr %s282, 64
        %s284 = scalar_lea.vmem [#allocation2], %s283
        // Predicated region
        $region79: #{preact_bottleneck_pallas.7} parent=77 // pred_check
          %p285 = pneg %p38
        $region80: #{preact_bottleneck_pallas.7} parent=77 // pred_check_branch
          %287 = sbr.rel (%p285) target = $region82
        $region81: #{preact_bottleneck_pallas.7} parent=77 // pred_region
          _
        $region82: #{preact_bottleneck_pallas.7} parent=77 // pred_fallthru
          _
        %s288 = sand.u32 %s25, 1
        %s289 = sand.u32 %s25, 1
        %s290 = smul.addr %s289, 64
        %s291 = scalar_lea.vmem [#allocation2], %s290
        %p292 = pneg %p38
        %p293 = pneg %p35
        %p294 = pneg %p59
        %p295 = pneg %p56
        %p296 = pneg %p80
        %p297 = pneg %p77
        %p298 = pneg %p101
        %p299 = pneg %p98
        %p300 = pneg %p122
        %p301 = pneg %p119
        %p302 = pneg %p143
        %p303 = pneg %p140
        %p304 = pneg %p169
        %p305 = pneg %p166
        %p306 = scmp.lt.s32.totalorder %s17, 1
        %s307 = scalar_select %p306, %s17, 1
        %s308 = smul.addr %s307, 8
        %s309 = smul.addr %s308, 8
        %s310 = scalar_lea.vmem %s6, %s309
        %p311 = scmp.lt.s32.totalorder %s17, 1
        %s312 = scalar_select %p311, %s17, 1
        %s313 = smul.addr %s312, 8
        %s314 = smul.addr %s313, 8
        %s315 = scalar_lea.vmem %s6, %s314
        %v316 = vld [vmem:[%s2] sm:$0x1]
        %v317 = vld [vmem:[%s3] sm:$0x1]
        %v318 = vmul.f32 %v316, %v317
        %v319 = vld [vmem:[%s4] sm:$0x1]
        %v320 = vld [vmem:[%s1] sm:$0x1]
        %v321 = vmul.f32 %v320, %v318
        %v322 = vsub.f32 %v319, %v321
        %v323 = vld [vmem:[%s284] sm:$0xff]
        %v324 = vld [vmem:[%s284 + $0x8] sm:$0xff]
        %v325 = vld [vmem:[%s284 + $0x10] sm:$0xff]
        %v326 = vld [vmem:[%s284 + $0x18] sm:$0xff]
        %v327 = vld [vmem:[%s284 + $0x20] sm:$0xff]
        %v328 = vld [vmem:[%s284 + $0x28] sm:$0xff]
        %v329 = vld [vmem:[%s284 + $0x30] sm:$0xff]
        %v330 = vld [vmem:[%s284 + $0x38] sm:$0xff]
        %v332 = vperm.slane %v318, 0
        %v334 = vmul.f32 %v323, %v332
        %v335 = vmul.f32 %v324, %v332
        %v336 = vmul.f32 %v325, %v332
        %v337 = vmul.f32 %v326, %v332
        %v338 = vmul.f32 %v327, %v332
        %v339 = vmul.f32 %v328, %v332
        %v340 = vmul.f32 %v329, %v332
        %v341 = vmul.f32 %v330, %v332
        %v343 = vperm.slane %v322, 0
        %v345 = vadd.f32 %v334, %v343
        %v346 = vadd.f32 %v335, %v343
        %v347 = vadd.f32 %v336, %v343
        %v348 = vadd.f32 %v337, %v343
        %v349 = vadd.f32 %v338, %v343
        %v350 = vadd.f32 %v339, %v343
        %v351 = vadd.f32 %v340, %v343
        %v352 = vadd.f32 %v341, %v343
        %v353 = vmax.f32 %v345, 0.0
        %v354 = vmax.f32 %v346, 0.0
        %v355 = vmax.f32 %v347, 0.0
        %v356 = vmax.f32 %v348, 0.0
        %v357 = vmax.f32 %v349, 0.0
        %v358 = vmax.f32 %v350, 0.0
        %v359 = vmax.f32 %v351, 0.0
        %v360 = vmax.f32 %v352, 0.0
        %v361 = vpack.c.bf16 %v354, %v353
        %v362 = vpack.c.bf16 %v356, %v355
        %v363 = vpack.c.bf16 %v358, %v357
        %v364 = vpack.c.bf16 %v360, %v359
        %v365 = vld [vmem:[%s5] sm:$0xf]
        %v366 = vld [vmem:[%s5 + $0x4] sm:$0xf]
        %v367 = vld [vmem:[%s5 + $0x8] sm:$0xf]
        %v368 = vld [vmem:[%s5 + $0xc] sm:$0xf]
        %v369 = vld [vmem:[%s5 + $0x10] sm:$0xf]
        %v370 = vld [vmem:[%s5 + $0x14] sm:$0xf]
        %v371 = vld [vmem:[%s5 + $0x18] sm:$0xf]
        %v372 = vld [vmem:[%s5 + $0x1c] sm:$0xf]
        %v373 = vld [vmem:[%s5 + $0x20] sm:$0xf]
        %v374 = vld [vmem:[%s5 + $0x24] sm:$0xf]
        %v375 = vld [vmem:[%s5 + $0x28] sm:$0xf]
        %v376 = vld [vmem:[%s5 + $0x2c] sm:$0xf]
        %v377 = vld [vmem:[%s5 + $0x30] sm:$0xf]
        %v378 = vld [vmem:[%s5 + $0x34] sm:$0xf]
        %v379 = vld [vmem:[%s5 + $0x38] sm:$0xf]
        %v380 = vld [vmem:[%s5 + $0x3c] sm:$0xf]
        %v397 = vunpack.c.l.b16 %v365
        %v398 = vunpack.c.l.b16 %v366
        %v399 = vunpack.c.l.b16 %v367
        %v400 = vunpack.c.l.b16 %v368
        %v401 = vunpack.c.l.b16 %v369
        %v402 = vunpack.c.l.b16 %v370
        %v403 = vunpack.c.l.b16 %v371
        %v404 = vunpack.c.l.b16 %v372
        %v405 = vunpack.c.l.b16 %v373
        %v406 = vunpack.c.l.b16 %v374
        %v407 = vunpack.c.l.b16 %v375
        %v408 = vunpack.c.l.b16 %v376
        %v409 = vunpack.c.l.b16 %v377
        %v410 = vunpack.c.l.b16 %v378
        %v411 = vunpack.c.l.b16 %v379
        %v412 = vunpack.c.l.b16 %v380
        %v413 = vpack.c.b16 %v398, %v397
        %v414 = vpack.c.b16 %v400, %v399
        %v415 = vpack.c.b16 %v402, %v401
        %v416 = vpack.c.b16 %v404, %v403
        %v417 = vpack.c.b16 %v406, %v405
        %v418 = vpack.c.b16 %v408, %v407
        %v419 = vpack.c.b16 %v410, %v409
        %v420 = vpack.c.b16 %v412, %v411
        %429 = vmatpush.bf16.msra.mxu0 %v420
        %430 = vmatpush.bf16.msra.mxu0 %v419
        %431 = vmatpush.bf16.msra.mxu0 %v418
        %432 = vmatpush.bf16.msra.mxu0 %v417
        %433 = vmatpush.bf16.msra.mxu0 %v416
        %434 = vmatpush.bf16.msra.mxu0 %v415
        %435 = vmatpush.bf16.msra.mxu0 %v414
        %436 = vmatpush.bf16.msra.mxu0 %v413
        %437 = vmatmul.bf16.gmra.mxu0 %v361
        %v438 = vpop.f32.mrf.mxu0
        %v439 = vadd.f32 0.0, %v438
        %v440 = vpop.f32.mrf.mxu0
        %v441 = vadd.f32 0.0, %v440
        %442 = vmatmul.bf16.gmra.mxu0 %v362
        %v443 = vpop.f32.mrf.mxu0
        %v444 = vadd.f32 0.0, %v443
        %v445 = vpop.f32.mrf.mxu0
        %v446 = vadd.f32 0.0, %v445
        %447 = vmatmul.bf16.gmra.mxu0 %v363
        %v448 = vpop.f32.mrf.mxu0
        %v449 = vadd.f32 0.0, %v448
        %v450 = vpop.f32.mrf.mxu0
        %v451 = vadd.f32 0.0, %v450
        %452 = vmatmul.bf16.gmra.mxu0 %v364
        %v453 = vpop.f32.mrf.mxu0
        %v454 = vadd.f32 0.0, %v453
        %v455 = vpop.f32.mrf.mxu0
        %v456 = vadd.f32 0.0, %v455
        %457 = vdwg.mxu0
        %458 = vst [vmem:[%s315] sm:$0xff] %v439
        %459 = vst [vmem:[%s315 + $0x8] sm:$0xff] %v441
        %460 = vst [vmem:[%s315 + $0x10] sm:$0xff] %v444
        %461 = vst [vmem:[%s315 + $0x18] sm:$0xff] %v446
        %462 = vst [vmem:[%s315 + $0x20] sm:$0xff] %v449
        %463 = vst [vmem:[%s315 + $0x28] sm:$0xff] %v451
        %464 = vst [vmem:[%s315 + $0x30] sm:$0xff] %v454
        %465 = vst [vmem:[%s315 + $0x38] sm:$0xff] %v456
        %p466 = scmp.lt.s32.totalorder %s17, 1
        %s467 = scalar_select %p466, %s17, 1
        %s468 = smul.addr %s467, 8
        %s469 = smul.addr %s468, 8
        %s470 = scalar_lea.vmem %s6, %s469
        // Predicated region
        $region83: #{preact_bottleneck_pallas.7} parent=77 // pred_check
          %p471 = pneg %p166
        $region84: #{preact_bottleneck_pallas.7} parent=77 // pred_check_branch
          %473 = sbr.rel (%p471) target = $region86
        $region85: #{preact_bottleneck_pallas.7} parent=77 // pred_region
          _
        $region86: #{preact_bottleneck_pallas.7} parent=77 // pred_fallthru
          _
      $region78: #{preact_bottleneck_pallas.7} parent=5 // pred_fallthru
        _
      %p474 = scmp.le.s32.totalorder 2, %s12
      // Predicated region
      $region87: #{preact_bottleneck_pallas.7} parent=5 // pred_check
        %p475 = pneg %p474
      $region88: #{preact_bottleneck_pallas.7} parent=5 // pred_check_branch
        %477 = sbr.rel (%p475) target = $region90
      $region89: #{preact_bottleneck_pallas.7} parent=5 // pred_region
        %s478 = ssub.s32 %s12, 2
        // Predicated region
        $region91: #{preact_bottleneck_pallas.7} parent=89 // pred_check
          %p479 = pneg %p172
        $region92: #{preact_bottleneck_pallas.7} parent=89 // pred_check_branch
          %481 = sbr.rel (%p479) target = $region94
        $region93: #{preact_bottleneck_pallas.7} parent=89 // pred_region
          %p482 = scmp.lt.s32.totalorder %s18, 1
          %s483 = scalar_select %p482, %s18, 1
          %s484 = smul.addr %s483, 8
          %s485 = smul.addr %s484, 8
          %s486 = scalar_lea.vmem %s6, %s485
        $region94: #{preact_bottleneck_pallas.7} parent=89 // pred_fallthru
          _
      $region90: #{preact_bottleneck_pallas.7} parent=5 // pred_fallthru
        _
    $region6: #{preact_bottleneck_pallas.7} parent=1 // loop_footer
      %s16 = sadd.s32 1, %s12
    $region7: #{preact_bottleneck_pallas.7} parent=1 // loop_footer_branch
      %11 = sbr.rel target = $region3
    $region8: #{preact_bottleneck_pallas.7} parent=1 // loop_exit
      _

// kernel: preact_bottleneck_pallas.9
$region0: #{preact_bottleneck_pallas.9}
  #allocation0 [shape = 'u32[]', space=smem, size = 0x4, offset = 0x4, fixed_abs, tag = 'smem constant byte address 0x4 - core index']
  #allocation1 [shape = 'u32[72,128]{1,0:T(1,128)}', space=vmem, size = 0x9000, scoped, tag = 'internal scratch']
  %s0 = inlined_call_operand.vmem [shape: bf16[128,128], index: 0, kind: input, shape index: {}]
  %s1 = inlined_call_operand.vmem [shape: f32[1,128], index: 1, kind: input, shape index: {}]
  %s2 = inlined_call_operand.vmem [shape: f32[1,128], index: 2, kind: input, shape index: {}]
  %s3 = inlined_call_operand.vmem [shape: f32[1,128], index: 3, kind: input, shape index: {}]
  %s4 = inlined_call_operand.vmem [shape: f32[1,128], index: 4, kind: input, shape index: {}]
  %s5 = inlined_call_operand.vmem [shape: bf16[128,128], index: 5, kind: input, shape index: {}]
  %s6 = inlined_call_operand.vmem [shape: f32[128,128], index: 6, kind: input, shape index: {}, may-alias: {6,7}]
  %s7 = inlined_call_operand.vmem [shape: f32[128,128], index: 7, kind: output, shape index: {}, may-alias: {6,7}]
  %s8 = sld [smem:[#allocation0]]
  $region38: #{preact_bottleneck_pallas.9} parent=0
    _
  %s10 = ssub.s32 1, %s8
  %s11 = scalar_select 0, %s10, %s8
  // Predicated region
  $region2: #{preact_bottleneck_pallas.9} parent=0 // pred_check
    _
  $region3: #{preact_bottleneck_pallas.9} parent=0 // pred_check_branch
    %13 = sbr.rel (0) target = $region5
  $region4: #{preact_bottleneck_pallas.9} parent=0 // pred_region
    _
  $region5: #{preact_bottleneck_pallas.9} parent=0 // pred_fallthru
    _
  // Predicated region
  $region6: #{preact_bottleneck_pallas.9} parent=0 // pred_check
    _
  $region7: #{preact_bottleneck_pallas.9} parent=0 // pred_check_branch
    %15 = sbr.rel (0) target = $region9
  $region8: #{preact_bottleneck_pallas.9} parent=0 // pred_region
    _
  $region9: #{preact_bottleneck_pallas.9} parent=0 // pred_fallthru
    _
  // Predicated region
  $region10: #{preact_bottleneck_pallas.9} parent=0 // pred_check
    _
  $region11: #{preact_bottleneck_pallas.9} parent=0 // pred_check_branch
    %17 = sbr.rel (0) target = $region13
  $region12: #{preact_bottleneck_pallas.9} parent=0 // pred_region
    _
  $region13: #{preact_bottleneck_pallas.9} parent=0 // pred_fallthru
    _
  // Predicated region
  $region14: #{preact_bottleneck_pallas.9} parent=0 // pred_check
    _
  $region15: #{preact_bottleneck_pallas.9} parent=0 // pred_check_branch
    %19 = sbr.rel (0) target = $region17
  $region16: #{preact_bottleneck_pallas.9} parent=0 // pred_region
    _
  $region17: #{preact_bottleneck_pallas.9} parent=0 // pred_fallthru
    _
  // Predicated region
  $region18: #{preact_bottleneck_pallas.9} parent=0 // pred_check
    _
  $region19: #{preact_bottleneck_pallas.9} parent=0 // pred_check_branch
    %21 = sbr.rel (0) target = $region21
  $region20: #{preact_bottleneck_pallas.9} parent=0 // pred_region
    _
  $region21: #{preact_bottleneck_pallas.9} parent=0 // pred_fallthru
    _
  // Predicated region
  $region22: #{preact_bottleneck_pallas.9} parent=0 // pred_check
    _
  $region23: #{preact_bottleneck_pallas.9} parent=0 // pred_check_branch
    %23 = sbr.rel (0) target = $region25
  $region24: #{preact_bottleneck_pallas.9} parent=0 // pred_region
    _
  $region25: #{preact_bottleneck_pallas.9} parent=0 // pred_fallthru
    _
  // Predicated region
  $region26: #{preact_bottleneck_pallas.9} parent=0 // pred_check
    _
  $region27: #{preact_bottleneck_pallas.9} parent=0 // pred_check_branch
    %25 = sbr.rel (0) target = $region29
  $region28: #{preact_bottleneck_pallas.9} parent=0 // pred_region
    _
  $region29: #{preact_bottleneck_pallas.9} parent=0 // pred_fallthru
    _
  %v26 = vld [vmem:[%s2] sm:$0x1]
  %v27 = vld [vmem:[%s3] sm:$0x1]
  %v28 = vmul.f32 %v26, %v27
  %v29 = vld [vmem:[%s4] sm:$0x1]
  %v30 = vld [vmem:[%s1] sm:$0x1]
  %v31 = vmul.f32 %v30, %v28
  %v32 = vsub.f32 %v29, %v31
  %v33 = vld [vmem:[%s0] sm:$0xf]
  %v34 = vld [vmem:[%s0 + $0x4] sm:$0xf]
  %v35 = vld [vmem:[%s0 + $0x8] sm:$0xf]
  %v36 = vld [vmem:[%s0 + $0xc] sm:$0xf]
  %v37 = vld [vmem:[%s0 + $0x10] sm:$0xf]
  %v38 = vld [vmem:[%s0 + $0x14] sm:$0xf]
  %v39 = vld [vmem:[%s0 + $0x18] sm:$0xf]
  %v40 = vld [vmem:[%s0 + $0x1c] sm:$0xf]
  %v41 = vld [vmem:[%s0 + $0x20] sm:$0xf]
  %v42 = vld [vmem:[%s0 + $0x24] sm:$0xf]
  %v43 = vld [vmem:[%s0 + $0x28] sm:$0xf]
  %v44 = vld [vmem:[%s0 + $0x2c] sm:$0xf]
  %v45 = vld [vmem:[%s0 + $0x30] sm:$0xf]
  %v46 = vld [vmem:[%s0 + $0x34] sm:$0xf]
  %v47 = vld [vmem:[%s0 + $0x38] sm:$0xf]
  %v48 = vld [vmem:[%s0 + $0x3c] sm:$0xf]
  %v49 = vunpack.c.l.bf16 %v33
  %v50 = vunpack.c.l.bf16 %v34
  %v51 = vunpack.c.l.bf16 %v35
  %v52 = vunpack.c.l.bf16 %v36
  %v53 = vunpack.c.l.bf16 %v37
  %v54 = vunpack.c.l.bf16 %v38
  %v55 = vunpack.c.l.bf16 %v39
  %v56 = vunpack.c.l.bf16 %v40
  %v57 = vunpack.c.l.bf16 %v41
  %v58 = vunpack.c.l.bf16 %v42
  %v59 = vunpack.c.l.bf16 %v43
  %v60 = vunpack.c.l.bf16 %v44
  %v61 = vunpack.c.l.bf16 %v45
  %v62 = vunpack.c.l.bf16 %v46
  %v63 = vunpack.c.l.bf16 %v47
  %v64 = vunpack.c.l.bf16 %v48
  %v66 = vperm.slane %v28, 0
  %v68 = vmul.f32 %v49, %v66
  %v69 = vmul.f32 %v50, %v66
  %v70 = vmul.f32 %v51, %v66
  %v71 = vmul.f32 %v52, %v66
  %v72 = vmul.f32 %v53, %v66
  %v73 = vmul.f32 %v54, %v66
  %v74 = vmul.f32 %v55, %v66
  %v75 = vmul.f32 %v56, %v66
  %v76 = vmul.f32 %v57, %v66
  %v77 = vmul.f32 %v58, %v66
  %v78 = vmul.f32 %v59, %v66
  %v79 = vmul.f32 %v60, %v66
  %v80 = vmul.f32 %v61, %v66
  %v81 = vmul.f32 %v62, %v66
  %v82 = vmul.f32 %v63, %v66
  %v83 = vmul.f32 %v64, %v66
  %v85 = vperm.slane %v32, 0
  %v87 = vadd.f32 %v68, %v85
  %v88 = vadd.f32 %v69, %v85
  %v89 = vadd.f32 %v70, %v85
  %v90 = vadd.f32 %v71, %v85
  %v91 = vadd.f32 %v72, %v85
  %v92 = vadd.f32 %v73, %v85
  %v93 = vadd.f32 %v74, %v85
  %v94 = vadd.f32 %v75, %v85
  %v95 = vadd.f32 %v76, %v85
  %v96 = vadd.f32 %v77, %v85
  %v97 = vadd.f32 %v78, %v85
  %v98 = vadd.f32 %v79, %v85
  %v99 = vadd.f32 %v80, %v85
  %v100 = vadd.f32 %v81, %v85
  %v101 = vadd.f32 %v82, %v85
  %v102 = vadd.f32 %v83, %v85
  %v103 = vmax.f32 %v87, 0.0
  %v104 = vmax.f32 %v88, 0.0
  %v105 = vmax.f32 %v89, 0.0
  %v106 = vmax.f32 %v90, 0.0
  %v107 = vmax.f32 %v91, 0.0
  %v108 = vmax.f32 %v92, 0.0
  %v109 = vmax.f32 %v93, 0.0
  %v110 = vmax.f32 %v94, 0.0
  %v111 = vmax.f32 %v95, 0.0
  %v112 = vmax.f32 %v96, 0.0
  %v113 = vmax.f32 %v97, 0.0
  %v114 = vmax.f32 %v98, 0.0
  %v115 = vmax.f32 %v99, 0.0
  %v116 = vmax.f32 %v100, 0.0
  %v117 = vmax.f32 %v101, 0.0
  %v118 = vmax.f32 %v102, 0.0
  %v119 = vpack.c.bf16 %v104, %v103
  %v120 = vpack.c.bf16 %v106, %v105
  %v121 = vpack.c.bf16 %v108, %v107
  %v122 = vpack.c.bf16 %v110, %v109
  %v123 = vpack.c.bf16 %v112, %v111
  %v124 = vpack.c.bf16 %v114, %v113
  %v125 = vpack.c.bf16 %v116, %v115
  %v126 = vpack.c.bf16 %v118, %v117
  %v127 = vld [vmem:[%s5] sm:$0xf]
  %v128 = vld [vmem:[%s5 + $0x4] sm:$0xf]
  %v129 = vld [vmem:[%s5 + $0x8] sm:$0xf]
  %v130 = vld [vmem:[%s5 + $0xc] sm:$0xf]
  %v131 = vld [vmem:[%s5 + $0x10] sm:$0xf]
  %v132 = vld [vmem:[%s5 + $0x14] sm:$0xf]
  %v133 = vld [vmem:[%s5 + $0x18] sm:$0xf]
  %v134 = vld [vmem:[%s5 + $0x1c] sm:$0xf]
  %v135 = vld [vmem:[%s5 + $0x20] sm:$0xf]
  %v136 = vld [vmem:[%s5 + $0x24] sm:$0xf]
  %v137 = vld [vmem:[%s5 + $0x28] sm:$0xf]
  %v138 = vld [vmem:[%s5 + $0x2c] sm:$0xf]
  %v139 = vld [vmem:[%s5 + $0x30] sm:$0xf]
  %v140 = vld [vmem:[%s5 + $0x34] sm:$0xf]
  %v141 = vld [vmem:[%s5 + $0x38] sm:$0xf]
  %v142 = vld [vmem:[%s5 + $0x3c] sm:$0xf]
  %v143 = vld [vmem:[%s6] sm:$0xff]
  %v144 = vld [vmem:[%s6 + $0x8] sm:$0xff]
  %v145 = vld [vmem:[%s6 + $0x10] sm:$0xff]
  %v146 = vld [vmem:[%s6 + $0x18] sm:$0xff]
  %v147 = vld [vmem:[%s6 + $0x20] sm:$0xff]
  %v148 = vld [vmem:[%s6 + $0x28] sm:$0xff]
  %v149 = vld [vmem:[%s6 + $0x30] sm:$0xff]
  %v150 = vld [vmem:[%s6 + $0x38] sm:$0xff]
  %v151 = vld [vmem:[%s6 + $0x40] sm:$0xff]
  %v152 = vld [vmem:[%s6 + $0x48] sm:$0xff]
  %v153 = vld [vmem:[%s6 + $0x50] sm:$0xff]
  %v154 = vld [vmem:[%s6 + $0x58] sm:$0xff]
  %v155 = vld [vmem:[%s6 + $0x60] sm:$0xff]
  %v156 = vld [vmem:[%s6 + $0x68] sm:$0xff]
  %v157 = vld [vmem:[%s6 + $0x70] sm:$0xff]
  %v158 = vld [vmem:[%s6 + $0x78] sm:$0xff]
  %v175 = vunpack.c.l.b16 %v127
  %v176 = vunpack.c.l.b16 %v128
  %v177 = vunpack.c.l.b16 %v129
  %v178 = vunpack.c.l.b16 %v130
  %v179 = vunpack.c.l.b16 %v131
  %v180 = vunpack.c.l.b16 %v132
  %v181 = vunpack.c.l.b16 %v133
  %v182 = vunpack.c.l.b16 %v134
  %v183 = vunpack.c.l.b16 %v135
  %v184 = vunpack.c.l.b16 %v136
  %v185 = vunpack.c.l.b16 %v137
  %v186 = vunpack.c.l.b16 %v138
  %v187 = vunpack.c.l.b16 %v139
  %v188 = vunpack.c.l.b16 %v140
  %v189 = vunpack.c.l.b16 %v141
  %v190 = vunpack.c.l.b16 %v142
  %v191 = vpack.c.b16 %v176, %v175
  %v192 = vpack.c.b16 %v178, %v177
  %v193 = vpack.c.b16 %v180, %v179
  %v194 = vpack.c.b16 %v182, %v181
  %v195 = vpack.c.b16 %v184, %v183
  %v196 = vpack.c.b16 %v186, %v185
  %v197 = vpack.c.b16 %v188, %v187
  %v198 = vpack.c.b16 %v190, %v189
  %207 = vmatpush.bf16.msra.mxu0 %v198
  %208 = vmatpush.bf16.msra.mxu0 %v197
  %209 = vmatpush.bf16.msra.mxu0 %v196
  %210 = vmatpush.bf16.msra.mxu0 %v195
  %211 = vmatpush.bf16.msra.mxu0 %v194
  %212 = vmatpush.bf16.msra.mxu0 %v193
  %213 = vmatpush.bf16.msra.mxu0 %v192
  %214 = vmatpush.bf16.msra.mxu0 %v191
  %215 = vmatmul.bf16.gmra.mxu0 %v119
  %v216 = vpop.f32.mrf.mxu0
  %v217 = vadd.f32 %v143, %v216
  %v218 = vpop.f32.mrf.mxu0
  %v219 = vadd.f32 %v144, %v218
  %220 = vmatmul.bf16.gmra.mxu0 %v120
  %v221 = vpop.f32.mrf.mxu0
  %v222 = vadd.f32 %v145, %v221
  %v223 = vpop.f32.mrf.mxu0
  %v224 = vadd.f32 %v146, %v223
  %225 = vmatmul.bf16.gmra.mxu0 %v121
  %v226 = vpop.f32.mrf.mxu0
  %v227 = vadd.f32 %v147, %v226
  %v228 = vpop.f32.mrf.mxu0
  %v229 = vadd.f32 %v148, %v228
  %230 = vmatmul.bf16.gmra.mxu0 %v122
  %v231 = vpop.f32.mrf.mxu0
  %v232 = vadd.f32 %v149, %v231
  %v233 = vpop.f32.mrf.mxu0
  %v234 = vadd.f32 %v150, %v233
  %235 = vmatmul.bf16.gmra.mxu0 %v123
  %v236 = vpop.f32.mrf.mxu0
  %v237 = vadd.f32 %v151, %v236
  %v238 = vpop.f32.mrf.mxu0
  %v239 = vadd.f32 %v152, %v238
  %240 = vmatmul.bf16.gmra.mxu0 %v124
  %v241 = vpop.f32.mrf.mxu0
  %v242 = vadd.f32 %v153, %v241
  %v243 = vpop.f32.mrf.mxu0
  %v244 = vadd.f32 %v154, %v243
  %245 = vmatmul.bf16.gmra.mxu0 %v125
  %v246 = vpop.f32.mrf.mxu0
  %v247 = vadd.f32 %v155, %v246
  %v248 = vpop.f32.mrf.mxu0
  %v249 = vadd.f32 %v156, %v248
  %250 = vmatmul.bf16.gmra.mxu0 %v126
  %v251 = vpop.f32.mrf.mxu0
  %v252 = vadd.f32 %v157, %v251
  %v253 = vpop.f32.mrf.mxu0
  %v254 = vadd.f32 %v158, %v253
  %255 = vdwg.mxu0
  %256 = vst [vmem:[%s7] sm:$0xff] %v217
  %257 = vst [vmem:[%s7 + $0x8] sm:$0xff] %v219
  %258 = vst [vmem:[%s7 + $0x10] sm:$0xff] %v222
  %259 = vst [vmem:[%s7 + $0x18] sm:$0xff] %v224
  %260 = vst [vmem:[%s7 + $0x20] sm:$0xff] %v227
  %261 = vst [vmem:[%s7 + $0x28] sm:$0xff] %v229
  %262 = vst [vmem:[%s7 + $0x30] sm:$0xff] %v232
  %263 = vst [vmem:[%s7 + $0x38] sm:$0xff] %v234
  %264 = vst [vmem:[%s7 + $0x40] sm:$0xff] %v237
  %265 = vst [vmem:[%s7 + $0x48] sm:$0xff] %v239
  %266 = vst [vmem:[%s7 + $0x50] sm:$0xff] %v242
  %267 = vst [vmem:[%s7 + $0x58] sm:$0xff] %v244
  %268 = vst [vmem:[%s7 + $0x60] sm:$0xff] %v247
  %269 = vst [vmem:[%s7 + $0x68] sm:$0xff] %v249
  %270 = vst [vmem:[%s7 + $0x70] sm:$0xff] %v252
  %271 = vst [vmem:[%s7 + $0x78] sm:$0xff] %v254
  // Predicated region
  $region30: #{preact_bottleneck_pallas.9} parent=0 // pred_check
    _
  $region31: #{preact_bottleneck_pallas.9} parent=0 // pred_check_branch
    %273 = sbr.rel (0) target = $region33
  $region32: #{preact_bottleneck_pallas.9} parent=0 // pred_region
    _
  $region33: #{preact_bottleneck_pallas.9} parent=0 // pred_fallthru
    _
  // Predicated region
  $region34: #{preact_bottleneck_pallas.9} parent=0 // pred_check
    _
  $region35: #{preact_bottleneck_pallas.9} parent=0 // pred_check_branch
    %275 = sbr.rel (0) target = $region37
  $region36: #{preact_bottleneck_pallas.9} parent=0 // pred_region
    _
  $region37: #{preact_bottleneck_pallas.9} parent=0 // pred_fallthru
    _

// kernel: preact_bottleneck_pallas.8
$region0: #{preact_bottleneck_pallas.8}
  #allocation0 [shape = 'u32[]', space=smem, size = 0x4, offset = 0x4, fixed_abs, tag = 'smem constant byte address 0x4 - core index']
  #allocation1 [shape = 'u32[72,128]{1,0:T(1,128)}', space=vmem, size = 0x9000, scoped, tag = 'internal scratch']
  #allocation2 [shape = 'bf16[36,16,128]{2,1,0:T(8,128)(2,1)}', space=vmem, size = 0x24000, scoped, tag = 'scratch operand']
  %s0 = inlined_call_operand.vmem [shape: bf16[2,36,16,128], index: 0, kind: input, shape index: {}]
  %s1 = inlined_call_operand.vmem [shape: f32[36,16,1], index: 1, kind: input, shape index: {}]
  %s2 = inlined_call_operand.vmem [shape: f32[1,128], index: 2, kind: input, shape index: {}]
  %s3 = inlined_call_operand.vmem [shape: f32[1,128], index: 3, kind: input, shape index: {}]
  %s4 = inlined_call_operand.vmem [shape: f32[1,128], index: 4, kind: input, shape index: {}]
  %s5 = inlined_call_operand.vmem [shape: f32[1,128], index: 5, kind: input, shape index: {}]
  %s6 = inlined_call_operand.vmem [shape: bf16[1152,128], index: 6, kind: input, shape index: {}]
  %s7 = inlined_call_operand.vmem [shape: bf16[2,64,128], index: 7, kind: output, shape index: {0}]
  %s8 = inlined_call_operand.vmem [shape: f32[2,1,128], index: 8, kind: output, shape index: {1}]
  %s9 = inlined_call_operand.vmem [shape: f32[2,1,128], index: 9, kind: output, shape index: {2}]
  %10 = xla_tuple %s7, %s8, %s9
  %s11 = sld [smem:[#allocation0]]
  $region77: #{preact_bottleneck_pallas.8} parent=0
    _
  %s13 = ssub.s32 1, %s11
  %s14 = scalar_select 0, %s13, %s11
  loop: start=0, step=1, limit=4
  $region2: #{preact_bottleneck_pallas.8} parent=0 // loop_pre_header
    _
  $region3: #{preact_bottleneck_pallas.8} parent=0 // loop_header
    %s16 = sphi 0, %s20
    %p17 = scmp.ge.s32.totalorder %s16, 4
    %s26 = sphi 0, %s28
    %s29 = sphi 0, %s26
    %s30 = sphi 0, %s29
    %s46 = sphi 0, %s30
    %s50 = sphi 0, %s50
    %s52 = sphi 0, %s50
    %s53 = sphi 0, %s52
    %s67 = sphi 0, %s53
    %s71 = sphi 0, %s71
    %s73 = sphi 0, %s71
    %s74 = sphi 0, %s73
    %s88 = sphi 0, %s74
    %s92 = sphi 0, %s92
    %s94 = sphi 0, %s92
    %s95 = sphi 0, %s94
    %s109 = sphi 0, %s95
    %s113 = sphi 0, %s113
    %s115 = sphi 0, %s113
    %s116 = sphi 0, %s115
    %s130 = sphi 0, %s116
    %s134 = sphi 0, %s134
    %s136 = sphi 0, %s134
    %s137 = sphi 0, %s136
    %s151 = sphi 0, %s137
    %s155 = sphi 0, %s155
    %s157 = sphi 0, %s155
    %s158 = sphi 0, %s157
    %s172 = sphi 0, %s158
    %s178 = sphi 0, %s180
    %s181 = sphi 0, %s178
    %s182 = sphi 0, %s181
    %s198 = sphi 0, %s182
    %s204 = sphi 0, %s206
    %s207 = sphi 0, %s204
    %s208 = sphi 0, %s207
    %s224 = sphi 0, %s208
    %s230 = sphi 0, %s232
    %s233 = sphi 0, %s230
    %s234 = sphi 0, %s233
    %s250 = sphi 0, %s234
  $region4: #{preact_bottleneck_pallas.8} parent=0 // loop_header_branch
    %19 = sbr.rel (%p17) target = $region8
  $region5: #{preact_bottleneck_pallas.8} parent=0 // loop_body
    %s21 = ssub.s32 %s16, 1
    %s22 = ssub.s32 %s16, 2
    %s23 = sadd.s32 %s16, 1
    %s24 = ssub.s32 %s16, %s23
    %p25 = scmp.eq.s32.totalorder %s24, 0
    %s27 = sadd.s32 %s26, 1
    %s28 = scalar_select %p25, %s26, %s27
    %p31 = pneg %p25
    %p32 = scmp.eq.s32.totalorder %s16, 1
    %p33 = por %p31, %p32
    %p34 = scmp.ne.s32.totalorder %s26, %s29
    %p35 = scmp.eq.s32.totalorder %s16, 0
    %p36 = por %p34, %p35
    %p37 = scmp.ne.s32.totalorder %s26, %s29
    %p38 = scmp.eq.s32.totalorder %s21, 1
    %p39 = por %p37, %p38
    %p40 = scmp.ne.s32.totalorder %s29, %s30
    %p41 = scmp.eq.s32.totalorder %s21, 0
    %p42 = por %p40, %p41
    %p43 = scmp.ne.s32.totalorder %s29, %s30
    %p44 = scmp.eq.s32.totalorder %s22, 1
    %p45 = por %p43, %p44
    %p47 = scmp.ne.s32.totalorder %s30, %s46
    %p48 = scmp.eq.s32.totalorder %s22, 0
    %p49 = por %p47, %p48
    %s51 = sadd.s32 %s50, 1
    %p54 = scmp.eq.s32.totalorder %s16, 1
    %p55 = scmp.ne.s32.totalorder %s50, %s52
    %p56 = scmp.eq.s32.totalorder %s16, 0
    %p57 = por %p55, %p56
    %p58 = scmp.ne.s32.totalorder %s50, %s52
    %p59 = scmp.eq.s32.totalorder %s21, 1
    %p60 = por %p58, %p59
    %p61 = scmp.ne.s32.totalorder %s52, %s53
    %p62 = scmp.eq.s32.totalorder %s21, 0
    %p63 = por %p61, %p62
    %p64 = scmp.ne.s32.totalorder %s52, %s53
    %p65 = scmp.eq.s32.totalorder %s22, 1
    %p66 = por %p64, %p65
    %p68 = scmp.ne.s32.totalorder %s53, %s67
    %p69 = scmp.eq.s32.totalorder %s22, 0
    %p70 = por %p68, %p69
    %s72 = sadd.s32 %s71, 1
    %p75 = scmp.eq.s32.totalorder %s16, 1
    %p76 = scmp.ne.s32.totalorder %s71, %s73
    %p77 = scmp.eq.s32.totalorder %s16, 0
    %p78 = por %p76, %p77
    %p79 = scmp.ne.s32.totalorder %s71, %s73
    %p80 = scmp.eq.s32.totalorder %s21, 1
    %p81 = por %p79, %p80
    %p82 = scmp.ne.s32.totalorder %s73, %s74
    %p83 = scmp.eq.s32.totalorder %s21, 0
    %p84 = por %p82, %p83
    %p85 = scmp.ne.s32.totalorder %s73, %s74
    %p86 = scmp.eq.s32.totalorder %s22, 1
    %p87 = por %p85, %p86
    %p89 = scmp.ne.s32.totalorder %s74, %s88
    %p90 = scmp.eq.s32.totalorder %s22, 0
    %p91 = por %p89, %p90
    %s93 = sadd.s32 %s92, 1
    %p96 = scmp.eq.s32.totalorder %s16, 1
    %p97 = scmp.ne.s32.totalorder %s92, %s94
    %p98 = scmp.eq.s32.totalorder %s16, 0
    %p99 = por %p97, %p98
    %p100 = scmp.ne.s32.totalorder %s92, %s94
    %p101 = scmp.eq.s32.totalorder %s21, 1
    %p102 = por %p100, %p101
    %p103 = scmp.ne.s32.totalorder %s94, %s95
    %p104 = scmp.eq.s32.totalorder %s21, 0
    %p105 = por %p103, %p104
    %p106 = scmp.ne.s32.totalorder %s94, %s95
    %p107 = scmp.eq.s32.totalorder %s22, 1
    %p108 = por %p106, %p107
    %p110 = scmp.ne.s32.totalorder %s95, %s109
    %p111 = scmp.eq.s32.totalorder %s22, 0
    %p112 = por %p110, %p111
    %s114 = sadd.s32 %s113, 1
    %p117 = scmp.eq.s32.totalorder %s16, 1
    %p118 = scmp.ne.s32.totalorder %s113, %s115
    %p119 = scmp.eq.s32.totalorder %s16, 0
    %p120 = por %p118, %p119
    %p121 = scmp.ne.s32.totalorder %s113, %s115
    %p122 = scmp.eq.s32.totalorder %s21, 1
    %p123 = por %p121, %p122
    %p124 = scmp.ne.s32.totalorder %s115, %s116
    %p125 = scmp.eq.s32.totalorder %s21, 0
    %p126 = por %p124, %p125
    %p127 = scmp.ne.s32.totalorder %s115, %s116
    %p128 = scmp.eq.s32.totalorder %s22, 1
    %p129 = por %p127, %p128
    %p131 = scmp.ne.s32.totalorder %s116, %s130
    %p132 = scmp.eq.s32.totalorder %s22, 0
    %p133 = por %p131, %p132
    %s135 = sadd.s32 %s134, 1
    %p138 = scmp.eq.s32.totalorder %s16, 1
    %p139 = scmp.ne.s32.totalorder %s134, %s136
    %p140 = scmp.eq.s32.totalorder %s16, 0
    %p141 = por %p139, %p140
    %p142 = scmp.ne.s32.totalorder %s134, %s136
    %p143 = scmp.eq.s32.totalorder %s21, 1
    %p144 = por %p142, %p143
    %p145 = scmp.ne.s32.totalorder %s136, %s137
    %p146 = scmp.eq.s32.totalorder %s21, 0
    %p147 = por %p145, %p146
    %p148 = scmp.ne.s32.totalorder %s136, %s137
    %p149 = scmp.eq.s32.totalorder %s22, 1
    %p150 = por %p148, %p149
    %p152 = scmp.ne.s32.totalorder %s137, %s151
    %p153 = scmp.eq.s32.totalorder %s22, 0
    %p154 = por %p152, %p153
    %s156 = sadd.s32 %s155, 1
    %p159 = scmp.eq.s32.totalorder %s16, 1
    %p160 = scmp.ne.s32.totalorder %s155, %s157
    %p161 = scmp.eq.s32.totalorder %s16, 0
    %p162 = por %p160, %p161
    %p163 = scmp.ne.s32.totalorder %s155, %s157
    %p164 = scmp.eq.s32.totalorder %s21, 1
    %p165 = por %p163, %p164
    %p166 = scmp.ne.s32.totalorder %s157, %s158
    %p167 = scmp.eq.s32.totalorder %s21, 0
    %p168 = por %p166, %p167
    %p169 = scmp.ne.s32.totalorder %s157, %s158
    %p170 = scmp.eq.s32.totalorder %s22, 1
    %p171 = por %p169, %p170
    %p173 = scmp.ne.s32.totalorder %s158, %s172
    %p174 = scmp.eq.s32.totalorder %s22, 0
    %p175 = por %p173, %p174
    %s176 = ssub.s32 %s16, %s23
    %p177 = scmp.eq.s32.totalorder %s176, 0
    %s179 = sadd.s32 %s178, 1
    %s180 = scalar_select %p177, %s178, %s179
    %p183 = pneg %p177
    %p184 = scmp.eq.s32.totalorder %s16, 1
    %p185 = por %p183, %p184
    %p186 = scmp.ne.s32.totalorder %s178, %s181
    %p187 = scmp.eq.s32.totalorder %s16, 0
    %p188 = por %p186, %p187
    %p189 = scmp.ne.s32.totalorder %s178, %s181
    %p190 = scmp.eq.s32.totalorder %s21, 1
    %p191 = por %p189, %p190
    %p192 = scmp.ne.s32.totalorder %s181, %s182
    %p193 = scmp.eq.s32.totalorder %s21, 0
    %p194 = por %p192, %p193
    %p195 = scmp.ne.s32.totalorder %s181, %s182
    %p196 = scmp.eq.s32.totalorder %s22, 1
    %p197 = por %p195, %p196
    %p199 = scmp.ne.s32.totalorder %s182, %s198
    %p200 = scmp.eq.s32.totalorder %s22, 0
    %p201 = por %p199, %p200
    %s202 = ssub.s32 %s16, %s23
    %p203 = scmp.eq.s32.totalorder %s202, 0
    %s205 = sadd.s32 %s204, 1
    %s206 = scalar_select %p203, %s204, %s205
    %p209 = pneg %p203
    %p210 = scmp.eq.s32.totalorder %s16, 1
    %p211 = por %p209, %p210
    %p212 = scmp.ne.s32.totalorder %s204, %s207
    %p213 = scmp.eq.s32.totalorder %s16, 0
    %p214 = por %p212, %p213
    %p215 = scmp.ne.s32.totalorder %s204, %s207
    %p216 = scmp.eq.s32.totalorder %s21, 1
    %p217 = por %p215, %p216
    %p218 = scmp.ne.s32.totalorder %s207, %s208
    %p219 = scmp.eq.s32.totalorder %s21, 0
    %p220 = por %p218, %p219
    %p221 = scmp.ne.s32.totalorder %s207, %s208
    %p222 = scmp.eq.s32.totalorder %s22, 1
    %p223 = por %p221, %p222
    %p225 = scmp.ne.s32.totalorder %s208, %s224
    %p226 = scmp.eq.s32.totalorder %s22, 0
    %p227 = por %p225, %p226
    %s228 = ssub.s32 %s16, %s23
    %p229 = scmp.eq.s32.totalorder %s228, 0
    %s231 = sadd.s32 %s230, 1
    %s232 = scalar_select %p229, %s230, %s231
    %p235 = pneg %p229
    %p236 = scmp.eq.s32.totalorder %s16, 1
    %p237 = por %p235, %p236
    %p238 = scmp.ne.s32.totalorder %s230, %s233
    %p239 = scmp.eq.s32.totalorder %s16, 0
    %p240 = por %p238, %p239
    %p241 = scmp.ne.s32.totalorder %s230, %s233
    %p242 = scmp.eq.s32.totalorder %s21, 1
    %p243 = por %p241, %p242
    %p244 = scmp.ne.s32.totalorder %s233, %s234
    %p245 = scmp.eq.s32.totalorder %s21, 0
    %p246 = por %p244, %p245
    %p247 = scmp.ne.s32.totalorder %s233, %s234
    %p248 = scmp.eq.s32.totalorder %s22, 1
    %p249 = por %p247, %p248
    %p251 = scmp.ne.s32.totalorder %s234, %s250
    %p252 = scmp.eq.s32.totalorder %s22, 0
    %p253 = por %p251, %p252
    %p254 = scmp.le.s32.totalorder 1, %s16
    %p255 = scmp.lt.s32.totalorder %s16, 3
    %p256 = pnand %p254, %p255
    %p257 = pneg %p256
    // Predicated region
    $region9: #{preact_bottleneck_pallas.8} parent=5 // pred_check
      _
    $region10: #{preact_bottleneck_pallas.8} parent=5 // pred_check_branch
      %259 = sbr.rel (%p256) target = $region12
    $region11: #{preact_bottleneck_pallas.8} parent=5 // pred_region
      %s260 = ssub.s32 %s16, 1
      // Predicated region
      $region13: #{preact_bottleneck_pallas.8} parent=11 // pred_check
        %p261 = pneg %p63
      $region14: #{preact_bottleneck_pallas.8} parent=11 // pred_check_branch
        %263 = sbr.rel (%p261) target = $region16
      $region15: #{preact_bottleneck_pallas.8} parent=11 // pred_region
        _
      $region16: #{preact_bottleneck_pallas.8} parent=11 // pred_fallthru
        _
      // Predicated region
      $region17: #{preact_bottleneck_pallas.8} parent=11 // pred_check
        %p264 = pneg %p84
      $region18: #{preact_bottleneck_pallas.8} parent=11 // pred_check_branch
        %266 = sbr.rel (%p264) target = $region20
      $region19: #{preact_bottleneck_pallas.8} parent=11 // pred_region
        _
      $region20: #{preact_bottleneck_pallas.8} parent=11 // pred_fallthru
        _
      // Predicated region
      $region21: #{preact_bottleneck_pallas.8} parent=11 // pred_check
        %p267 = pneg %p105
      $region22: #{preact_bottleneck_pallas.8} parent=11 // pred_check_branch
        %269 = sbr.rel (%p267) target = $region24
      $region23: #{preact_bottleneck_pallas.8} parent=11 // pred_region
        _
      $region24: #{preact_bottleneck_pallas.8} parent=11 // pred_fallthru
        _
      // Predicated region
      $region25: #{preact_bottleneck_pallas.8} parent=11 // pred_check
        %p270 = pneg %p126
      $region26: #{preact_bottleneck_pallas.8} parent=11 // pred_check_branch
        %272 = sbr.rel (%p270) target = $region28
      $region27: #{preact_bottleneck_pallas.8} parent=11 // pred_region
        _
      $region28: #{preact_bottleneck_pallas.8} parent=11 // pred_fallthru
        _
      // Predicated region
      $region29: #{preact_bottleneck_pallas.8} parent=11 // pred_check
        %p273 = pneg %p147
      $region30: #{preact_bottleneck_pallas.8} parent=11 // pred_check_branch
        %275 = sbr.rel (%p273) target = $region32
      $region31: #{preact_bottleneck_pallas.8} parent=11 // pred_region
        _
      $region32: #{preact_bottleneck_pallas.8} parent=11 // pred_fallthru
        _
      // Predicated region
      $region33: #{preact_bottleneck_pallas.8} parent=11 // pred_check
        %p276 = pneg %p168
      $region34: #{preact_bottleneck_pallas.8} parent=11 // pred_check_branch
        %278 = sbr.rel (%p276) target = $region36
      $region35: #{preact_bottleneck_pallas.8} parent=11 // pred_region
        _
      $region36: #{preact_bottleneck_pallas.8} parent=11 // pred_fallthru
        _
    $region12: #{preact_bottleneck_pallas.8} parent=5 // pred_fallthru
      _
    %p279 = scmp.lt.s32.totalorder %s16, 2
    // Predicated region
    $region37: #{preact_bottleneck_pallas.8} parent=5 // pred_check
      %p280 = pneg %p279
    $region38: #{preact_bottleneck_pallas.8} parent=5 // pred_check_branch
      %282 = sbr.rel (%p280) target = $region40
    $region39: #{preact_bottleneck_pallas.8} parent=5 // pred_region
      // Predicated region
      $region41: #{preact_bottleneck_pallas.8} parent=39 // pred_check
        %p283 = pneg %p36
      $region42: #{preact_bottleneck_pallas.8} parent=39 // pred_check_branch
        %285 = sbr.rel (%p283) target = $region44
      $region43: #{preact_bottleneck_pallas.8} parent=39 // pred_region
        %p286 = scmp.lt.s32.totalorder %s16, 1
        %s287 = scalar_select %p286, %s16, 1
        %s288 = smul.addr %s287, 72
        %s289 = smul.addr %s288, 4
        %s290 = scalar_lea.vmem %s0, %s289
      $region44: #{preact_bottleneck_pallas.8} parent=39 // pred_fallthru
        _
    $region40: #{preact_bottleneck_pallas.8} parent=5 // pred_fallthru
      _
    %p291 = scmp.le.s32.totalorder 1, %s16
    %p292 = scmp.lt.s32.totalorder %s16, 3
    %p293 = pnand %p291, %p292
    %p294 = pneg %p293
    // Predicated region
    $region45: #{preact_bottleneck_pallas.8} parent=5 // pred_check
      _
    $region46: #{preact_bottleneck_pallas.8} parent=5 // pred_check_branch
      %296 = sbr.rel (%p293) target = $region48
    $region47: #{preact_bottleneck_pallas.8} parent=5 // pred_region
      %s297 = ssub.s32 %s16, 1
      %p298 = scmp.lt.s32.totalorder %s21, 1
      %s299 = scalar_select %p298, %s21, 1
      %s300 = smul.addr %s299, 72
      %s301 = smul.addr %s300, 4
      %s302 = scalar_lea.vmem %s0, %s301
      %p303 = pneg %p42
      %p304 = pneg %p39
      %p305 = pneg %p63
      %p306 = pneg %p60
      %p307 = pneg %p84
      %p308 = pneg %p81
      %p309 = pneg %p105
      %p310 = pneg %p102
      %p311 = pneg %p126
      %p312 = pneg %p123
      %p313 = pneg %p147
      %p314 = pneg %p144
      %p315 = pneg %p168
      %p316 = pneg %p165
      %p317 = pneg %p194
      %p318 = pneg %p191
      %p319 = scmp.lt.s32.totalorder %s21, 1
      %s320 = scalar_select %p319, %s21, 1
      %s321 = smul.addr %s320, 8
      %s322 = smul.addr %s321, 4
      %s323 = scalar_lea.vmem %s7, %s322
      %p324 = pneg %p220
      %p325 = pneg %p217
      %p326 = scmp.lt.s32.totalorder %s21, 1
      %s327 = scalar_select %p326, %s21, 1
      %s328 = scalar_lea.vmem %s8, %s327
      %p329 = pneg %p246
      %p330 = pneg %p243
      %p331 = scmp.lt.s32.totalorder %s21, 1
      %s332 = scalar_select %p331, %s21, 1
      %s333 = scalar_lea.vmem %s9, %s332
      %p334 = scmp.lt.s32.totalorder %s21, 1
      %s335 = scalar_select %p334, %s21, 1
      %s336 = smul.addr %s335, 72
      %s337 = smul.addr %s336, 4
      %s338 = scalar_lea.vmem %s0, %s337
      %p339 = scmp.lt.s32.totalorder %s21, 1
      %s340 = scalar_select %p339, %s21, 1
      %s341 = smul.addr %s340, 8
      %s342 = smul.addr %s341, 4
      %s343 = scalar_lea.vmem %s7, %s342
      %p344 = scmp.lt.s32.totalorder %s21, 1
      %s345 = scalar_select %p344, %s21, 1
      %s346 = scalar_lea.vmem %s8, %s345
      %p347 = scmp.lt.s32.totalorder %s21, 1
      %s348 = scalar_select %p347, %s21, 1
      %s349 = scalar_lea.vmem %s9, %s348
      %v350 = vld [vmem:[%s3] sm:$0x1]
      %v351 = vld [vmem:[%s4] sm:$0x1]
      %v352 = vmul.f32 %v350, %v351
      %v353 = vld [vmem:[%s5] sm:$0x1]
      %v354 = vld [vmem:[%s2] sm:$0x1]
      %v355 = vmul.f32 %v354, %v352
      %v356 = vsub.f32 %v353, %v355
      %v357 = vld [vmem:[%s338] sm:$0xf]
      %v358 = vld [vmem:[%s338 + $0x4] sm:$0xf]
      %v359 = vld [vmem:[%s338 + $0x8] sm:$0xf]
      %v360 = vld [vmem:[%s338 + $0xc] sm:$0xf]
      %v361 = vld [vmem:[%s338 + $0x10] sm:$0xf]
      %v362 = vld [vmem:[%s338 + $0x14] sm:$0xf]
      %v363 = vld [vmem:[%s338 + $0x18] sm:$0xf]
      %v364 = vld [vmem:[%s338 + $0x1c] sm:$0xf]
      %v365 = vld [vmem:[%s338 + $0x20] sm:$0xf]
      %v366 = vld [vmem:[%s338 + $0x24] sm:$0xf]
      %v367 = vld [vmem:[%s338 + $0x28] sm:$0xf]
      %v368 = vld [vmem:[%s338 + $0x2c] sm:$0xf]
      %v369 = vld [vmem:[%s338 + $0x30] sm:$0xf]
      %v370 = vld [vmem:[%s338 + $0x34] sm:$0xf]
      %v371 = vld [vmem:[%s338 + $0x38] sm:$0xf]
      %v372 = vld [vmem:[%s338 + $0x3c] sm:$0xf]
      %v373 = vld [vmem:[%s338 + $0x40] sm:$0xf]
      %v374 = vld [vmem:[%s338 + $0x44] sm:$0xf]
      %v375 = vld [vmem:[%s338 + $0x48] sm:$0xf]
      %v376 = vld [vmem:[%s338 + $0x4c] sm:$0xf]
      %v377 = vld [vmem:[%s338 + $0x50] sm:$0xf]
      %v378 = vld [vmem:[%s338 + $0x54] sm:$0xf]
      %v379 = vld [vmem:[%s338 + $0x58] sm:$0xf]
      %v380 = vld [vmem:[%s338 + $0x5c] sm:$0xf]
      %v381 = vld [vmem:[%s338 + $0x60] sm:$0xf]
      %v382 = vld [vmem:[%s338 + $0x64] sm:$0xf]
      %v383 = vld [vmem:[%s338 + $0x68] sm:$0xf]
      %v384 = vld [vmem:[%s338 + $0x6c] sm:$0xf]
      %v385 = vld [vmem:[%s338 + $0x70] sm:$0xf]
      %v386 = vld [vmem:[%s338 + $0x74] sm:$0xf]
      %v387 = vld [vmem:[%s338 + $0x78] sm:$0xf]
      %v388 = vld [vmem:[%s338 + $0x7c] sm:$0xf]
      %v389 = vld [vmem:[%s338 + $0x80] sm:$0xf]
      %v390 = vld [vmem:[%s338 + $0x84] sm:$0xf]
      %v391 = vld [vmem:[%s338 + $0x88] sm:$0xf]
      %v392 = vld [vmem:[%s338 + $0x8c] sm:$0xf]
      %v393 = vld [vmem:[%s338 + $0x90] sm:$0xf]
      %v394 = vld [vmem:[%s338 + $0x94] sm:$0xf]
      %v395 = vld [vmem:[%s338 + $0x98] sm:$0xf]
      %v396 = vld [vmem:[%s338 + $0x9c] sm:$0xf]
      %v397 = vld [vmem:[%s338 + $0xa0] sm:$0xf]
      %v398 = vld [vmem:[%s338 + $0xa4] sm:$0xf]
      %v399 = vld [vmem:[%s338 + $0xa8] sm:$0xf]
      %v400 = vld [vmem:[%s338 + $0xac] sm:$0xf]
      %v401 = vld [vmem:[%s338 + $0xb0] sm:$0xf]
      %v402 = vld [vmem:[%s338 + $0xb4] sm:$0xf]
      %v403 = vld [vmem:[%s338 + $0xb8] sm:$0xf]
      %v404 = vld [vmem:[%s338 + $0xbc] sm:$0xf]
      %v405 = vld [vmem:[%s338 + $0xc0] sm:$0xf]
      %v406 = vld [vmem:[%s338 + $0xc4] sm:$0xf]
      %v407 = vld [vmem:[%s338 + $0xc8] sm:$0xf]
      %v408 = vld [vmem:[%s338 + $0xcc] sm:$0xf]
      %v409 = vld [vmem:[%s338 + $0xd0] sm:$0xf]
      %v410 = vld [vmem:[%s338 + $0xd4] sm:$0xf]
      %v411 = vld [vmem:[%s338 + $0xd8] sm:$0xf]
      %v412 = vld [vmem:[%s338 + $0xdc] sm:$0xf]
      %v413 = vld [vmem:[%s338 + $0xe0] sm:$0xf]
      %v414 = vld [vmem:[%s338 + $0xe4] sm:$0xf]
      %v415 = vld [vmem:[%s338 + $0xe8] sm:$0xf]
      %v416 = vld [vmem:[%s338 + $0xec] sm:$0xf]
      %v417 = vld [vmem:[%s338 + $0xf0] sm:$0xf]
      %v418 = vld [vmem:[%s338 + $0xf4] sm:$0xf]
      %v419 = vld [vmem:[%s338 + $0xf8] sm:$0xf]
      %v420 = vld [vmem:[%s338 + $0xfc] sm:$0xf]
      %v421 = vld [vmem:[%s338 + $0x100] sm:$0xf]
      %v422 = vld [vmem:[%s338 + $0x104] sm:$0xf]
      %v423 = vld [vmem:[%s338 + $0x108] sm:$0xf]
      %v424 = vld [vmem:[%s338 + $0x10c] sm:$0xf]
      %v425 = vld [vmem:[%s338 + $0x110] sm:$0xf]
      %v426 = vld [vmem:[%s338 + $0x114] sm:$0xf]
      %v427 = vld [vmem:[%s338 + $0x118] sm:$0xf]
      %v428 = vld [vmem:[%s338 + $0x11c] sm:$0xf]
      %v429 = vunpack.c.l.bf16 %v357
      %v430 = vunpack.c.l.bf16 %v358
      %v431 = vunpack.c.l.bf16 %v359
      %v432 = vunpack.c.l.bf16 %v360
      %v433 = vunpack.c.l.bf16 %v361
      %v434 = vunpack.c.l.bf16 %v362
      %v435 = vunpack.c.l.bf16 %v363
      %v436 = vunpack.c.l.bf16 %v364
      %v437 = vunpack.c.l.bf16 %v365
      %v438 = vunpack.c.l.bf16 %v366
      %v439 = vunpack.c.l.bf16 %v367
      %v440 = vunpack.c.l.bf16 %v368
      %v441 = vunpack.c.l.bf16 %v369
      %v442 = vunpack.c.l.bf16 %v370
      %v443 = vunpack.c.l.bf16 %v371
      %v444 = vunpack.c.l.bf16 %v372
      %v445 = vunpack.c.l.bf16 %v373
      %v446 = vunpack.c.l.bf16 %v374
      %v447 = vunpack.c.l.bf16 %v375
      %v448 = vunpack.c.l.bf16 %v376
      %v449 = vunpack.c.l.bf16 %v377
      %v450 = vunpack.c.l.bf16 %v378
      %v451 = vunpack.c.l.bf16 %v379
      %v452 = vunpack.c.l.bf16 %v380
      %v453 = vunpack.c.l.bf16 %v381
      %v454 = vunpack.c.l.bf16 %v382
      %v455 = vunpack.c.l.bf16 %v383
      %v456 = vunpack.c.l.bf16 %v384
      %v457 = vunpack.c.l.bf16 %v385
      %v458 = vunpack.c.l.bf16 %v386
      %v459 = vunpack.c.l.bf16 %v387
      %v460 = vunpack.c.l.bf16 %v388
      %v461 = vunpack.c.l.bf16 %v389
      %v462 = vunpack.c.l.bf16 %v390
      %v463 = vunpack.c.l.bf16 %v391
      %v464 = vunpack.c.l.bf16 %v392
      %v465 = vunpack.c.l.bf16 %v393
      %v466 = vunpack.c.l.bf16 %v394
      %v467 = vunpack.c.l.bf16 %v395
      %v468 = vunpack.c.l.bf16 %v396
      %v469 = vunpack.c.l.bf16 %v397
      %v470 = vunpack.c.l.bf16 %v398
      %v471 = vunpack.c.l.bf16 %v399
      %v472 = vunpack.c.l.bf16 %v400
      %v473 = vunpack.c.l.bf16 %v401
      %v474 = vunpack.c.l.bf16 %v402
      %v475 = vunpack.c.l.bf16 %v403
      %v476 = vunpack.c.l.bf16 %v404
      %v477 = vunpack.c.l.bf16 %v405
      %v478 = vunpack.c.l.bf16 %v406
      %v479 = vunpack.c.l.bf16 %v407
      %v480 = vunpack.c.l.bf16 %v408
      %v481 = vunpack.c.l.bf16 %v409
      %v482 = vunpack.c.l.bf16 %v410
      %v483 = vunpack.c.l.bf16 %v411
      %v484 = vunpack.c.l.bf16 %v412
      %v485 = vunpack.c.l.bf16 %v413
      %v486 = vunpack.c.l.bf16 %v414
      %v487 = vunpack.c.l.bf16 %v415
      %v488 = vunpack.c.l.bf16 %v416
      %v489 = vunpack.c.l.bf16 %v417
      %v490 = vunpack.c.l.bf16 %v418
      %v491 = vunpack.c.l.bf16 %v419
      %v492 = vunpack.c.l.bf16 %v420
      %v493 = vunpack.c.l.bf16 %v421
      %v494 = vunpack.c.l.bf16 %v422
      %v495 = vunpack.c.l.bf16 %v423
      %v496 = vunpack.c.l.bf16 %v424
      %v497 = vunpack.c.l.bf16 %v425
      %v498 = vunpack.c.l.bf16 %v426
      %v499 = vunpack.c.l.bf16 %v427
      %v500 = vunpack.c.l.bf16 %v428
      %v502 = vperm.slane %v352, 0
      %v504 = vmul.f32 %v429, %v502
      %v505 = vmul.f32 %v430, %v502
      %v506 = vmul.f32 %v431, %v502
      %v507 = vmul.f32 %v432, %v502
      %v508 = vmul.f32 %v433, %v502
      %v509 = vmul.f32 %v434, %v502
      %v510 = vmul.f32 %v435, %v502
      %v511 = vmul.f32 %v436, %v502
      %v512 = vmul.f32 %v437, %v502
      %v513 = vmul.f32 %v438, %v502
      %v514 = vmul.f32 %v439, %v502
      %v515 = vmul.f32 %v440, %v502
      %v516 = vmul.f32 %v441, %v502
      %v517 = vmul.f32 %v442, %v502
      %v518 = vmul.f32 %v443, %v502
      %v519 = vmul.f32 %v444, %v502
      %v520 = vmul.f32 %v445, %v502
      %v521 = vmul.f32 %v446, %v502
      %v522 = vmul.f32 %v447, %v502
      %v523 = vmul.f32 %v448, %v502
      %v524 = vmul.f32 %v449, %v502
      %v525 = vmul.f32 %v450, %v502
      %v526 = vmul.f32 %v451, %v502
      %v527 = vmul.f32 %v452, %v502
      %v528 = vmul.f32 %v453, %v502
      %v529 = vmul.f32 %v454, %v502
      %v530 = vmul.f32 %v455, %v502
      %v531 = vmul.f32 %v456, %v502
      %v532 = vmul.f32 %v457, %v502
      %v533 = vmul.f32 %v458, %v502
      %v534 = vmul.f32 %v459, %v502
      %v535 = vmul.f32 %v460, %v502
      %v536 = vmul.f32 %v461, %v502
      %v537 = vmul.f32 %v462, %v502
      %v538 = vmul.f32 %v463, %v502
      %v539 = vmul.f32 %v464, %v502
      %v540 = vmul.f32 %v465, %v502
      %v541 = vmul.f32 %v466, %v502
      %v542 = vmul.f32 %v467, %v502
      %v543 = vmul.f32 %v468, %v502
      %v544 = vmul.f32 %v469, %v502
      %v545 = vmul.f32 %v470, %v502
      %v546 = vmul.f32 %v471, %v502
      %v547 = vmul.f32 %v472, %v502
      %v548 = vmul.f32 %v473, %v502
      %v549 = vmul.f32 %v474, %v502
      %v550 = vmul.f32 %v475, %v502
      %v551 = vmul.f32 %v476, %v502
      %v552 = vmul.f32 %v477, %v502
      %v553 = vmul.f32 %v478, %v502
      %v554 = vmul.f32 %v479, %v502
      %v555 = vmul.f32 %v480, %v502
      %v556 = vmul.f32 %v481, %v502
      %v557 = vmul.f32 %v482, %v502
      %v558 = vmul.f32 %v483, %v502
      %v559 = vmul.f32 %v484, %v502
      %v560 = vmul.f32 %v485, %v502
      %v561 = vmul.f32 %v486, %v502
      %v562 = vmul.f32 %v487, %v502
      %v563 = vmul.f32 %v488, %v502
      %v564 = vmul.f32 %v489, %v502
      %v565 = vmul.f32 %v490, %v502
      %v566 = vmul.f32 %v491, %v502
      %v567 = vmul.f32 %v492, %v502
      %v568 = vmul.f32 %v493, %v502
      %v569 = vmul.f32 %v494, %v502
      %v570 = vmul.f32 %v495, %v502
      %v571 = vmul.f32 %v496, %v502
      %v572 = vmul.f32 %v497, %v502
      %v573 = vmul.f32 %v498, %v502
      %v574 = vmul.f32 %v499, %v502
      %v575 = vmul.f32 %v500, %v502
      %v577 = vperm.slane %v356, 0
      %v579 = vadd.f32 %v504, %v577
      %v580 = vadd.f32 %v505, %v577
      %v581 = vadd.f32 %v506, %v577
      %v582 = vadd.f32 %v507, %v577
      %v583 = vadd.f32 %v508, %v577
      %v584 = vadd.f32 %v509, %v577
      %v585 = vadd.f32 %v510, %v577
      %v586 = vadd.f32 %v511, %v577
      %v587 = vadd.f32 %v512, %v577
      %v588 = vadd.f32 %v513, %v577
      %v589 = vadd.f32 %v514, %v577
      %v590 = vadd.f32 %v515, %v577
      %v591 = vadd.f32 %v516, %v577
      %v592 = vadd.f32 %v517, %v577
      %v593 = vadd.f32 %v518, %v577
      %v594 = vadd.f32 %v519, %v577
      %v595 = vadd.f32 %v520, %v577
      %v596 = vadd.f32 %v521, %v577
      %v597 = vadd.f32 %v522, %v577
      %v598 = vadd.f32 %v523, %v577
      %v599 = vadd.f32 %v524, %v577
      %v600 = vadd.f32 %v525, %v577
      %v601 = vadd.f32 %v526, %v577
      %v602 = vadd.f32 %v527, %v577
      %v603 = vadd.f32 %v528, %v577
      %v604 = vadd.f32 %v529, %v577
      %v605 = vadd.f32 %v530, %v577
      %v606 = vadd.f32 %v531, %v577
      %v607 = vadd.f32 %v532, %v577
      %v608 = vadd.f32 %v533, %v577
      %v609 = vadd.f32 %v534, %v577
      %v610 = vadd.f32 %v535, %v577
      %v611 = vadd.f32 %v536, %v577
      %v612 = vadd.f32 %v537, %v577
      %v613 = vadd.f32 %v538, %v577
      %v614 = vadd.f32 %v539, %v577
      %v615 = vadd.f32 %v540, %v577
      %v616 = vadd.f32 %v541, %v577
      %v617 = vadd.f32 %v542, %v577
      %v618 = vadd.f32 %v543, %v577
      %v619 = vadd.f32 %v544, %v577
      %v620 = vadd.f32 %v545, %v577
      %v621 = vadd.f32 %v546, %v577
      %v622 = vadd.f32 %v547, %v577
      %v623 = vadd.f32 %v548, %v577
      %v624 = vadd.f32 %v549, %v577
      %v625 = vadd.f32 %v550, %v577
      %v626 = vadd.f32 %v551, %v577
      %v627 = vadd.f32 %v552, %v577
      %v628 = vadd.f32 %v553, %v577
      %v629 = vadd.f32 %v554, %v577
      %v630 = vadd.f32 %v555, %v577
      %v631 = vadd.f32 %v556, %v577
      %v632 = vadd.f32 %v557, %v577
      %v633 = vadd.f32 %v558, %v577
      %v634 = vadd.f32 %v559, %v577
      %v635 = vadd.f32 %v560, %v577
      %v636 = vadd.f32 %v561, %v577
      %v637 = vadd.f32 %v562, %v577
      %v638 = vadd.f32 %v563, %v577
      %v639 = vadd.f32 %v564, %v577
      %v640 = vadd.f32 %v565, %v577
      %v641 = vadd.f32 %v566, %v577
      %v642 = vadd.f32 %v567, %v577
      %v643 = vadd.f32 %v568, %v577
      %v644 = vadd.f32 %v569, %v577
      %v645 = vadd.f32 %v570, %v577
      %v646 = vadd.f32 %v571, %v577
      %v647 = vadd.f32 %v572, %v577
      %v648 = vadd.f32 %v573, %v577
      %v649 = vadd.f32 %v574, %v577
      %v650 = vadd.f32 %v575, %v577
      %v651 = vmax.f32 %v579, 0.0
      %v652 = vmax.f32 %v580, 0.0
      %v653 = vmax.f32 %v581, 0.0
      %v654 = vmax.f32 %v582, 0.0
      %v655 = vmax.f32 %v583, 0.0
      %v656 = vmax.f32 %v584, 0.0
      %v657 = vmax.f32 %v585, 0.0
      %v658 = vmax.f32 %v586, 0.0
      %v659 = vmax.f32 %v587, 0.0
      %v660 = vmax.f32 %v588, 0.0
      %v661 = vmax.f32 %v589, 0.0
      %v662 = vmax.f32 %v590, 0.0
      %v663 = vmax.f32 %v591, 0.0
      %v664 = vmax.f32 %v592, 0.0
      %v665 = vmax.f32 %v593, 0.0
      %v666 = vmax.f32 %v594, 0.0
      %v667 = vmax.f32 %v595, 0.0
      %v668 = vmax.f32 %v596, 0.0
      %v669 = vmax.f32 %v597, 0.0
      %v670 = vmax.f32 %v598, 0.0
      %v671 = vmax.f32 %v599, 0.0
      %v672 = vmax.f32 %v600, 0.0
      %v673 = vmax.f32 %v601, 0.0
      %v674 = vmax.f32 %v602, 0.0
      %v675 = vmax.f32 %v603, 0.0
      %v676 = vmax.f32 %v604, 0.0
      %v677 = vmax.f32 %v605, 0.0
      %v678 = vmax.f32 %v606, 0.0
      %v679 = vmax.f32 %v607, 0.0
      %v680 = vmax.f32 %v608, 0.0
      %v681 = vmax.f32 %v609, 0.0
      %v682 = vmax.f32 %v610, 0.0
      %v683 = vmax.f32 %v611, 0.0
      %v684 = vmax.f32 %v612, 0.0
      %v685 = vmax.f32 %v613, 0.0
      %v686 = vmax.f32 %v614, 0.0
      %v687 = vmax.f32 %v615, 0.0
      %v688 = vmax.f32 %v616, 0.0
      %v689 = vmax.f32 %v617, 0.0
      %v690 = vmax.f32 %v618, 0.0
      %v691 = vmax.f32 %v619, 0.0
      %v692 = vmax.f32 %v620, 0.0
      %v693 = vmax.f32 %v621, 0.0
      %v694 = vmax.f32 %v622, 0.0
      %v695 = vmax.f32 %v623, 0.0
      %v696 = vmax.f32 %v624, 0.0
      %v697 = vmax.f32 %v625, 0.0
      %v698 = vmax.f32 %v626, 0.0
      %v699 = vmax.f32 %v627, 0.0
      %v700 = vmax.f32 %v628, 0.0
      %v701 = vmax.f32 %v629, 0.0
      %v702 = vmax.f32 %v630, 0.0
      %v703 = vmax.f32 %v631, 0.0
      %v704 = vmax.f32 %v632, 0.0
      %v705 = vmax.f32 %v633, 0.0
      %v706 = vmax.f32 %v634, 0.0
      %v707 = vmax.f32 %v635, 0.0
      %v708 = vmax.f32 %v636, 0.0
      %v709 = vmax.f32 %v637, 0.0
      %v710 = vmax.f32 %v638, 0.0
      %v711 = vmax.f32 %v639, 0.0
      %v712 = vmax.f32 %v640, 0.0
      %v713 = vmax.f32 %v641, 0.0
      %v714 = vmax.f32 %v642, 0.0
      %v715 = vmax.f32 %v643, 0.0
      %v716 = vmax.f32 %v644, 0.0
      %v717 = vmax.f32 %v645, 0.0
      %v718 = vmax.f32 %v646, 0.0
      %v719 = vmax.f32 %v647, 0.0
      %v720 = vmax.f32 %v648, 0.0
      %v721 = vmax.f32 %v649, 0.0
      %v722 = vmax.f32 %v650, 0.0
      %v723 = vld [vmem:[%s1] sm:$0xff]
      %v724 = vld [vmem:[%s1 + $0x8] sm:$0xff]
      %v725 = vld [vmem:[%s1 + $0x10] sm:$0xff]
      %v726 = vld [vmem:[%s1 + $0x18] sm:$0xff]
      %v727 = vld [vmem:[%s1 + $0x20] sm:$0xff]
      %v728 = vld [vmem:[%s1 + $0x28] sm:$0xff]
      %v729 = vld [vmem:[%s1 + $0x30] sm:$0xff]
      %v730 = vld [vmem:[%s1 + $0x38] sm:$0xff]
      %v731 = vld [vmem:[%s1 + $0x40] sm:$0xff]
      %v732 = vld [vmem:[%s1 + $0x48] sm:$0xff]
      %v733 = vld [vmem:[%s1 + $0x50] sm:$0xff]
      %v734 = vld [vmem:[%s1 + $0x58] sm:$0xff]
      %v735 = vld [vmem:[%s1 + $0x60] sm:$0xff]
      %v736 = vld [vmem:[%s1 + $0x68] sm:$0xff]
      %v737 = vld [vmem:[%s1 + $0x70] sm:$0xff]
      %v738 = vld [vmem:[%s1 + $0x78] sm:$0xff]
      %v739 = vld [vmem:[%s1 + $0x80] sm:$0xff]
      %v740 = vld [vmem:[%s1 + $0x88] sm:$0xff]
      %v741 = vld [vmem:[%s1 + $0x90] sm:$0xff]
      %v742 = vld [vmem:[%s1 + $0x98] sm:$0xff]
      %v743 = vld [vmem:[%s1 + $0xa0] sm:$0xff]
      %v744 = vld [vmem:[%s1 + $0xa8] sm:$0xff]
      %v745 = vld [vmem:[%s1 + $0xb0] sm:$0xff]
      %v746 = vld [vmem:[%s1 + $0xb8] sm:$0xff]
      %v747 = vld [vmem:[%s1 + $0xc0] sm:$0xff]
      %v748 = vld [vmem:[%s1 + $0xc8] sm:$0xff]
      %v749 = vld [vmem:[%s1 + $0xd0] sm:$0xff]
      %v750 = vld [vmem:[%s1 + $0xd8] sm:$0xff]
      %v751 = vld [vmem:[%s1 + $0xe0] sm:$0xff]
      %v752 = vld [vmem:[%s1 + $0xe8] sm:$0xff]
      %v753 = vld [vmem:[%s1 + $0xf0] sm:$0xff]
      %v754 = vld [vmem:[%s1 + $0xf8] sm:$0xff]
      %v755 = vld [vmem:[%s1 + $0x100] sm:$0xff]
      %v756 = vld [vmem:[%s1 + $0x108] sm:$0xff]
      %v757 = vld [vmem:[%s1 + $0x110] sm:$0xff]
      %v758 = vld [vmem:[%s1 + $0x118] sm:$0xff]
      %v759 = vld [vmem:[%s1 + $0x120] sm:$0xff]
      %v760 = vld [vmem:[%s1 + $0x128] sm:$0xff]
      %v761 = vld [vmem:[%s1 + $0x130] sm:$0xff]
      %v762 = vld [vmem:[%s1 + $0x138] sm:$0xff]
      %v763 = vld [vmem:[%s1 + $0x140] sm:$0xff]
      %v764 = vld [vmem:[%s1 + $0x148] sm:$0xff]
      %v765 = vld [vmem:[%s1 + $0x150] sm:$0xff]
      %v766 = vld [vmem:[%s1 + $0x158] sm:$0xff]
      %v767 = vld [vmem:[%s1 + $0x160] sm:$0xff]
      %v768 = vld [vmem:[%s1 + $0x168] sm:$0xff]
      %v769 = vld [vmem:[%s1 + $0x170] sm:$0xff]
      %v770 = vld [vmem:[%s1 + $0x178] sm:$0xff]
      %v771 = vld [vmem:[%s1 + $0x180] sm:$0xff]
      %v772 = vld [vmem:[%s1 + $0x188] sm:$0xff]
      %v773 = vld [vmem:[%s1 + $0x190] sm:$0xff]
      %v774 = vld [vmem:[%s1 + $0x198] sm:$0xff]
      %v775 = vld [vmem:[%s1 + $0x1a0] sm:$0xff]
      %v776 = vld [vmem:[%s1 + $0x1a8] sm:$0xff]
      %v777 = vld [vmem:[%s1 + $0x1b0] sm:$0xff]
      %v778 = vld [vmem:[%s1 + $0x1b8] sm:$0xff]
      %v779 = vld [vmem:[%s1 + $0x1c0] sm:$0xff]
      %v780 = vld [vmem:[%s1 + $0x1c8] sm:$0xff]
      %v781 = vld [vmem:[%s1 + $0x1d0] sm:$0xff]
      %v782 = vld [vmem:[%s1 + $0x1d8] sm:$0xff]
      %v783 = vld [vmem:[%s1 + $0x1e0] sm:$0xff]
      %v784 = vld [vmem:[%s1 + $0x1e8] sm:$0xff]
      %v785 = vld [vmem:[%s1 + $0x1f0] sm:$0xff]
      %v786 = vld [vmem:[%s1 + $0x1f8] sm:$0xff]
      %v787 = vld [vmem:[%s1 + $0x200] sm:$0xff]
      %v788 = vld [vmem:[%s1 + $0x208] sm:$0xff]
      %v789 = vld [vmem:[%s1 + $0x210] sm:$0xff]
      %v790 = vld [vmem:[%s1 + $0x218] sm:$0xff]
      %v791 = vld [vmem:[%s1 + $0x220] sm:$0xff]
      %v792 = vld [vmem:[%s1 + $0x228] sm:$0xff]
      %v793 = vld [vmem:[%s1 + $0x230] sm:$0xff]
      %v794 = vld [vmem:[%s1 + $0x238] sm:$0xff]
      %796 = vset.pattern.permute.xlu0 0
      %797 = vperm.xlu0 %796, %v723
      %v798 = vpop.permute.xlu0 %797
      %801 = vset.pattern.permute.xlu0 0
      %802 = vperm.xlu0 %801, %v724
      %v803 = vpop.permute.xlu0 %802
      %806 = vset.pattern.permute.xlu0 0
      %807 = vperm.xlu0 %806, %v725
      %v808 = vpop.permute.xlu0 %807
      %811 = vset.pattern.permute.xlu0 0
      %812 = vperm.xlu0 %811, %v726
      %v813 = vpop.permute.xlu0 %812
      %816 = vset.pattern.permute.xlu0 0
      %817 = vperm.xlu0 %816, %v727
      %v818 = vpop.permute.xlu0 %817
      %821 = vset.pattern.permute.xlu0 0
      %822 = vperm.xlu0 %821, %v728
      %v823 = vpop.permute.xlu0 %822
      %826 = vset.pattern.permute.xlu0 0
      %827 = vperm.xlu0 %826, %v729
      %v828 = vpop.permute.xlu0 %827
      %831 = vset.pattern.permute.xlu0 0
      %832 = vperm.xlu0 %831, %v730
      %v833 = vpop.permute.xlu0 %832
      %836 = vset.pattern.permute.xlu0 0
      %837 = vperm.xlu0 %836, %v731
      %v838 = vpop.permute.xlu0 %837
      %841 = vset.pattern.permute.xlu0 0
      %842 = vperm.xlu0 %841, %v732
      %v843 = vpop.permute.xlu0 %842
      %846 = vset.pattern.permute.xlu0 0
      %847 = vperm.xlu0 %846, %v733
      %v848 = vpop.permute.xlu0 %847
      %851 = vset.pattern.permute.xlu0 0
      %852 = vperm.xlu0 %851, %v734
      %v853 = vpop.permute.xlu0 %852
      %856 = vset.pattern.permute.xlu0 0
      %857 = vperm.xlu0 %856, %v735
      %v858 = vpop.permute.xlu0 %857
      %861 = vset.pattern.permute.xlu0 0
      %862 = vperm.xlu0 %861, %v736
      %v863 = vpop.permute.xlu0 %862
      %866 = vset.pattern.permute.xlu0 0
      %867 = vperm.xlu0 %866, %v737
      %v868 = vpop.permute.xlu0 %867
      %871 = vset.pattern.permute.xlu0 0
      %872 = vperm.xlu0 %871, %v738
      %v873 = vpop.permute.xlu0 %872
      %876 = vset.pattern.permute.xlu0 0
      %877 = vperm.xlu0 %876, %v739
      %v878 = vpop.permute.xlu0 %877
      %881 = vset.pattern.permute.xlu0 0
      %882 = vperm.xlu0 %881, %v740
      %v883 = vpop.permute.xlu0 %882
      %886 = vset.pattern.permute.xlu0 0
      %887 = vperm.xlu0 %886, %v741
      %v888 = vpop.permute.xlu0 %887
      %891 = vset.pattern.permute.xlu0 0
      %892 = vperm.xlu0 %891, %v742
      %v893 = vpop.permute.xlu0 %892
      %896 = vset.pattern.permute.xlu0 0
      %897 = vperm.xlu0 %896, %v743
      %v898 = vpop.permute.xlu0 %897
      %901 = vset.pattern.permute.xlu0 0
      %902 = vperm.xlu0 %901, %v744
      %v903 = vpop.permute.xlu0 %902
      %906 = vset.pattern.permute.xlu0 0
      %907 = vperm.xlu0 %906, %v745
      %v908 = vpop.permute.xlu0 %907
      %911 = vset.pattern.permute.xlu0 0
      %912 = vperm.xlu0 %911, %v746
      %v913 = vpop.permute.xlu0 %912
      %916 = vset.pattern.permute.xlu0 0
      %917 = vperm.xlu0 %916, %v747
      %v918 = vpop.permute.xlu0 %917
      %921 = vset.pattern.permute.xlu0 0
      %922 = vperm.xlu0 %921, %v748
      %v923 = vpop.permute.xlu0 %922
      %926 = vset.pattern.permute.xlu0 0
      %927 = vperm.xlu0 %926, %v749
      %v928 = vpop.permute.xlu0 %927
      %931 = vset.pattern.permute.xlu0 0
      %932 = vperm.xlu0 %931, %v750
      %v933 = vpop.permute.xlu0 %932
      %936 = vset.pattern.permute.xlu0 0
      %937 = vperm.xlu0 %936, %v751
      %v938 = vpop.permute.xlu0 %937
      %941 = vset.pattern.permute.xlu0 0
      %942 = vperm.xlu0 %941, %v752
      %v943 = vpop.permute.xlu0 %942
      %946 = vset.pattern.permute.xlu0 0
      %947 = vperm.xlu0 %946, %v753
      %v948 = vpop.permute.xlu0 %947
      %951 = vset.pattern.permute.xlu0 0
      %952 = vperm.xlu0 %951, %v754
      %v953 = vpop.permute.xlu0 %952
      %956 = vset.pattern.permute.xlu0 0
      %957 = vperm.xlu0 %956, %v755
      %v958 = vpop.permute.xlu0 %957
      %961 = vset.pattern.permute.xlu0 0
      %962 = vperm.xlu0 %961, %v756
      %v963 = vpop.permute.xlu0 %962
      %966 = vset.pattern.permute.xlu0 0
      %967 = vperm.xlu0 %966, %v757
      %v968 = vpop.permute.xlu0 %967
      %971 = vset.pattern.permute.xlu0 0
      %972 = vperm.xlu0 %971, %v758
      %v973 = vpop.permute.xlu0 %972
      %976 = vset.pattern.permute.xlu0 0
      %977 = vperm.xlu0 %976, %v759
      %v978 = vpop.permute.xlu0 %977
      %981 = vset.pattern.permute.xlu0 0
      %982 = vperm.xlu0 %981, %v760
      %v983 = vpop.permute.xlu0 %982
      %986 = vset.pattern.permute.xlu0 0
      %987 = vperm.xlu0 %986, %v761
      %v988 = vpop.permute.xlu0 %987
      %991 = vset.pattern.permute.xlu0 0
      %992 = vperm.xlu0 %991, %v762
      %v993 = vpop.permute.xlu0 %992
      %996 = vset.pattern.permute.xlu0 0
      %997 = vperm.xlu0 %996, %v763
      %v998 = vpop.permute.xlu0 %997
      %1001 = vset.pattern.permute.xlu0 0
      %1002 = vperm.xlu0 %1001, %v764
      %v1003 = vpop.permute.xlu0 %1002
      %1006 = vset.pattern.permute.xlu0 0
      %1007 = vperm.xlu0 %1006, %v765
      %v1008 = vpop.permute.xlu0 %1007
      %1011 = vset.pattern.permute.xlu0 0
      %1012 = vperm.xlu0 %1011, %v766
      %v1013 = vpop.permute.xlu0 %1012
      %1016 = vset.pattern.permute.xlu0 0
      %1017 = vperm.xlu0 %1016, %v767
      %v1018 = vpop.permute.xlu0 %1017
      %1021 = vset.pattern.permute.xlu0 0
      %1022 = vperm.xlu0 %1021, %v768
      %v1023 = vpop.permute.xlu0 %1022
      %1026 = vset.pattern.permute.xlu0 0
      %1027 = vperm.xlu0 %1026, %v769
      %v1028 = vpop.permute.xlu0 %1027
      %1031 = vset.pattern.permute.xlu0 0
      %1032 = vperm.xlu0 %1031, %v770
      %v1033 = vpop.permute.xlu0 %1032
      %1036 = vset.pattern.permute.xlu0 0
      %1037 = vperm.xlu0 %1036, %v771
      %v1038 = vpop.permute.xlu0 %1037
      %1041 = vset.pattern.permute.xlu0 0
      %1042 = vperm.xlu0 %1041, %v772
      %v1043 = vpop.permute.xlu0 %1042
      %1046 = vset.pattern.permute.xlu0 0
      %1047 = vperm.xlu0 %1046, %v773
      %v1048 = vpop.permute.xlu0 %1047
      %1051 = vset.pattern.permute.xlu0 0
      %1052 = vperm.xlu0 %1051, %v774
      %v1053 = vpop.permute.xlu0 %1052
      %1056 = vset.pattern.permute.xlu0 0
      %1057 = vperm.xlu0 %1056, %v775
      %v1058 = vpop.permute.xlu0 %1057
      %1061 = vset.pattern.permute.xlu0 0
      %1062 = vperm.xlu0 %1061, %v776
      %v1063 = vpop.permute.xlu0 %1062
      %1066 = vset.pattern.permute.xlu0 0
      %1067 = vperm.xlu0 %1066, %v777
      %v1068 = vpop.permute.xlu0 %1067
      %1071 = vset.pattern.permute.xlu0 0
      %1072 = vperm.xlu0 %1071, %v778
      %v1073 = vpop.permute.xlu0 %1072
      %1076 = vset.pattern.permute.xlu0 0
      %1077 = vperm.xlu0 %1076, %v779
      %v1078 = vpop.permute.xlu0 %1077
      %1081 = vset.pattern.permute.xlu0 0
      %1082 = vperm.xlu0 %1081, %v780
      %v1083 = vpop.permute.xlu0 %1082
      %1086 = vset.pattern.permute.xlu0 0
      %1087 = vperm.xlu0 %1086, %v781
      %v1088 = vpop.permute.xlu0 %1087
      %1091 = vset.pattern.permute.xlu0 0
      %1092 = vperm.xlu0 %1091, %v782
      %v1093 = vpop.permute.xlu0 %1092
      %1096 = vset.pattern.permute.xlu0 0
      %1097 = vperm.xlu0 %1096, %v783
      %v1098 = vpop.permute.xlu0 %1097
      %1101 = vset.pattern.permute.xlu0 0
      %1102 = vperm.xlu0 %1101, %v784
      %v1103 = vpop.permute.xlu0 %1102
      %1106 = vset.pattern.permute.xlu0 0
      %1107 = vperm.xlu0 %1106, %v785
      %v1108 = vpop.permute.xlu0 %1107
      %1111 = vset.pattern.permute.xlu0 0
      %1112 = vperm.xlu0 %1111, %v786
      %v1113 = vpop.permute.xlu0 %1112
      %1116 = vset.pattern.permute.xlu0 0
      %1117 = vperm.xlu0 %1116, %v787
      %v1118 = vpop.permute.xlu0 %1117
      %1121 = vset.pattern.permute.xlu0 0
      %1122 = vperm.xlu0 %1121, %v788
      %v1123 = vpop.permute.xlu0 %1122
      %1126 = vset.pattern.permute.xlu0 0
      %1127 = vperm.xlu0 %1126, %v789
      %v1128 = vpop.permute.xlu0 %1127
      %1131 = vset.pattern.permute.xlu0 0
      %1132 = vperm.xlu0 %1131, %v790
      %v1133 = vpop.permute.xlu0 %1132
      %1136 = vset.pattern.permute.xlu0 0
      %1137 = vperm.xlu0 %1136, %v791
      %v1138 = vpop.permute.xlu0 %1137
      %1141 = vset.pattern.permute.xlu0 0
      %1142 = vperm.xlu0 %1141, %v792
      %v1143 = vpop.permute.xlu0 %1142
      %1146 = vset.pattern.permute.xlu0 0
      %1147 = vperm.xlu0 %1146, %v793
      %v1148 = vpop.permute.xlu0 %1147
      %1151 = vset.pattern.permute.xlu0 0
      %1152 = vperm.xlu0 %1151, %v794
      %v1153 = vpop.permute.xlu0 %1152
      %v1155 = vmul.f32 %v651, %v798
      %v1156 = vmul.f32 %v652, %v803
      %v1157 = vmul.f32 %v653, %v808
      %v1158 = vmul.f32 %v654, %v813
      %v1159 = vmul.f32 %v655, %v818
      %v1160 = vmul.f32 %v656, %v823
      %v1161 = vmul.f32 %v657, %v828
      %v1162 = vmul.f32 %v658, %v833
      %v1163 = vmul.f32 %v659, %v838
      %v1164 = vmul.f32 %v660, %v843
      %v1165 = vmul.f32 %v661, %v848
      %v1166 = vmul.f32 %v662, %v853
      %v1167 = vmul.f32 %v663, %v858
      %v1168 = vmul.f32 %v664, %v863
      %v1169 = vmul.f32 %v665, %v868
      %v1170 = vmul.f32 %v666, %v873
      %v1171 = vmul.f32 %v667, %v878
      %v1172 = vmul.f32 %v668, %v883
      %v1173 = vmul.f32 %v669, %v888
      %v1174 = vmul.f32 %v670, %v893
      %v1175 = vmul.f32 %v671, %v898
      %v1176 = vmul.f32 %v672, %v903
      %v1177 = vmul.f32 %v673, %v908
      %v1178 = vmul.f32 %v674, %v913
      %v1179 = vmul.f32 %v675, %v918
      %v1180 = vmul.f32 %v676, %v923
      %v1181 = vmul.f32 %v677, %v928
      %v1182 = vmul.f32 %v678, %v933
      %v1183 = vmul.f32 %v679, %v938
      %v1184 = vmul.f32 %v680, %v943
      %v1185 = vmul.f32 %v681, %v948
      %v1186 = vmul.f32 %v682, %v953
      %v1187 = vmul.f32 %v683, %v958
      %v1188 = vmul.f32 %v684, %v963
      %v1189 = vmul.f32 %v685, %v968
      %v1190 = vmul.f32 %v686, %v973
      %v1191 = vmul.f32 %v687, %v978
      %v1192 = vmul.f32 %v688, %v983
      %v1193 = vmul.f32 %v689, %v988
      %v1194 = vmul.f32 %v690, %v993
      %v1195 = vmul.f32 %v691, %v998
      %v1196 = vmul.f32 %v692, %v1003
      %v1197 = vmul.f32 %v693, %v1008
      %v1198 = vmul.f32 %v694, %v1013
      %v1199 = vmul.f32 %v695, %v1018
      %v1200 = vmul.f32 %v696, %v1023
      %v1201 = vmul.f32 %v697, %v1028
      %v1202 = vmul.f32 %v698, %v1033
      %v1203 = vmul.f32 %v699, %v1038
      %v1204 = vmul.f32 %v700, %v1043
      %v1205 = vmul.f32 %v701, %v1048
      %v1206 = vmul.f32 %v702, %v1053
      %v1207 = vmul.f32 %v703, %v1058
      %v1208 = vmul.f32 %v704, %v1063
      %v1209 = vmul.f32 %v705, %v1068
      %v1210 = vmul.f32 %v706, %v1073
      %v1211 = vmul.f32 %v707, %v1078
      %v1212 = vmul.f32 %v708, %v1083
      %v1213 = vmul.f32 %v709, %v1088
      %v1214 = vmul.f32 %v710, %v1093
      %v1215 = vmul.f32 %v711, %v1098
      %v1216 = vmul.f32 %v712, %v1103
      %v1217 = vmul.f32 %v713, %v1108
      %v1218 = vmul.f32 %v714, %v1113
      %v1219 = vmul.f32 %v715, %v1118
      %v1220 = vmul.f32 %v716, %v1123
      %v1221 = vmul.f32 %v717, %v1128
      %v1222 = vmul.f32 %v718, %v1133
      %v1223 = vmul.f32 %v719, %v1138
      %v1224 = vmul.f32 %v720, %v1143
      %v1225 = vmul.f32 %v721, %v1148
      %v1226 = vmul.f32 %v722, %v1153
      %v1227 = vpack.c.bf16 %v1155, %v1155
      %v1228 = vpack.c.bf16 %v1156, %v1156
      %v1229 = vpack.c.bf16 %v1157, %v1157
      %v1230 = vpack.c.bf16 %v1158, %v1158
      %v1231 = vpack.c.bf16 %v1159, %v1159
      %v1232 = vpack.c.bf16 %v1160, %v1160
      %v1233 = vpack.c.bf16 %v1161, %v1161
      %v1234 = vpack.c.bf16 %v1162, %v1162
      %v1235 = vpack.c.bf16 %v1163, %v1163
      %v1236 = vpack.c.bf16 %v1164, %v1164
      %v1237 = vpack.c.bf16 %v1165, %v1165
      %v1238 = vpack.c.bf16 %v1166, %v1166
      %v1239 = vpack.c.bf16 %v1167, %v1167
      %v1240 = vpack.c.bf16 %v1168, %v1168
      %v1241 = vpack.c.bf16 %v1169, %v1169
      %v1242 = vpack.c.bf16 %v1170, %v1170
      %v1243 = vpack.c.bf16 %v1171, %v1171
      %v1244 = vpack.c.bf16 %v1172, %v1172
      %v1245 = vpack.c.bf16 %v1173, %v1173
      %v1246 = vpack.c.bf16 %v1174, %v1174
      %v1247 = vpack.c.bf16 %v1175, %v1175
      %v1248 = vpack.c.bf16 %v1176, %v1176
      %v1249 = vpack.c.bf16 %v1177, %v1177
      %v1250 = vpack.c.bf16 %v1178, %v1178
      %v1251 = vpack.c.bf16 %v1179, %v1179
      %v1252 = vpack.c.bf16 %v1180, %v1180
      %v1253 = vpack.c.bf16 %v1181, %v1181
      %v1254 = vpack.c.bf16 %v1182, %v1182
      %v1255 = vpack.c.bf16 %v1183, %v1183
      %v1256 = vpack.c.bf16 %v1184, %v1184
      %v1257 = vpack.c.bf16 %v1185, %v1185
      %v1258 = vpack.c.bf16 %v1186, %v1186
      %v1259 = vpack.c.bf16 %v1187, %v1187
      %v1260 = vpack.c.bf16 %v1188, %v1188
      %v1261 = vpack.c.bf16 %v1189, %v1189
      %v1262 = vpack.c.bf16 %v1190, %v1190
      %v1263 = vpack.c.bf16 %v1191, %v1191
      %v1264 = vpack.c.bf16 %v1192, %v1192
      %v1265 = vpack.c.bf16 %v1193, %v1193
      %v1266 = vpack.c.bf16 %v1194, %v1194
      %v1267 = vpack.c.bf16 %v1195, %v1195
      %v1268 = vpack.c.bf16 %v1196, %v1196
      %v1269 = vpack.c.bf16 %v1197, %v1197
      %v1270 = vpack.c.bf16 %v1198, %v1198
      %v1271 = vpack.c.bf16 %v1199, %v1199
      %v1272 = vpack.c.bf16 %v1200, %v1200
      %v1273 = vpack.c.bf16 %v1201, %v1201
      %v1274 = vpack.c.bf16 %v1202, %v1202
      %v1275 = vpack.c.bf16 %v1203, %v1203
      %v1276 = vpack.c.bf16 %v1204, %v1204
      %v1277 = vpack.c.bf16 %v1205, %v1205
      %v1278 = vpack.c.bf16 %v1206, %v1206
      %v1279 = vpack.c.bf16 %v1207, %v1207
      %v1280 = vpack.c.bf16 %v1208, %v1208
      %v1281 = vpack.c.bf16 %v1209, %v1209
      %v1282 = vpack.c.bf16 %v1210, %v1210
      %v1283 = vpack.c.bf16 %v1211, %v1211
      %v1284 = vpack.c.bf16 %v1212, %v1212
      %v1285 = vpack.c.bf16 %v1213, %v1213
      %v1286 = vpack.c.bf16 %v1214, %v1214
      %v1287 = vpack.c.bf16 %v1215, %v1215
      %v1288 = vpack.c.bf16 %v1216, %v1216
      %v1289 = vpack.c.bf16 %v1217, %v1217
      %v1290 = vpack.c.bf16 %v1218, %v1218
      %v1291 = vpack.c.bf16 %v1219, %v1219
      %v1292 = vpack.c.bf16 %v1220, %v1220
      %v1293 = vpack.c.bf16 %v1221, %v1221
      %v1294 = vpack.c.bf16 %v1222, %v1222
      %v1295 = vpack.c.bf16 %v1223, %v1223
      %v1296 = vpack.c.bf16 %v1224, %v1224
      %v1297 = vpack.c.bf16 %v1225, %v1225
      %v1298 = vpack.c.bf16 %v1226, %v1226
      %1299 = vst [vmem:[#allocation2] sm:$0xf] %v1227
      %1300 = vst [vmem:[#allocation2 + $0x4] sm:$0xf] %v1228
      %1301 = vst [vmem:[#allocation2 + $0x8] sm:$0xf] %v1229
      %1302 = vst [vmem:[#allocation2 + $0xc] sm:$0xf] %v1230
      %1303 = vst [vmem:[#allocation2 + $0x10] sm:$0xf] %v1231
      %1304 = vst [vmem:[#allocation2 + $0x14] sm:$0xf] %v1232
      %1305 = vst [vmem:[#allocation2 + $0x18] sm:$0xf] %v1233
      %1306 = vst [vmem:[#allocation2 + $0x1c] sm:$0xf] %v1234
      %1307 = vst [vmem:[#allocation2 + $0x20] sm:$0xf] %v1235
      %1308 = vst [vmem:[#allocation2 + $0x24] sm:$0xf] %v1236
      %1309 = vst [vmem:[#allocation2 + $0x28] sm:$0xf] %v1237
      %1310 = vst [vmem:[#allocation2 + $0x2c] sm:$0xf] %v1238
      %1311 = vst [vmem:[#allocation2 + $0x30] sm:$0xf] %v1239
      %1312 = vst [vmem:[#allocation2 + $0x34] sm:$0xf] %v1240
      %1313 = vst [vmem:[#allocation2 + $0x38] sm:$0xf] %v1241
      %1314 = vst [vmem:[#allocation2 + $0x3c] sm:$0xf] %v1242
      %1315 = vst [vmem:[#allocation2 + $0x40] sm:$0xf] %v1243
      %1316 = vst [vmem:[#allocation2 + $0x44] sm:$0xf] %v1244
      %1317 = vst [vmem:[#allocation2 + $0x48] sm:$0xf] %v1245
      %1318 = vst [vmem:[#allocation2 + $0x4c] sm:$0xf] %v1246
      %1319 = vst [vmem:[#allocation2 + $0x50] sm:$0xf] %v1247
      %1320 = vst [vmem:[#allocation2 + $0x54] sm:$0xf] %v1248
      %1321 = vst [vmem:[#allocation2 + $0x58] sm:$0xf] %v1249
      %1322 = vst [vmem:[#allocation2 + $0x5c] sm:$0xf] %v1250
      %1323 = vst [vmem:[#allocation2 + $0x60] sm:$0xf] %v1251
      %1324 = vst [vmem:[#allocation2 + $0x64] sm:$0xf] %v1252
      %1325 = vst [vmem:[#allocation2 + $0x68] sm:$0xf] %v1253
      %1326 = vst [vmem:[#allocation2 + $0x6c] sm:$0xf] %v1254
      %1327 = vst [vmem:[#allocation2 + $0x70] sm:$0xf] %v1255
      %1328 = vst [vmem:[#allocation2 + $0x74] sm:$0xf] %v1256
      %1329 = vst [vmem:[#allocation2 + $0x78] sm:$0xf] %v1257
      %1330 = vst [vmem:[#allocation2 + $0x7c] sm:$0xf] %v1258
      %1331 = vst [vmem:[#allocation2 + $0x80] sm:$0xf] %v1259
      %1332 = vst [vmem:[#allocation2 + $0x84] sm:$0xf] %v1260
      %1333 = vst [vmem:[#allocation2 + $0x88] sm:$0xf] %v1261
      %1334 = vst [vmem:[#allocation2 + $0x8c] sm:$0xf] %v1262
      %1335 = vst [vmem:[#allocation2 + $0x90] sm:$0xf] %v1263
      %1336 = vst [vmem:[#allocation2 + $0x94] sm:$0xf] %v1264
      %1337 = vst [vmem:[#allocation2 + $0x98] sm:$0xf] %v1265
      %1338 = vst [vmem:[#allocation2 + $0x9c] sm:$0xf] %v1266
      %1339 = vst [vmem:[#allocation2 + $0xa0] sm:$0xf] %v1267
      %1340 = vst [vmem:[#allocation2 + $0xa4] sm:$0xf] %v1268
      %1341 = vst [vmem:[#allocation2 + $0xa8] sm:$0xf] %v1269
      %1342 = vst [vmem:[#allocation2 + $0xac] sm:$0xf] %v1270
      %1343 = vst [vmem:[#allocation2 + $0xb0] sm:$0xf] %v1271
      %1344 = vst [vmem:[#allocation2 + $0xb4] sm:$0xf] %v1272
      %1345 = vst [vmem:[#allocation2 + $0xb8] sm:$0xf] %v1273
      %1346 = vst [vmem:[#allocation2 + $0xbc] sm:$0xf] %v1274
      %1347 = vst [vmem:[#allocation2 + $0xc0] sm:$0xf] %v1275
      %1348 = vst [vmem:[#allocation2 + $0xc4] sm:$0xf] %v1276
      %1349 = vst [vmem:[#allocation2 + $0xc8] sm:$0xf] %v1277
      %1350 = vst [vmem:[#allocation2 + $0xcc] sm:$0xf] %v1278
      %1351 = vst [vmem:[#allocation2 + $0xd0] sm:$0xf] %v1279
      %1352 = vst [vmem:[#allocation2 + $0xd4] sm:$0xf] %v1280
      %1353 = vst [vmem:[#allocation2 + $0xd8] sm:$0xf] %v1281
      %1354 = vst [vmem:[#allocation2 + $0xdc] sm:$0xf] %v1282
      %1355 = vst [vmem:[#allocation2 + $0xe0] sm:$0xf] %v1283
      %1356 = vst [vmem:[#allocation2 + $0xe4] sm:$0xf] %v1284
      %1357 = vst [vmem:[#allocation2 + $0xe8] sm:$0xf] %v1285
      %1358 = vst [vmem:[#allocation2 + $0xec] sm:$0xf] %v1286
      %1359 = vst [vmem:[#allocation2 + $0xf0] sm:$0xf] %v1287
      %1360 = vst [vmem:[#allocation2 + $0xf4] sm:$0xf] %v1288
      %1361 = vst [vmem:[#allocation2 + $0xf8] sm:$0xf] %v1289
      %1362 = vst [vmem:[#allocation2 + $0xfc] sm:$0xf] %v1290
      %1363 = vst [vmem:[#allocation2 + $0x100] sm:$0xf] %v1291
      %1364 = vst [vmem:[#allocation2 + $0x104] sm:$0xf] %v1292
      %1365 = vst [vmem:[#allocation2 + $0x108] sm:$0xf] %v1293
      %1366 = vst [vmem:[#allocation2 + $0x10c] sm:$0xf] %v1294
      %1367 = vst [vmem:[#allocation2 + $0x110] sm:$0xf] %v1295
      %1368 = vst [vmem:[#allocation2 + $0x114] sm:$0xf] %v1296
      %1369 = vst [vmem:[#allocation2 + $0x118] sm:$0xf] %v1297
      %1370 = vst [vmem:[#allocation2 + $0x11c] sm:$0xf] %v1298
      %v1371 = vld [vmem:[#allocation2] sm:$0xf]
      %v1372 = vld [vmem:[#allocation2 + $0x8] sm:$0xf]
      %v1373 = vld [vmem:[#allocation2 + $0x10] sm:$0xf]
      %v1374 = vld [vmem:[#allocation2 + $0x18] sm:$0xf]
      %v1375 = vld [vmem:[#allocation2 + $0x20] sm:$0xf]
      %v1376 = vld [vmem:[#allocation2 + $0x28] sm:$0xf]
      %v1377 = vld [vmem:[#allocation2 + $0x30] sm:$0xf]
      %v1378 = vld [vmem:[#allocation2 + $0x38] sm:$0xf]
      %v1379 = vld [vmem:[%s6] sm:$0xf]
      %v1380 = vld [vmem:[%s6 + $0x4] sm:$0xf]
      %v1381 = vld [vmem:[%s6 + $0x8] sm:$0xf]
      %v1382 = vld [vmem:[%s6 + $0xc] sm:$0xf]
      %v1383 = vld [vmem:[%s6 + $0x10] sm:$0xf]
      %v1384 = vld [vmem:[%s6 + $0x14] sm:$0xf]
      %v1385 = vld [vmem:[%s6 + $0x18] sm:$0xf]
      %v1386 = vld [vmem:[%s6 + $0x1c] sm:$0xf]
      %v1387 = vld [vmem:[%s6 + $0x20] sm:$0xf]
      %v1388 = vld [vmem:[%s6 + $0x24] sm:$0xf]
      %v1389 = vld [vmem:[%s6 + $0x28] sm:$0xf]
      %v1390 = vld [vmem:[%s6 + $0x2c] sm:$0xf]
      %v1391 = vld [vmem:[%s6 + $0x30] sm:$0xf]
      %v1392 = vld [vmem:[%s6 + $0x34] sm:$0xf]
      %v1393 = vld [vmem:[%s6 + $0x38] sm:$0xf]
      %v1394 = vld [vmem:[%s6 + $0x3c] sm:$0xf]
      %s1395 = scalar_lea.vmem [#allocation2], 72
      %v1396 = vld [vmem:[%s1395] sm:$0xf]
      %v1397 = vld [vmem:[%s1395 + $0x8] sm:$0xf]
      %v1398 = vld [vmem:[%s1395 + $0x10] sm:$0xf]
      %v1399 = vld [vmem:[%s1395 + $0x18] sm:$0xf]
      %v1400 = vld [vmem:[%s1395 + $0x20] sm:$0xf]
      %v1401 = vld [vmem:[%s1395 + $0x28] sm:$0xf]
      %v1402 = vld [vmem:[%s1395 + $0x30] sm:$0xf]
      %v1403 = vld [vmem:[%s1395 + $0x38] sm:$0xf]
      %v1404 = vld [vmem:[%s6 + $0x40] sm:$0xf]
      %v1405 = vld [vmem:[%s6 + $0x44] sm:$0xf]
      %v1406 = vld [vmem:[%s6 + $0x48] sm:$0xf]
      %v1407 = vld [vmem:[%s6 + $0x4c] sm:$0xf]
      %v1408 = vld [vmem:[%s6 + $0x50] sm:$0xf]
      %v1409 = vld [vmem:[%s6 + $0x54] sm:$0xf]
      %v1410 = vld [vmem:[%s6 + $0x58] sm:$0xf]
      %v1411 = vld [vmem:[%s6 + $0x5c] sm:$0xf]
      %v1412 = vld [vmem:[%s6 + $0x60] sm:$0xf]
      %v1413 = vld [vmem:[%s6 + $0x64] sm:$0xf]
      %v1414 = vld [vmem:[%s6 + $0x68] sm:$0xf]
      %v1415 = vld [vmem:[%s6 + $0x6c] sm:$0xf]
      %v1416 = vld [vmem:[%s6 + $0x70] sm:$0xf]
      %v1417 = vld [vmem:[%s6 + $0x74] sm:$0xf]
      %v1418 = vld [vmem:[%s6 + $0x78] sm:$0xf]
      %v1419 = vld [vmem:[%s6 + $0x7c] sm:$0xf]
      %v1428 = vunpack.c.l.b16 %v1396
      %v1429 = vunpack.c.l.b16 %v1397
      %v1430 = vunpack.c.l.b16 %v1398
      %v1431 = vunpack.c.l.b16 %v1399
      %v1432 = vunpack.c.l.b16 %v1400
      %v1433 = vunpack.c.l.b16 %v1401
      %v1434 = vunpack.c.l.b16 %v1402
      %v1435 = vunpack.c.l.b16 %v1403
      %v1436 = vpack.c.b16 %v1429, %v1428
      %v1437 = vpack.c.b16 %v1431, %v1430
      %v1438 = vpack.c.b16 %v1433, %v1432
      %v1439 = vpack.c.b16 %v1435, %v1434
      %v1460 = vunpack.c.l.b16 %v1404
      %v1461 = vunpack.c.l.b16 %v1405
      %v1462 = vunpack.c.l.b16 %v1406
      %v1463 = vunpack.c.l.b16 %v1407
      %v1464 = vunpack.c.l.b16 %v1408
      %v1465 = vunpack.c.l.b16 %v1409
      %v1466 = vunpack.c.l.b16 %v1410
      %v1467 = vunpack.c.l.b16 %v1411
      %v1468 = vunpack.c.l.b16 %v1412
      %v1469 = vunpack.c.l.b16 %v1413
      %v1470 = vunpack.c.l.b16 %v1414
      %v1471 = vunpack.c.l.b16 %v1415
      %v1472 = vunpack.c.l.b16 %v1416
      %v1473 = vunpack.c.l.b16 %v1417
      %v1474 = vunpack.c.l.b16 %v1418
      %v1475 = vunpack.c.l.b16 %v1419
      %v1476 = vpack.c.b16 %v1461, %v1460
      %v1477 = vpack.c.b16 %v1463, %v1462
      %v1478 = vpack.c.b16 %v1465, %v1464
      %v1479 = vpack.c.b16 %v1467, %v1466
      %v1480 = vpack.c.b16 %v1469, %v1468
      %v1481 = vpack.c.b16 %v1471, %v1470
      %v1482 = vpack.c.b16 %v1473, %v1472
      %v1483 = vpack.c.b16 %v1475, %v1474
      %1492 = vmatpush.bf16.msra.mxu0 %v1483
      %1493 = vmatpush.bf16.msra.mxu0 %v1482
      %1494 = vmatpush.bf16.msra.mxu0 %v1481
      %1495 = vmatpush.bf16.msra.mxu0 %v1480
      %1496 = vmatpush.bf16.msra.mxu0 %v1479
      %1497 = vmatpush.bf16.msra.mxu0 %v1478
      %1498 = vmatpush.bf16.msra.mxu0 %v1477
      %1499 = vmatpush.bf16.msra.mxu0 %v1476
      %1500 = vmatmul.bf16.gmra.mxu0 %v1436
      %v1501 = vpop.f32.mrf.mxu0
      %v1502 = vadd.f32 0.0, %v1501
      %v1503 = vpop.f32.mrf.mxu0
      %v1504 = vadd.f32 0.0, %v1503
      %1505 = vmatmul.bf16.gmra.mxu0 %v1437
      %v1506 = vpop.f32.mrf.mxu0
      %v1507 = vadd.f32 0.0, %v1506
      %v1508 = vpop.f32.mrf.mxu0
      %v1509 = vadd.f32 0.0, %v1508
      %1510 = vmatmul.bf16.gmra.mxu0 %v1438
      %v1511 = vpop.f32.mrf.mxu0
      %v1512 = vadd.f32 0.0, %v1511
      %v1513 = vpop.f32.mrf.mxu0
      %v1514 = vadd.f32 0.0, %v1513
      %1515 = vmatmul.bf16.gmra.mxu0 %v1439
      %v1516 = vpop.f32.mrf.mxu0
      %v1517 = vadd.f32 0.0, %v1516
      %v1518 = vpop.f32.mrf.mxu0
      %v1519 = vadd.f32 0.0, %v1518
      %1520 = vdwg.mxu0
      %v1529 = vunpack.c.l.b16 %v1371
      %v1530 = vunpack.c.l.b16 %v1372
      %v1531 = vunpack.c.l.b16 %v1373
      %v1532 = vunpack.c.l.b16 %v1374
      %v1533 = vunpack.c.l.b16 %v1375
      %v1534 = vunpack.c.l.b16 %v1376
      %v1535 = vunpack.c.l.b16 %v1377
      %v1536 = vunpack.c.l.b16 %v1378
      %v1537 = vpack.c.b16 %v1530, %v1529
      %v1538 = vpack.c.b16 %v1532, %v1531
      %v1539 = vpack.c.b16 %v1534, %v1533
      %v1540 = vpack.c.b16 %v1536, %v1535
      %v1561 = vunpack.c.l.b16 %v1379
      %v1562 = vunpack.c.l.b16 %v1380
      %v1563 = vunpack.c.l.b16 %v1381
      %v1564 = vunpack.c.l.b16 %v1382
      %v1565 = vunpack.c.l.b16 %v1383
      %v1566 = vunpack.c.l.b16 %v1384
      %v1567 = vunpack.c.l.b16 %v1385
      %v1568 = vunpack.c.l.b16 %v1386
      %v1569 = vunpack.c.l.b16 %v1387
      %v1570 = vunpack.c.l.b16 %v1388
      %v1571 = vunpack.c.l.b16 %v1389
      %v1572 = vunpack.c.l.b16 %v1390
      %v1573 = vunpack.c.l.b16 %v1391
      %v1574 = vunpack.c.l.b16 %v1392
      %v1575 = vunpack.c.l.b16 %v1393
      %v1576 = vunpack.c.l.b16 %v1394
      %v1577 = vpack.c.b16 %v1562, %v1561
      %v1578 = vpack.c.b16 %v1564, %v1563
      %v1579 = vpack.c.b16 %v1566, %v1565
      %v1580 = vpack.c.b16 %v1568, %v1567
      %v1581 = vpack.c.b16 %v1570, %v1569
      %v1582 = vpack.c.b16 %v1572, %v1571
      %v1583 = vpack.c.b16 %v1574, %v1573
      %v1584 = vpack.c.b16 %v1576, %v1575
      %1593 = vmatpush.bf16.msra.mxu0 %v1584
      %1594 = vmatpush.bf16.msra.mxu0 %v1583
      %1595 = vmatpush.bf16.msra.mxu0 %v1582
      %1596 = vmatpush.bf16.msra.mxu0 %v1581
      %1597 = vmatpush.bf16.msra.mxu0 %v1580
      %1598 = vmatpush.bf16.msra.mxu0 %v1579
      %1599 = vmatpush.bf16.msra.mxu0 %v1578
      %1600 = vmatpush.bf16.msra.mxu0 %v1577
      %1601 = vmatmul.bf16.gmra.mxu0 %v1537
      %v1602 = vpop.f32.mrf.mxu0
      %v1603 = vadd.f32 %v1502, %v1602
      %v1604 = vpop.f32.mrf.mxu0
      %v1605 = vadd.f32 %v1504, %v1604
      %1606 = vmatmul.bf16.gmra.mxu0 %v1538
      %v1607 = vpop.f32.mrf.mxu0
      %v1608 = vadd.f32 %v1507, %v1607
      %v1609 = vpop.f32.mrf.mxu0
      %v1610 = vadd.f32 %v1509, %v1609
      %1611 = vmatmul.bf16.gmra.mxu0 %v1539
      %v1612 = vpop.f32.mrf.mxu0
      %v1613 = vadd.f32 %v1512, %v1612
      %v1614 = vpop.f32.mrf.mxu0
      %v1615 = vadd.f32 %v1514, %v1614
      %1616 = vmatmul.bf16.gmra.mxu0 %v1540
      %v1617 = vpop.f32.mrf.mxu0
      %v1618 = vadd.f32 %v1517, %v1617
      %v1619 = vpop.f32.mrf.mxu0
      %v1620 = vadd.f32 %v1519, %v1619
      %1621 = vdwg.mxu0
      %v1622 = vld [vmem:[#allocation2] sm:$0xf]
      %v1623 = vld [vmem:[#allocation2 + $0x4] sm:$0x1]
      %v1624 = vld [vmem:[#allocation2 + $0x8] sm:$0xf]
      %v1625 = vld [vmem:[#allocation2 + $0xc] sm:$0x1]
      %v1626 = vld [vmem:[#allocation2 + $0x10] sm:$0xf]
      %v1627 = vld [vmem:[#allocation2 + $0x14] sm:$0x1]
      %v1628 = vld [vmem:[#allocation2 + $0x18] sm:$0xf]
      %v1629 = vld [vmem:[#allocation2 + $0x1c] sm:$0x1]
      %v1630 = vld [vmem:[#allocation2 + $0x20] sm:$0xf]
      %v1631 = vld [vmem:[#allocation2 + $0x24] sm:$0x1]
      %v1632 = vld [vmem:[#allocation2 + $0x28] sm:$0xf]
      %v1633 = vld [vmem:[#allocation2 + $0x2c] sm:$0x1]
      %v1634 = vld [vmem:[#allocation2 + $0x30] sm:$0xf]
      %v1635 = vld [vmem:[#allocation2 + $0x34] sm:$0x1]
      %v1636 = vld [vmem:[#allocation2 + $0x38] sm:$0xf]
      %v1637 = vld [vmem:[#allocation2 + $0x3c] sm:$0x1]
      %vm1638 = vsmask.f32 3328
      %vm1639 = vsmask.f32 7440
      %vm1640 = vmor %vm1638, %vm1639
      %v1642 = vshrl.u32 %v1622, 16
      %v1644 = vrot.slane %v1642, 4
      %v1645 = vshll.u32 %v1622, 16
      %v1647 = vrot.slane %v1645, 5
      %v1648 = vor.u32 %v1644, %v1647
      %v1649 = vrot.slane %v1648, 4
      %v1651 = vshll.u32 %v1623, 16
      %v1653 = vrot.slane %v1651, 5
      %v1654 = vsel %vm1640, %v1649, %v1653
      %v1656 = vshrl.u32 %v1624, 16
      %v1658 = vrot.slane %v1656, 4
      %v1659 = vshll.u32 %v1624, 16
      %v1661 = vrot.slane %v1659, 5
      %v1662 = vor.u32 %v1658, %v1661
      %v1663 = vrot.slane %v1662, 4
      %v1665 = vshll.u32 %v1625, 16
      %v1667 = vrot.slane %v1665, 5
      %v1668 = vsel %vm1640, %v1663, %v1667
      %v1670 = vshrl.u32 %v1626, 16
      %v1672 = vrot.slane %v1670, 4
      %v1673 = vshll.u32 %v1626, 16
      %v1675 = vrot.slane %v1673, 5
      %v1676 = vor.u32 %v1672, %v1675
      %v1677 = vrot.slane %v1676, 4
      %v1679 = vshll.u32 %v1627, 16
      %v1681 = vrot.slane %v1679, 5
      %v1682 = vsel %vm1640, %v1677, %v1681
      %v1684 = vshrl.u32 %v1628, 16
      %v1686 = vrot.slane %v1684, 4
      %v1687 = vshll.u32 %v1628, 16
      %v1689 = vrot.slane %v1687, 5
      %v1690 = vor.u32 %v1686, %v1689
      %v1691 = vrot.slane %v1690, 4
      %v1693 = vshll.u32 %v1629, 16
      %v1695 = vrot.slane %v1693, 5
      %v1696 = vsel %vm1640, %v1691, %v1695
      %v1698 = vshrl.u32 %v1630, 16
      %v1700 = vrot.slane %v1698, 4
      %v1701 = vshll.u32 %v1630, 16
      %v1703 = vrot.slane %v1701, 5
      %v1704 = vor.u32 %v1700, %v1703
      %v1705 = vrot.slane %v1704, 4
      %v1707 = vshll.u32 %v1631, 16
      %v1709 = vrot.slane %v1707, 5
      %v1710 = vsel %vm1640, %v1705, %v1709
      %v1712 = vshrl.u32 %v1632, 16
      %v1714 = vrot.slane %v1712, 4
      %v1715 = vshll.u32 %v1632, 16
      %v1717 = vrot.slane %v1715, 5
      %v1718 = vor.u32 %v1714, %v1717
      %v1719 = vrot.slane %v1718, 4
      %v1721 = vshll.u32 %v1633, 16
      %v1723 = vrot.slane %v1721, 5
      %v1724 = vsel %vm1640, %v1719, %v1723
      %v1726 = vshrl.u32 %v1634, 16
      %v1728 = vrot.slane %v1726, 4
      %v1729 = vshll.u32 %v1634, 16
      %v1731 = vrot.slane %v1729, 5
      %v1732 = vor.u32 %v1728, %v1731
      %v1733 = vrot.slane %v1732, 4
      %v1735 = vshll.u32 %v1635, 16
      %v1737 = vrot.slane %v1735, 5
      %v1738 = vsel %vm1640, %v1733, %v1737
      %v1740 = vshrl.u32 %v1636, 16
      %v1742 = vrot.slane %v1740, 4
      %v1743 = vshll.u32 %v1636, 16
      %v1745 = vrot.slane %v1743, 5
      %v1746 = vor.u32 %v1742, %v1745
      %v1747 = vrot.slane %v1746, 4
      %v1749 = vshll.u32 %v1637, 16
      %v1751 = vrot.slane %v1749, 5
      %v1752 = vsel %vm1640, %v1747, %v1751
      %v1753 = vld [vmem:[%s6 + $0x80] sm:$0xf]
      %v1754 = vld [vmem:[%s6 + $0x84] sm:$0xf]
      %v1755 = vld [vmem:[%s6 + $0x88] sm:$0xf]
      %v1756 = vld [vmem:[%s6 + $0x8c] sm:$0xf]
      %v1757 = vld [vmem:[%s6 + $0x90] sm:$0xf]
      %v1758 = vld [vmem:[%s6 + $0x94] sm:$0xf]
      %v1759 = vld [vmem:[%s6 + $0x98] sm:$0xf]
      %v1760 = vld [vmem:[%s6 + $0x9c] sm:$0xf]
      %v1761 = vld [vmem:[%s6 + $0xa0] sm:$0xf]
      %v1762 = vld [vmem:[%s6 + $0xa4] sm:$0xf]
      %v1763 = vld [vmem:[%s6 + $0xa8] sm:$0xf]
      %v1764 = vld [vmem:[%s6 + $0xac] sm:$0xf]
      %v1765 = vld [vmem:[%s6 + $0xb0] sm:$0xf]
      %v1766 = vld [vmem:[%s6 + $0xb4] sm:$0xf]
      %v1767 = vld [vmem:[%s6 + $0xb8] sm:$0xf]
      %v1768 = vld [vmem:[%s6 + $0xbc] sm:$0xf]
      %v1769 = vunpack.c.l.b16 %v1654
      %v1770 = vunpack.c.l.b16 %v1668
      %v1771 = vunpack.c.l.b16 %v1682
      %v1772 = vunpack.c.l.b16 %v1696
      %v1773 = vunpack.c.l.b16 %v1710
      %v1774 = vunpack.c.l.b16 %v1724
      %v1775 = vunpack.c.l.b16 %v1738
      %v1776 = vunpack.c.l.b16 %v1752
      %v1777 = vpack.c.b16 %v1770, %v1769
      %v1778 = vpack.c.b16 %v1772, %v1771
      %v1779 = vpack.c.b16 %v1774, %v1773
      %v1780 = vpack.c.b16 %v1776, %v1775
      %v1801 = vunpack.c.l.b16 %v1753
      %v1802 = vunpack.c.l.b16 %v1754
      %v1803 = vunpack.c.l.b16 %v1755
      %v1804 = vunpack.c.l.b16 %v1756
      %v1805 = vunpack.c.l.b16 %v1757
      %v1806 = vunpack.c.l.b16 %v1758
      %v1807 = vunpack.c.l.b16 %v1759
      %v1808 = vunpack.c.l.b16 %v1760
      %v1809 = vunpack.c.l.b16 %v1761
      %v1810 = vunpack.c.l.b16 %v1762
      %v1811 = vunpack.c.l.b16 %v1763
      %v1812 = vunpack.c.l.b16 %v1764
      %v1813 = vunpack.c.l.b16 %v1765
      %v1814 = vunpack.c.l.b16 %v1766
      %v1815 = vunpack.c.l.b16 %v1767
      %v1816 = vunpack.c.l.b16 %v1768
      %v1817 = vpack.c.b16 %v1802, %v1801
      %v1818 = vpack.c.b16 %v1804, %v1803
      %v1819 = vpack.c.b16 %v1806, %v1805
      %v1820 = vpack.c.b16 %v1808, %v1807
      %v1821 = vpack.c.b16 %v1810, %v1809
      %v1822 = vpack.c.b16 %v1812, %v1811
      %v1823 = vpack.c.b16 %v1814, %v1813
      %v1824 = vpack.c.b16 %v1816, %v1815
      %1833 = vmatpush.bf16.msra.mxu0 %v1824
      %1834 = vmatpush.bf16.msra.mxu0 %v1823
      %1835 = vmatpush.bf16.msra.mxu0 %v1822
      %1836 = vmatpush.bf16.msra.mxu0 %v1821
      %1837 = vmatpush.bf16.msra.mxu0 %v1820
      %1838 = vmatpush.bf16.msra.mxu0 %v1819
      %1839 = vmatpush.bf16.msra.mxu0 %v1818
      %1840 = vmatpush.bf16.msra.mxu0 %v1817
      %1841 = vmatmul.bf16.gmra.mxu0 %v1777
      %v1842 = vpop.f32.mrf.mxu0
      %v1843 = vadd.f32 0.0, %v1842
      %v1844 = vpop.f32.mrf.mxu0
      %v1845 = vadd.f32 0.0, %v1844
      %1846 = vmatmul.bf16.gmra.mxu0 %v1778
      %v1847 = vpop.f32.mrf.mxu0
      %v1848 = vadd.f32 0.0, %v1847
      %v1849 = vpop.f32.mrf.mxu0
      %v1850 = vadd.f32 0.0, %v1849
      %1851 = vmatmul.bf16.gmra.mxu0 %v1779
      %v1852 = vpop.f32.mrf.mxu0
      %v1853 = vadd.f32 0.0, %v1852
      %v1854 = vpop.f32.mrf.mxu0
      %v1855 = vadd.f32 0.0, %v1854
      %1856 = vmatmul.bf16.gmra.mxu0 %v1780
      %v1857 = vpop.f32.mrf.mxu0
      %v1858 = vadd.f32 0.0, %v1857
      %v1859 = vpop.f32.mrf.mxu0
      %v1860 = vadd.f32 0.0, %v1859
      %1861 = vdwg.mxu0
      %v1862 = vadd.f32 %v1603, %v1843
      %v1863 = vadd.f32 %v1605, %v1845
      %v1864 = vadd.f32 %v1608, %v1848
      %v1865 = vadd.f32 %v1610, %v1850
      %v1866 = vadd.f32 %v1613, %v1853
      %v1867 = vadd.f32 %v1615, %v1855
      %v1868 = vadd.f32 %v1618, %v1858
      %v1869 = vadd.f32 %v1620, %v1860
      %s1870 = scalar_lea.vmem [#allocation2], 144
      %v1871 = vld [vmem:[%s1870] sm:$0xf]
      %v1872 = vld [vmem:[%s1870 + $0x8] sm:$0xf]
      %v1873 = vld [vmem:[%s1870 + $0x10] sm:$0xf]
      %v1874 = vld [vmem:[%s1870 + $0x18] sm:$0xf]
      %v1875 = vld [vmem:[%s1870 + $0x20] sm:$0xf]
      %v1876 = vld [vmem:[%s1870 + $0x28] sm:$0xf]
      %v1877 = vld [vmem:[%s1870 + $0x30] sm:$0xf]
      %v1878 = vld [vmem:[%s1870 + $0x38] sm:$0xf]
      %v1879 = vld [vmem:[%s6 + $0xc0] sm:$0xf]
      %v1880 = vld [vmem:[%s6 + $0xc4] sm:$0xf]
      %v1881 = vld [vmem:[%s6 + $0xc8] sm:$0xf]
      %v1882 = vld [vmem:[%s6 + $0xcc] sm:$0xf]
      %v1883 = vld [vmem:[%s6 + $0xd0] sm:$0xf]
      %v1884 = vld [vmem:[%s6 + $0xd4] sm:$0xf]
      %v1885 = vld [vmem:[%s6 + $0xd8] sm:$0xf]
      %v1886 = vld [vmem:[%s6 + $0xdc] sm:$0xf]
      %v1887 = vld [vmem:[%s6 + $0xe0] sm:$0xf]
      %v1888 = vld [vmem:[%s6 + $0xe4] sm:$0xf]
      %v1889 = vld [vmem:[%s6 + $0xe8] sm:$0xf]
      %v1890 = vld [vmem:[%s6 + $0xec] sm:$0xf]
      %v1891 = vld [vmem:[%s6 + $0xf0] sm:$0xf]
      %v1892 = vld [vmem:[%s6 + $0xf4] sm:$0xf]
      %v1893 = vld [vmem:[%s6 + $0xf8] sm:$0xf]
      %v1894 = vld [vmem:[%s6 + $0xfc] sm:$0xf]
      %v1903 = vunpack.c.l.b16 %v1871
      %v1904 = vunpack.c.l.b16 %v1872
      %v1905 = vunpack.c.l.b16 %v1873
      %v1906 = vunpack.c.l.b16 %v1874
      %v1907 = vunpack.c.l.b16 %v1875
      %v1908 = vunpack.c.l.b16 %v1876
      %v1909 = vunpack.c.l.b16 %v1877
      %v1910 = vunpack.c.l.b16 %v1878
      %v1911 = vpack.c.b16 %v1904, %v1903
      %v1912 = vpack.c.b16 %v1906, %v1905
      %v1913 = vpack.c.b16 %v1908, %v1907
      %v1914 = vpack.c.b16 %v1910, %v1909
      %v1935 = vunpack.c.l.b16 %v1879
      %v1936 = vunpack.c.l.b16 %v1880
      %v1937 = vunpack.c.l.b16 %v1881
      %v1938 = vunpack.c.l.b16 %v1882
      %v1939 = vunpack.c.l.b16 %v1883
      %v1940 = vunpack.c.l.b16 %v1884
      %v1941 = vunpack.c.l.b16 %v1885
      %v1942 = vunpack.c.l.b16 %v1886
      %v1943 = vunpack.c.l.b16 %v1887
      %v1944 = vunpack.c.l.b16 %v1888
      %v1945 = vunpack.c.l.b16 %v1889
      %v1946 = vunpack.c.l.b16 %v1890
      %v1947 = vunpack.c.l.b16 %v1891
      %v1948 = vunpack.c.l.b16 %v1892
      %v1949 = vunpack.c.l.b16 %v1893
      %v1950 = vunpack.c.l.b16 %v1894
      %v1951 = vpack.c.b16 %v1936, %v1935
      %v1952 = vpack.c.b16 %v1938, %v1937
      %v1953 = vpack.c.b16 %v1940, %v1939
      %v1954 = vpack.c.b16 %v1942, %v1941
      %v1955 = vpack.c.b16 %v1944, %v1943
      %v1956 = vpack.c.b16 %v1946, %v1945
      %v1957 = vpack.c.b16 %v1948, %v1947
      %v1958 = vpack.c.b16 %v1950, %v1949
      %1967 = vmatpush.bf16.msra.mxu0 %v1958
      %1968 = vmatpush.bf16.msra.mxu0 %v1957
      %1969 = vmatpush.bf16.msra.mxu0 %v1956
      %1970 = vmatpush.bf16.msra.mxu0 %v1955
      %1971 = vmatpush.bf16.msra.mxu0 %v1954
      %1972 = vmatpush.bf16.msra.mxu0 %v1953
      %1973 = vmatpush.bf16.msra.mxu0 %v1952
      %1974 = vmatpush.bf16.msra.mxu0 %v1951
      %1975 = vmatmul.bf16.gmra.mxu0 %v1911
      %v1976 = vpop.f32.mrf.mxu0
      %v1977 = vadd.f32 0.0, %v1976
      %v1978 = vpop.f32.mrf.mxu0
      %v1979 = vadd.f32 0.0, %v1978
      %1980 = vmatmul.bf16.gmra.mxu0 %v1912
      %v1981 = vpop.f32.mrf.mxu0
      %v1982 = vadd.f32 0.0, %v1981
      %v1983 = vpop.f32.mrf.mxu0
      %v1984 = vadd.f32 0.0, %v1983
      %1985 = vmatmul.bf16.gmra.mxu0 %v1913
      %v1986 = vpop.f32.mrf.mxu0
      %v1987 = vadd.f32 0.0, %v1986
      %v1988 = vpop.f32.mrf.mxu0
      %v1989 = vadd.f32 0.0, %v1988
      %1990 = vmatmul.bf16.gmra.mxu0 %v1914
      %v1991 = vpop.f32.mrf.mxu0
      %v1992 = vadd.f32 0.0, %v1991
      %v1993 = vpop.f32.mrf.mxu0
      %v1994 = vadd.f32 0.0, %v1993
      %1995 = vdwg.mxu0
      %v1996 = vadd.f32 %v1862, %v1977
      %v1997 = vadd.f32 %v1863, %v1979
      %v1998 = vadd.f32 %v1864, %v1982
      %v1999 = vadd.f32 %v1865, %v1984
      %v2000 = vadd.f32 %v1866, %v1987
      %v2001 = vadd.f32 %v1867, %v1989
      %v2002 = vadd.f32 %v1868, %v1992
      %v2003 = vadd.f32 %v1869, %v1994
      %s2004 = scalar_lea.vmem [#allocation2], 216
      %v2005 = vld [vmem:[%s2004] sm:$0xf]
      %v2006 = vld [vmem:[%s2004 + $0x8] sm:$0xf]
      %v2007 = vld [vmem:[%s2004 + $0x10] sm:$0xf]
      %v2008 = vld [vmem:[%s2004 + $0x18] sm:$0xf]
      %v2009 = vld [vmem:[%s2004 + $0x20] sm:$0xf]
      %v2010 = vld [vmem:[%s2004 + $0x28] sm:$0xf]
      %v2011 = vld [vmem:[%s2004 + $0x30] sm:$0xf]
      %v2012 = vld [vmem:[%s2004 + $0x38] sm:$0xf]
      %v2013 = vld [vmem:[%s6 + $0x100] sm:$0xf]
      %v2014 = vld [vmem:[%s6 + $0x104] sm:$0xf]
      %v2015 = vld [vmem:[%s6 + $0x108] sm:$0xf]
      %v2016 = vld [vmem:[%s6 + $0x10c] sm:$0xf]
      %v2017 = vld [vmem:[%s6 + $0x110] sm:$0xf]
      %v2018 = vld [vmem:[%s6 + $0x114] sm:$0xf]
      %v2019 = vld [vmem:[%s6 + $0x118] sm:$0xf]
      %v2020 = vld [vmem:[%s6 + $0x11c] sm:$0xf]
      %v2021 = vld [vmem:[%s6 + $0x120] sm:$0xf]
      %v2022 = vld [vmem:[%s6 + $0x124] sm:$0xf]
      %v2023 = vld [vmem:[%s6 + $0x128] sm:$0xf]
      %v2024 = vld [vmem:[%s6 + $0x12c] sm:$0xf]
      %v2025 = vld [vmem:[%s6 + $0x130] sm:$0xf]
      %v2026 = vld [vmem:[%s6 + $0x134] sm:$0xf]
      %v2027 = vld [vmem:[%s6 + $0x138] sm:$0xf]
      %v2028 = vld [vmem:[%s6 + $0x13c] sm:$0xf]
      %v2037 = vunpack.c.l.b16 %v2005
      %v2038 = vunpack.c.l.b16 %v2006
      %v2039 = vunpack.c.l.b16 %v2007
      %v2040 = vunpack.c.l.b16 %v2008
      %v2041 = vunpack.c.l.b16 %v2009
      %v2042 = vunpack.c.l.b16 %v2010
      %v2043 = vunpack.c.l.b16 %v2011
      %v2044 = vunpack.c.l.b16 %v2012
      %v2045 = vpack.c.b16 %v2038, %v2037
      %v2046 = vpack.c.b16 %v2040, %v2039
      %v2047 = vpack.c.b16 %v2042, %v2041
      %v2048 = vpack.c.b16 %v2044, %v2043
      %v2069 = vunpack.c.l.b16 %v2013
      %v2070 = vunpack.c.l.b16 %v2014
      %v2071 = vunpack.c.l.b16 %v2015
      %v2072 = vunpack.c.l.b16 %v2016
      %v2073 = vunpack.c.l.b16 %v2017
      %v2074 = vunpack.c.l.b16 %v2018
      %v2075 = vunpack.c.l.b16 %v2019
      %v2076 = vunpack.c.l.b16 %v2020
      %v2077 = vunpack.c.l.b16 %v2021
      %v2078 = vunpack.c.l.b16 %v2022
      %v2079 = vunpack.c.l.b16 %v2023
      %v2080 = vunpack.c.l.b16 %v2024
      %v2081 = vunpack.c.l.b16 %v2025
      %v2082 = vunpack.c.l.b16 %v2026
      %v2083 = vunpack.c.l.b16 %v2027
      %v2084 = vunpack.c.l.b16 %v2028
      %v2085 = vpack.c.b16 %v2070, %v2069
      %v2086 = vpack.c.b16 %v2072, %v2071
      %v2087 = vpack.c.b16 %v2074, %v2073
      %v2088 = vpack.c.b16 %v2076, %v2075
      %v2089 = vpack.c.b16 %v2078, %v2077
      %v2090 = vpack.c.b16 %v2080, %v2079
      %v2091 = vpack.c.b16 %v2082, %v2081
      %v2092 = vpack.c.b16 %v2084, %v2083
      %2101 = vmatpush.bf16.msra.mxu0 %v2092
      %2102 = vmatpush.bf16.msra.mxu0 %v2091
      %2103 = vmatpush.bf16.msra.mxu0 %v2090
      %2104 = vmatpush.bf16.msra.mxu0 %v2089
      %2105 = vmatpush.bf16.msra.mxu0 %v2088
      %2106 = vmatpush.bf16.msra.mxu0 %v2087
      %2107 = vmatpush.bf16.msra.mxu0 %v2086
      %2108 = vmatpush.bf16.msra.mxu0 %v2085
      %2109 = vmatmul.bf16.gmra.mxu0 %v2045
      %v2110 = vpop.f32.mrf.mxu0
      %v2111 = vadd.f32 0.0, %v2110
      %v2112 = vpop.f32.mrf.mxu0
      %v2113 = vadd.f32 0.0, %v2112
      %2114 = vmatmul.bf16.gmra.mxu0 %v2046
      %v2115 = vpop.f32.mrf.mxu0
      %v2116 = vadd.f32 0.0, %v2115
      %v2117 = vpop.f32.mrf.mxu0
      %v2118 = vadd.f32 0.0, %v2117
      %2119 = vmatmul.bf16.gmra.mxu0 %v2047
      %v2120 = vpop.f32.mrf.mxu0
      %v2121 = vadd.f32 0.0, %v2120
      %v2122 = vpop.f32.mrf.mxu0
      %v2123 = vadd.f32 0.0, %v2122
      %2124 = vmatmul.bf16.gmra.mxu0 %v2048
      %v2125 = vpop.f32.mrf.mxu0
      %v2126 = vadd.f32 0.0, %v2125
      %v2127 = vpop.f32.mrf.mxu0
      %v2128 = vadd.f32 0.0, %v2127
      %2129 = vdwg.mxu0
      %v2130 = vadd.f32 %v1996, %v2111
      %v2131 = vadd.f32 %v1997, %v2113
      %v2132 = vadd.f32 %v1998, %v2116
      %v2133 = vadd.f32 %v1999, %v2118
      %v2134 = vadd.f32 %v2000, %v2121
      %v2135 = vadd.f32 %v2001, %v2123
      %v2136 = vadd.f32 %v2002, %v2126
      %v2137 = vadd.f32 %v2003, %v2128
      %v2138 = vld [vmem:[%s1870] sm:$0xf]
      %v2139 = vld [vmem:[%s1870 + $0x4] sm:$0x1]
      %v2140 = vld [vmem:[%s1870 + $0x8] sm:$0xf]
      %v2141 = vld [vmem:[%s1870 + $0xc] sm:$0x1]
      %v2142 = vld [vmem:[%s1870 + $0x10] sm:$0xf]
      %v2143 = vld [vmem:[%s1870 + $0x14] sm:$0x1]
      %v2144 = vld [vmem:[%s1870 + $0x18] sm:$0xf]
      %v2145 = vld [vmem:[%s1870 + $0x1c] sm:$0x1]
      %v2146 = vld [vmem:[%s1870 + $0x20] sm:$0xf]
      %v2147 = vld [vmem:[%s1870 + $0x24] sm:$0x1]
      %v2148 = vld [vmem:[%s1870 + $0x28] sm:$0xf]
      %v2149 = vld [vmem:[%s1870 + $0x2c] sm:$0x1]
      %v2150 = vld [vmem:[%s1870 + $0x30] sm:$0xf]
      %v2151 = vld [vmem:[%s1870 + $0x34] sm:$0x1]
      %v2152 = vld [vmem:[%s1870 + $0x38] sm:$0xf]
      %v2153 = vld [vmem:[%s1870 + $0x3c] sm:$0x1]
      %v2155 = vshrl.u32 %v2138, 16
      %v2157 = vrot.slane %v2155, 4
      %v2158 = vshll.u32 %v2138, 16
      %v2160 = vrot.slane %v2158, 5
      %v2161 = vor.u32 %v2157, %v2160
      %v2162 = vrot.slane %v2161, 4
      %v2164 = vshll.u32 %v2139, 16
      %v2166 = vrot.slane %v2164, 5
      %v2167 = vsel %vm1640, %v2162, %v2166
      %v2169 = vshrl.u32 %v2140, 16
      %v2171 = vrot.slane %v2169, 4
      %v2172 = vshll.u32 %v2140, 16
      %v2174 = vrot.slane %v2172, 5
      %v2175 = vor.u32 %v2171, %v2174
      %v2176 = vrot.slane %v2175, 4
      %v2178 = vshll.u32 %v2141, 16
      %v2180 = vrot.slane %v2178, 5
      %v2181 = vsel %vm1640, %v2176, %v2180
      %v2183 = vshrl.u32 %v2142, 16
      %v2185 = vrot.slane %v2183, 4
      %v2186 = vshll.u32 %v2142, 16
      %v2188 = vrot.slane %v2186, 5
      %v2189 = vor.u32 %v2185, %v2188
      %v2190 = vrot.slane %v2189, 4
      %v2192 = vshll.u32 %v2143, 16
      %v2194 = vrot.slane %v2192, 5
      %v2195 = vsel %vm1640, %v2190, %v2194
      %v2197 = vshrl.u32 %v2144, 16
      %v2199 = vrot.slane %v2197, 4
      %v2200 = vshll.u32 %v2144, 16
      %v2202 = vrot.slane %v2200, 5
      %v2203 = vor.u32 %v2199, %v2202
      %v2204 = vrot.slane %v2203, 4
      %v2206 = vshll.u32 %v2145, 16
      %v2208 = vrot.slane %v2206, 5
      %v2209 = vsel %vm1640, %v2204, %v2208
      %v2211 = vshrl.u32 %v2146, 16
      %v2213 = vrot.slane %v2211, 4
      %v2214 = vshll.u32 %v2146, 16
      %v2216 = vrot.slane %v2214, 5
      %v2217 = vor.u32 %v2213, %v2216
      %v2218 = vrot.slane %v2217, 4
      %v2220 = vshll.u32 %v2147, 16
      %v2222 = vrot.slane %v2220, 5
      %v2223 = vsel %vm1640, %v2218, %v2222
      %v2225 = vshrl.u32 %v2148, 16
      %v2227 = vrot.slane %v2225, 4
      %v2228 = vshll.u32 %v2148, 16
      %v2230 = vrot.slane %v2228, 5
      %v2231 = vor.u32 %v2227, %v2230
      %v2232 = vrot.slane %v2231, 4
      %v2234 = vshll.u32 %v2149, 16
      %v2236 = vrot.slane %v2234, 5
      %v2237 = vsel %vm1640, %v2232, %v2236
      %v2239 = vshrl.u32 %v2150, 16
      %v2241 = vrot.slane %v2239, 4
      %v2242 = vshll.u32 %v2150, 16
      %v2244 = vrot.slane %v2242, 5
      %v2245 = vor.u32 %v2241, %v2244
      %v2246 = vrot.slane %v2245, 4
      %v2248 = vshll.u32 %v2151, 16
      %v2250 = vrot.slane %v2248, 5
      %v2251 = vsel %vm1640, %v2246, %v2250
      %v2253 = vshrl.u32 %v2152, 16
      %v2255 = vrot.slane %v2253, 4
      %v2256 = vshll.u32 %v2152, 16
      %v2258 = vrot.slane %v2256, 5
      %v2259 = vor.u32 %v2255, %v2258
      %v2260 = vrot.slane %v2259, 4
      %v2262 = vshll.u32 %v2153, 16
      %v2264 = vrot.slane %v2262, 5
      %v2265 = vsel %vm1640, %v2260, %v2264
      %v2266 = vld [vmem:[%s6 + $0x140] sm:$0xf]
      %v2267 = vld [vmem:[%s6 + $0x144] sm:$0xf]
      %v2268 = vld [vmem:[%s6 + $0x148] sm:$0xf]
      %v2269 = vld [vmem:[%s6 + $0x14c] sm:$0xf]
      %v2270 = vld [vmem:[%s6 + $0x150] sm:$0xf]
      %v2271 = vld [vmem:[%s6 + $0x154] sm:$0xf]
      %v2272 = vld [vmem:[%s6 + $0x158] sm:$0xf]
      %v2273 = vld [vmem:[%s6 + $0x15c] sm:$0xf]
      %v2274 = vld [vmem:[%s6 + $0x160] sm:$0xf]
      %v2275 = vld [vmem:[%s6 + $0x164] sm:$0xf]
      %v2276 = vld [vmem:[%s6 + $0x168] sm:$0xf]
      %v2277 = vld [vmem:[%s6 + $0x16c] sm:$0xf]
      %v2278 = vld [vmem:[%s6 + $0x170] sm:$0xf]
      %v2279 = vld [vmem:[%s6 + $0x174] sm:$0xf]
      %v2280 = vld [vmem:[%s6 + $0x178] sm:$0xf]
      %v2281 = vld [vmem:[%s6 + $0x17c] sm:$0xf]
      %v2282 = vunpack.c.l.b16 %v2167
      %v2283 = vunpack.c.l.b16 %v2181
      %v2284 = vunpack.c.l.b16 %v2195
      %v2285 = vunpack.c.l.b16 %v2209
      %v2286 = vunpack.c.l.b16 %v2223
      %v2287 = vunpack.c.l.b16 %v2237
      %v2288 = vunpack.c.l.b16 %v2251
      %v2289 = vunpack.c.l.b16 %v2265
      %v2290 = vpack.c.b16 %v2283, %v2282
      %v2291 = vpack.c.b16 %v2285, %v2284
      %v2292 = vpack.c.b16 %v2287, %v2286
      %v2293 = vpack.c.b16 %v2289, %v2288
      %v2314 = vunpack.c.l.b16 %v2266
      %v2315 = vunpack.c.l.b16 %v2267
      %v2316 = vunpack.c.l.b16 %v2268
      %v2317 = vunpack.c.l.b16 %v2269
      %v2318 = vunpack.c.l.b16 %v2270
      %v2319 = vunpack.c.l.b16 %v2271
      %v2320 = vunpack.c.l.b16 %v2272
      %v2321 = vunpack.c.l.b16 %v2273
      %v2322 = vunpack.c.l.b16 %v2274
      %v2323 = vunpack.c.l.b16 %v2275
      %v2324 = vunpack.c.l.b16 %v2276
      %v2325 = vunpack.c.l.b16 %v2277
      %v2326 = vunpack.c.l.b16 %v2278
      %v2327 = vunpack.c.l.b16 %v2279
      %v2328 = vunpack.c.l.b16 %v2280
      %v2329 = vunpack.c.l.b16 %v2281
      %v2330 = vpack.c.b16 %v2315, %v2314
      %v2331 = vpack.c.b16 %v2317, %v2316
      %v2332 = vpack.c.b16 %v2319, %v2318
      %v2333 = vpack.c.b16 %v2321, %v2320
      %v2334 = vpack.c.b16 %v2323, %v2322
      %v2335 = vpack.c.b16 %v2325, %v2324
      %v2336 = vpack.c.b16 %v2327, %v2326
      %v2337 = vpack.c.b16 %v2329, %v2328
      %2346 = vmatpush.bf16.msra.mxu0 %v2337
      %2347 = vmatpush.bf16.msra.mxu0 %v2336
      %2348 = vmatpush.bf16.msra.mxu0 %v2335
      %2349 = vmatpush.bf16.msra.mxu0 %v2334
      %2350 = vmatpush.bf16.msra.mxu0 %v2333
      %2351 = vmatpush.bf16.msra.mxu0 %v2332
      %2352 = vmatpush.bf16.msra.mxu0 %v2331
      %2353 = vmatpush.bf16.msra.mxu0 %v2330
      %2354 = vmatmul.bf16.gmra.mxu0 %v2290
      %v2355 = vpop.f32.mrf.mxu0
      %v2356 = vadd.f32 0.0, %v2355
      %v2357 = vpop.f32.mrf.mxu0
      %v2358 = vadd.f32 0.0, %v2357
      %2359 = vmatmul.bf16.gmra.mxu0 %v2291
      %v2360 = vpop.f32.mrf.mxu0
      %v2361 = vadd.f32 0.0, %v2360
      %v2362 = vpop.f32.mrf.mxu0
      %v2363 = vadd.f32 0.0, %v2362
      %2364 = vmatmul.bf16.gmra.mxu0 %v2292
      %v2365 = vpop.f32.mrf.mxu0
      %v2366 = vadd.f32 0.0, %v2365
      %v2367 = vpop.f32.mrf.mxu0
      %v2368 = vadd.f32 0.0, %v2367
      %2369 = vmatmul.bf16.gmra.mxu0 %v2293
      %v2370 = vpop.f32.mrf.mxu0
      %v2371 = vadd.f32 0.0, %v2370
      %v2372 = vpop.f32.mrf.mxu0
      %v2373 = vadd.f32 0.0, %v2372
      %2374 = vdwg.mxu0
      %v2375 = vadd.f32 %v2130, %v2356
      %v2376 = vadd.f32 %v2131, %v2358
      %v2377 = vadd.f32 %v2132, %v2361
      %v2378 = vadd.f32 %v2133, %v2363
      %v2379 = vadd.f32 %v2134, %v2366
      %v2380 = vadd.f32 %v2135, %v2368
      %v2381 = vadd.f32 %v2136, %v2371
      %v2382 = vadd.f32 %v2137, %v2373
      %s2383 = scalar_lea.vmem [#allocation2], 8
      %v2384 = vld [vmem:[%s2383] sm:$0xf]
      %v2385 = vld [vmem:[%s2383 + $0x8] sm:$0xf]
      %v2386 = vld [vmem:[%s2383 + $0x10] sm:$0xf]
      %v2387 = vld [vmem:[%s2383 + $0x18] sm:$0xf]
      %v2388 = vld [vmem:[%s2383 + $0x20] sm:$0xf]
      %v2389 = vld [vmem:[%s2383 + $0x28] sm:$0xf]
      %v2390 = vld [vmem:[%s2383 + $0x30] sm:$0xf]
      %v2391 = vld [vmem:[%s2383 + $0x38] sm:$0xf]
      %v2392 = vld [vmem:[%s6 + $0x180] sm:$0xf]
      %v2393 = vld [vmem:[%s6 + $0x184] sm:$0xf]
      %v2394 = vld [vmem:[%s6 + $0x188] sm:$0xf]
      %v2395 = vld [vmem:[%s6 + $0x18c] sm:$0xf]
      %v2396 = vld [vmem:[%s6 + $0x190] sm:$0xf]
      %v2397 = vld [vmem:[%s6 + $0x194] sm:$0xf]
      %v2398 = vld [vmem:[%s6 + $0x198] sm:$0xf]
      %v2399 = vld [vmem:[%s6 + $0x19c] sm:$0xf]
      %v2400 = vld [vmem:[%s6 + $0x1a0] sm:$0xf]
      %v2401 = vld [vmem:[%s6 + $0x1a4] sm:$0xf]
      %v2402 = vld [vmem:[%s6 + $0x1a8] sm:$0xf]
      %v2403 = vld [vmem:[%s6 + $0x1ac] sm:$0xf]
      %v2404 = vld [vmem:[%s6 + $0x1b0] sm:$0xf]
      %v2405 = vld [vmem:[%s6 + $0x1b4] sm:$0xf]
      %v2406 = vld [vmem:[%s6 + $0x1b8] sm:$0xf]
      %v2407 = vld [vmem:[%s6 + $0x1bc] sm:$0xf]
      %v2416 = vunpack.c.l.b16 %v2384
      %v2417 = vunpack.c.l.b16 %v2385
      %v2418 = vunpack.c.l.b16 %v2386
      %v2419 = vunpack.c.l.b16 %v2387
      %v2420 = vunpack.c.l.b16 %v2388
      %v2421 = vunpack.c.l.b16 %v2389
      %v2422 = vunpack.c.l.b16 %v2390
      %v2423 = vunpack.c.l.b16 %v2391
      %v2424 = vpack.c.b16 %v2417, %v2416
      %v2425 = vpack.c.b16 %v2419, %v2418
      %v2426 = vpack.c.b16 %v2421, %v2420
      %v2427 = vpack.c.b16 %v2423, %v2422
      %v2448 = vunpack.c.l.b16 %v2392
      %v2449 = vunpack.c.l.b16 %v2393
      %v2450 = vunpack.c.l.b16 %v2394
      %v2451 = vunpack.c.l.b16 %v2395
      %v2452 = vunpack.c.l.b16 %v2396
      %v2453 = vunpack.c.l.b16 %v2397
      %v2454 = vunpack.c.l.b16 %v2398
      %v2455 = vunpack.c.l.b16 %v2399
      %v2456 = vunpack.c.l.b16 %v2400
      %v2457 = vunpack.c.l.b16 %v2401
      %v2458 = vunpack.c.l.b16 %v2402
      %v2459 = vunpack.c.l.b16 %v2403
      %v2460 = vunpack.c.l.b16 %v2404
      %v2461 = vunpack.c.l.b16 %v2405
      %v2462 = vunpack.c.l.b16 %v2406
      %v2463 = vunpack.c.l.b16 %v2407
      %v2464 = vpack.c.b16 %v2449, %v2448
      %v2465 = vpack.c.b16 %v2451, %v2450
      %v2466 = vpack.c.b16 %v2453, %v2452
      %v2467 = vpack.c.b16 %v2455, %v2454
      %v2468 = vpack.c.b16 %v2457, %v2456
      %v2469 = vpack.c.b16 %v2459, %v2458
      %v2470 = vpack.c.b16 %v2461, %v2460
      %v2471 = vpack.c.b16 %v2463, %v2462
      %2480 = vmatpush.bf16.msra.mxu0 %v2471
      %2481 = vmatpush.bf16.msra.mxu0 %v2470
      %2482 = vmatpush.bf16.msra.mxu0 %v2469
      %2483 = vmatpush.bf16.msra.mxu0 %v2468
      %2484 = vmatpush.bf16.msra.mxu0 %v2467
      %2485 = vmatpush.bf16.msra.mxu0 %v2466
      %2486 = vmatpush.bf16.msra.mxu0 %v2465
      %2487 = vmatpush.bf16.msra.mxu0 %v2464
      %2488 = vmatmul.bf16.gmra.mxu0 %v2424
      %v2489 = vpop.f32.mrf.mxu0
      %v2490 = vadd.f32 0.0, %v2489
      %v2491 = vpop.f32.mrf.mxu0
      %v2492 = vadd.f32 0.0, %v2491
      %2493 = vmatmul.bf16.gmra.mxu0 %v2425
      %v2494 = vpop.f32.mrf.mxu0
      %v2495 = vadd.f32 0.0, %v2494
      %v2496 = vpop.f32.mrf.mxu0
      %v2497 = vadd.f32 0.0, %v2496
      %2498 = vmatmul.bf16.gmra.mxu0 %v2426
      %v2499 = vpop.f32.mrf.mxu0
      %v2500 = vadd.f32 0.0, %v2499
      %v2501 = vpop.f32.mrf.mxu0
      %v2502 = vadd.f32 0.0, %v2501
      %2503 = vmatmul.bf16.gmra.mxu0 %v2427
      %v2504 = vpop.f32.mrf.mxu0
      %v2505 = vadd.f32 0.0, %v2504
      %v2506 = vpop.f32.mrf.mxu0
      %v2507 = vadd.f32 0.0, %v2506
      %2508 = vdwg.mxu0
      %v2509 = vadd.f32 %v2375, %v2490
      %v2510 = vadd.f32 %v2376, %v2492
      %v2511 = vadd.f32 %v2377, %v2495
      %v2512 = vadd.f32 %v2378, %v2497
      %v2513 = vadd.f32 %v2379, %v2500
      %v2514 = vadd.f32 %v2380, %v2502
      %v2515 = vadd.f32 %v2381, %v2505
      %v2516 = vadd.f32 %v2382, %v2507
      %s2517 = scalar_lea.vmem [#allocation2], 80
      %v2518 = vld [vmem:[%s2517] sm:$0xf]
      %v2519 = vld [vmem:[%s2517 + $0x8] sm:$0xf]
      %v2520 = vld [vmem:[%s2517 + $0x10] sm:$0xf]
      %v2521 = vld [vmem:[%s2517 + $0x18] sm:$0xf]
      %v2522 = vld [vmem:[%s2517 + $0x20] sm:$0xf]
      %v2523 = vld [vmem:[%s2517 + $0x28] sm:$0xf]
      %v2524 = vld [vmem:[%s2517 + $0x30] sm:$0xf]
      %v2525 = vld [vmem:[%s2517 + $0x38] sm:$0xf]
      %v2526 = vld [vmem:[%s6 + $0x1c0] sm:$0xf]
      %v2527 = vld [vmem:[%s6 + $0x1c4] sm:$0xf]
      %v2528 = vld [vmem:[%s6 + $0x1c8] sm:$0xf]
      %v2529 = vld [vmem:[%s6 + $0x1cc] sm:$0xf]
      %v2530 = vld [vmem:[%s6 + $0x1d0] sm:$0xf]
      %v2531 = vld [vmem:[%s6 + $0x1d4] sm:$0xf]
      %v2532 = vld [vmem:[%s6 + $0x1d8] sm:$0xf]
      %v2533 = vld [vmem:[%s6 + $0x1dc] sm:$0xf]
      %v2534 = vld [vmem:[%s6 + $0x1e0] sm:$0xf]
      %v2535 = vld [vmem:[%s6 + $0x1e4] sm:$0xf]
      %v2536 = vld [vmem:[%s6 + $0x1e8] sm:$0xf]
      %v2537 = vld [vmem:[%s6 + $0x1ec] sm:$0xf]
      %v2538 = vld [vmem:[%s6 + $0x1f0] sm:$0xf]
      %v2539 = vld [vmem:[%s6 + $0x1f4] sm:$0xf]
      %v2540 = vld [vmem:[%s6 + $0x1f8] sm:$0xf]
      %v2541 = vld [vmem:[%s6 + $0x1fc] sm:$0xf]
      %v2550 = vunpack.c.l.b16 %v2518
      %v2551 = vunpack.c.l.b16 %v2519
      %v2552 = vunpack.c.l.b16 %v2520
      %v2553 = vunpack.c.l.b16 %v2521
      %v2554 = vunpack.c.l.b16 %v2522
      %v2555 = vunpack.c.l.b16 %v2523
      %v2556 = vunpack.c.l.b16 %v2524
      %v2557 = vunpack.c.l.b16 %v2525
      %v2558 = vpack.c.b16 %v2551, %v2550
      %v2559 = vpack.c.b16 %v2553, %v2552
      %v2560 = vpack.c.b16 %v2555, %v2554
      %v2561 = vpack.c.b16 %v2557, %v2556
      %v2582 = vunpack.c.l.b16 %v2526
      %v2583 = vunpack.c.l.b16 %v2527
      %v2584 = vunpack.c.l.b16 %v2528
      %v2585 = vunpack.c.l.b16 %v2529
      %v2586 = vunpack.c.l.b16 %v2530
      %v2587 = vunpack.c.l.b16 %v2531
      %v2588 = vunpack.c.l.b16 %v2532
      %v2589 = vunpack.c.l.b16 %v2533
      %v2590 = vunpack.c.l.b16 %v2534
      %v2591 = vunpack.c.l.b16 %v2535
      %v2592 = vunpack.c.l.b16 %v2536
      %v2593 = vunpack.c.l.b16 %v2537
      %v2594 = vunpack.c.l.b16 %v2538
      %v2595 = vunpack.c.l.b16 %v2539
      %v2596 = vunpack.c.l.b16 %v2540
      %v2597 = vunpack.c.l.b16 %v2541
      %v2598 = vpack.c.b16 %v2583, %v2582
      %v2599 = vpack.c.b16 %v2585, %v2584
      %v2600 = vpack.c.b16 %v2587, %v2586
      %v2601 = vpack.c.b16 %v2589, %v2588
      %v2602 = vpack.c.b16 %v2591, %v2590
      %v2603 = vpack.c.b16 %v2593, %v2592
      %v2604 = vpack.c.b16 %v2595, %v2594
      %v2605 = vpack.c.b16 %v2597, %v2596
      %2614 = vmatpush.bf16.msra.mxu0 %v2605
      %2615 = vmatpush.bf16.msra.mxu0 %v2604
      %2616 = vmatpush.bf16.msra.mxu0 %v2603
      %2617 = vmatpush.bf16.msra.mxu0 %v2602
      %2618 = vmatpush.bf16.msra.mxu0 %v2601
      %2619 = vmatpush.bf16.msra.mxu0 %v2600
      %2620 = vmatpush.bf16.msra.mxu0 %v2599
      %2621 = vmatpush.bf16.msra.mxu0 %v2598
      %2622 = vmatmul.bf16.gmra.mxu0 %v2558
      %v2623 = vpop.f32.mrf.mxu0
      %v2624 = vadd.f32 0.0, %v2623
      %v2625 = vpop.f32.mrf.mxu0
      %v2626 = vadd.f32 0.0, %v2625
      %2627 = vmatmul.bf16.gmra.mxu0 %v2559
      %v2628 = vpop.f32.mrf.mxu0
      %v2629 = vadd.f32 0.0, %v2628
      %v2630 = vpop.f32.mrf.mxu0
      %v2631 = vadd.f32 0.0, %v2630
      %2632 = vmatmul.bf16.gmra.mxu0 %v2560
      %v2633 = vpop.f32.mrf.mxu0
      %v2634 = vadd.f32 0.0, %v2633
      %v2635 = vpop.f32.mrf.mxu0
      %v2636 = vadd.f32 0.0, %v2635
      %2637 = vmatmul.bf16.gmra.mxu0 %v2561
      %v2638 = vpop.f32.mrf.mxu0
      %v2639 = vadd.f32 0.0, %v2638
      %v2640 = vpop.f32.mrf.mxu0
      %v2641 = vadd.f32 0.0, %v2640
      %2642 = vdwg.mxu0
      %v2643 = vadd.f32 %v2509, %v2624
      %v2644 = vadd.f32 %v2510, %v2626
      %v2645 = vadd.f32 %v2511, %v2629
      %v2646 = vadd.f32 %v2512, %v2631
      %v2647 = vadd.f32 %v2513, %v2634
      %v2648 = vadd.f32 %v2514, %v2636
      %v2649 = vadd.f32 %v2515, %v2639
      %v2650 = vadd.f32 %v2516, %v2641
      %v2651 = vld [vmem:[%s2383] sm:$0xf]
      %v2652 = vld [vmem:[%s2383 + $0x4] sm:$0x1]
      %v2653 = vld [vmem:[%s2383 + $0x8] sm:$0xf]
      %v2654 = vld [vmem:[%s2383 + $0xc] sm:$0x1]
      %v2655 = vld [vmem:[%s2383 + $0x10] sm:$0xf]
      %v2656 = vld [vmem:[%s2383 + $0x14] sm:$0x1]
      %v2657 = vld [vmem:[%s2383 + $0x18] sm:$0xf]
      %v2658 = vld [vmem:[%s2383 + $0x1c] sm:$0x1]
      %v2659 = vld [vmem:[%s2383 + $0x20] sm:$0xf]
      %v2660 = vld [vmem:[%s2383 + $0x24] sm:$0x1]
      %v2661 = vld [vmem:[%s2383 + $0x28] sm:$0xf]
      %v2662 = vld [vmem:[%s2383 + $0x2c] sm:$0x1]
      %v2663 = vld [vmem:[%s2383 + $0x30] sm:$0xf]
      %v2664 = vld [vmem:[%s2383 + $0x34] sm:$0x1]
      %v2665 = vld [vmem:[%s2383 + $0x38] sm:$0xf]
      %v2666 = vld [vmem:[%s2383 + $0x3c] sm:$0x1]
      %v2668 = vshrl.u32 %v2651, 16
      %v2670 = vrot.slane %v2668, 4
      %v2671 = vshll.u32 %v2651, 16
      %v2673 = vrot.slane %v2671, 5
      %v2674 = vor.u32 %v2670, %v2673
      %v2675 = vrot.slane %v2674, 4
      %v2677 = vshll.u32 %v2652, 16
      %v2679 = vrot.slane %v2677, 5
      %v2680 = vsel %vm1640, %v2675, %v2679
      %v2682 = vshrl.u32 %v2653, 16
      %v2684 = vrot.slane %v2682, 4
      %v2685 = vshll.u32 %v2653, 16
      %v2687 = vrot.slane %v2685, 5
      %v2688 = vor.u32 %v2684, %v2687
      %v2689 = vrot.slane %v2688, 4
      %v2691 = vshll.u32 %v2654, 16
      %v2693 = vrot.slane %v2691, 5
      %v2694 = vsel %vm1640, %v2689, %v2693
      %v2696 = vshrl.u32 %v2655, 16
      %v2698 = vrot.slane %v2696, 4
      %v2699 = vshll.u32 %v2655, 16
      %v2701 = vrot.slane %v2699, 5
      %v2702 = vor.u32 %v2698, %v2701
      %v2703 = vrot.slane %v2702, 4
      %v2705 = vshll.u32 %v2656, 16
      %v2707 = vrot.slane %v2705, 5
      %v2708 = vsel %vm1640, %v2703, %v2707
      %v2710 = vshrl.u32 %v2657, 16
      %v2712 = vrot.slane %v2710, 4
      %v2713 = vshll.u32 %v2657, 16
      %v2715 = vrot.slane %v2713, 5
      %v2716 = vor.u32 %v2712, %v2715
      %v2717 = vrot.slane %v2716, 4
      %v2719 = vshll.u32 %v2658, 16
      %v2721 = vrot.slane %v2719, 5
      %v2722 = vsel %vm1640, %v2717, %v2721
      %v2724 = vshrl.u32 %v2659, 16
      %v2726 = vrot.slane %v2724, 4
      %v2727 = vshll.u32 %v2659, 16
      %v2729 = vrot.slane %v2727, 5
      %v2730 = vor.u32 %v2726, %v2729
      %v2731 = vrot.slane %v2730, 4
      %v2733 = vshll.u32 %v2660, 16
      %v2735 = vrot.slane %v2733, 5
      %v2736 = vsel %vm1640, %v2731, %v2735
      %v2738 = vshrl.u32 %v2661, 16
      %v2740 = vrot.slane %v2738, 4
      %v2741 = vshll.u32 %v2661, 16
      %v2743 = vrot.slane %v2741, 5
      %v2744 = vor.u32 %v2740, %v2743
      %v2745 = vrot.slane %v2744, 4
      %v2747 = vshll.u32 %v2662, 16
      %v2749 = vrot.slane %v2747, 5
      %v2750 = vsel %vm1640, %v2745, %v2749
      %v2752 = vshrl.u32 %v2663, 16
      %v2754 = vrot.slane %v2752, 4
      %v2755 = vshll.u32 %v2663, 16
      %v2757 = vrot.slane %v2755, 5
      %v2758 = vor.u32 %v2754, %v2757
      %v2759 = vrot.slane %v2758, 4
      %v2761 = vshll.u32 %v2664, 16
      %v2763 = vrot.slane %v2761, 5
      %v2764 = vsel %vm1640, %v2759, %v2763
      %v2766 = vshrl.u32 %v2665, 16
      %v2768 = vrot.slane %v2766, 4
      %v2769 = vshll.u32 %v2665, 16
      %v2771 = vrot.slane %v2769, 5
      %v2772 = vor.u32 %v2768, %v2771
      %v2773 = vrot.slane %v2772, 4
      %v2775 = vshll.u32 %v2666, 16
      %v2777 = vrot.slane %v2775, 5
      %v2778 = vsel %vm1640, %v2773, %v2777
      %v2779 = vld [vmem:[%s6 + $0x200] sm:$0xf]
      %v2780 = vld [vmem:[%s6 + $0x204] sm:$0xf]
      %v2781 = vld [vmem:[%s6 + $0x208] sm:$0xf]
      %v2782 = vld [vmem:[%s6 + $0x20c] sm:$0xf]
      %v2783 = vld [vmem:[%s6 + $0x210] sm:$0xf]
      %v2784 = vld [vmem:[%s6 + $0x214] sm:$0xf]
      %v2785 = vld [vmem:[%s6 + $0x218] sm:$0xf]
      %v2786 = vld [vmem:[%s6 + $0x21c] sm:$0xf]
      %v2787 = vld [vmem:[%s6 + $0x220] sm:$0xf]
      %v2788 = vld [vmem:[%s6 + $0x224] sm:$0xf]
      %v2789 = vld [vmem:[%s6 + $0x228] sm:$0xf]
      %v2790 = vld [vmem:[%s6 + $0x22c] sm:$0xf]
      %v2791 = vld [vmem:[%s6 + $0x230] sm:$0xf]
      %v2792 = vld [vmem:[%s6 + $0x234] sm:$0xf]
      %v2793 = vld [vmem:[%s6 + $0x238] sm:$0xf]
      %v2794 = vld [vmem:[%s6 + $0x23c] sm:$0xf]
      %v2795 = vunpack.c.l.b16 %v2680
      %v2796 = vunpack.c.l.b16 %v2694
      %v2797 = vunpack.c.l.b16 %v2708
      %v2798 = vunpack.c.l.b16 %v2722
      %v2799 = vunpack.c.l.b16 %v2736
      %v2800 = vunpack.c.l.b16 %v2750
      %v2801 = vunpack.c.l.b16 %v2764
      %v2802 = vunpack.c.l.b16 %v2778
      %v2803 = vpack.c.b16 %v2796, %v2795
      %v2804 = vpack.c.b16 %v2798, %v2797
      %v2805 = vpack.c.b16 %v2800, %v2799
      %v2806 = vpack.c.b16 %v2802, %v2801
      %v2827 = vunpack.c.l.b16 %v2779
      %v2828 = vunpack.c.l.b16 %v2780
      %v2829 = vunpack.c.l.b16 %v2781
      %v2830 = vunpack.c.l.b16 %v2782
      %v2831 = vunpack.c.l.b16 %v2783
      %v2832 = vunpack.c.l.b16 %v2784
      %v2833 = vunpack.c.l.b16 %v2785
      %v2834 = vunpack.c.l.b16 %v2786
      %v2835 = vunpack.c.l.b16 %v2787
      %v2836 = vunpack.c.l.b16 %v2788
      %v2837 = vunpack.c.l.b16 %v2789
      %v2838 = vunpack.c.l.b16 %v2790
      %v2839 = vunpack.c.l.b16 %v2791
      %v2840 = vunpack.c.l.b16 %v2792
      %v2841 = vunpack.c.l.b16 %v2793
      %v2842 = vunpack.c.l.b16 %v2794
      %v2843 = vpack.c.b16 %v2828, %v2827
      %v2844 = vpack.c.b16 %v2830, %v2829
      %v2845 = vpack.c.b16 %v2832, %v2831
      %v2846 = vpack.c.b16 %v2834, %v2833
      %v2847 = vpack.c.b16 %v2836, %v2835
      %v2848 = vpack.c.b16 %v2838, %v2837
      %v2849 = vpack.c.b16 %v2840, %v2839
      %v2850 = vpack.c.b16 %v2842, %v2841
      %2859 = vmatpush.bf16.msra.mxu0 %v2850
      %2860 = vmatpush.bf16.msra.mxu0 %v2849
      %2861 = vmatpush.bf16.msra.mxu0 %v2848
      %2862 = vmatpush.bf16.msra.mxu0 %v2847
      %2863 = vmatpush.bf16.msra.mxu0 %v2846
      %2864 = vmatpush.bf16.msra.mxu0 %v2845
      %2865 = vmatpush.bf16.msra.mxu0 %v2844
      %2866 = vmatpush.bf16.msra.mxu0 %v2843
      %2867 = vmatmul.bf16.gmra.mxu0 %v2803
      %v2868 = vpop.f32.mrf.mxu0
      %v2869 = vadd.f32 0.0, %v2868
      %v2870 = vpop.f32.mrf.mxu0
      %v2871 = vadd.f32 0.0, %v2870
      %2872 = vmatmul.bf16.gmra.mxu0 %v2804
      %v2873 = vpop.f32.mrf.mxu0
      %v2874 = vadd.f32 0.0, %v2873
      %v2875 = vpop.f32.mrf.mxu0
      %v2876 = vadd.f32 0.0, %v2875
      %2877 = vmatmul.bf16.gmra.mxu0 %v2805
      %v2878 = vpop.f32.mrf.mxu0
      %v2879 = vadd.f32 0.0, %v2878
      %v2880 = vpop.f32.mrf.mxu0
      %v2881 = vadd.f32 0.0, %v2880
      %2882 = vmatmul.bf16.gmra.mxu0 %v2806
      %v2883 = vpop.f32.mrf.mxu0
      %v2884 = vadd.f32 0.0, %v2883
      %v2885 = vpop.f32.mrf.mxu0
      %v2886 = vadd.f32 0.0, %v2885
      %2887 = vdwg.mxu0
      %v2888 = vadd.f32 %v2643, %v2869
      %v2889 = vadd.f32 %v2644, %v2871
      %v2890 = vadd.f32 %v2645, %v2874
      %v2891 = vadd.f32 %v2646, %v2876
      %v2892 = vadd.f32 %v2647, %v2879
      %v2893 = vadd.f32 %v2648, %v2881
      %v2894 = vadd.f32 %v2649, %v2884
      %v2895 = vadd.f32 %v2650, %v2886
      %v2896 = vpack.c.bf16 %v2888, %v2888
      %v2897 = vpack.c.bf16 %v2889, %v2889
      %v2898 = vpack.c.bf16 %v2890, %v2890
      %v2899 = vpack.c.bf16 %v2891, %v2891
      %v2900 = vpack.c.bf16 %v2892, %v2892
      %v2901 = vpack.c.bf16 %v2893, %v2893
      %v2902 = vpack.c.bf16 %v2894, %v2894
      %v2903 = vpack.c.bf16 %v2895, %v2895
      %2904 = vst [vmem:[%s343] sm:$0xf] %v2896
      %2905 = vst [vmem:[%s343 + $0x4] sm:$0xf] %v2897
      %2906 = vst [vmem:[%s343 + $0x8] sm:$0xf] %v2898
      %2907 = vst [vmem:[%s343 + $0xc] sm:$0xf] %v2899
      %2908 = vst [vmem:[%s343 + $0x10] sm:$0xf] %v2900
      %2909 = vst [vmem:[%s343 + $0x14] sm:$0xf] %v2901
      %2910 = vst [vmem:[%s343 + $0x18] sm:$0xf] %v2902
      %2911 = vst [vmem:[%s343 + $0x1c] sm:$0xf] %v2903
      %v2912 = vadd.f32 %v2888, %v2889
      %v2913 = vadd.f32 %v2912, %v2890
      %v2914 = vadd.f32 %v2913, %v2891
      %v2915 = vadd.f32 %v2914, %v2892
      %v2916 = vadd.f32 %v2915, %v2893
      %v2917 = vadd.f32 %v2916, %v2894
      %v2918 = vadd.f32 %v2917, %v2895
      %v2919 = vrot.slane %v2918, 4
      %v2920 = vadd.f32 %v2918, %v2919
      %v2921 = vrot.slane %v2920, 2
      %v2922 = vadd.f32 %v2920, %v2921
      %v2923 = vrot.slane %v2922, 1
      %v2924 = vadd.f32 %v2922, %v2923
      %2925 = vst [vmem:[%s346] sm:$0x1] %v2924
      %v2926 = vmul.f32 %v2888, %v2888
      %v2927 = vmul.f32 %v2889, %v2889
      %v2928 = vmul.f32 %v2890, %v2890
      %v2929 = vmul.f32 %v2891, %v2891
      %v2930 = vmul.f32 %v2892, %v2892
      %v2931 = vmul.f32 %v2893, %v2893
      %v2932 = vmul.f32 %v2894, %v2894
      %v2933 = vmul.f32 %v2895, %v2895
      %v2934 = vadd.f32 %v2926, %v2927
      %v2935 = vadd.f32 %v2934, %v2928
      %v2936 = vadd.f32 %v2935, %v2929
      %v2937 = vadd.f32 %v2936, %v2930
      %v2938 = vadd.f32 %v2937, %v2931
      %v2939 = vadd.f32 %v2938, %v2932
      %v2940 = vadd.f32 %v2939, %v2933
      %v2941 = vrot.slane %v2940, 4
      %v2942 = vadd.f32 %v2940, %v2941
      %v2943 = vrot.slane %v2942, 2
      %v2944 = vadd.f32 %v2942, %v2943
      %v2945 = vrot.slane %v2944, 1
      %v2946 = vadd.f32 %v2944, %v2945
      %2947 = vst [vmem:[%s349] sm:$0x1] %v2946
      %p2948 = scmp.lt.s32.totalorder %s21, 1
      %s2949 = scalar_select %p2948, %s21, 1
      %s2950 = smul.addr %s2949, 8
      %s2951 = smul.addr %s2950, 4
      %s2952 = scalar_lea.vmem %s7, %s2951
      %p2953 = scmp.lt.s32.totalorder %s21, 1
      %s2954 = scalar_select %p2953, %s21, 1
      %s2955 = scalar_lea.vmem %s8, %s2954
      %p2956 = scmp.lt.s32.totalorder %s21, 1
      %s2957 = scalar_select %p2956, %s21, 1
      %s2958 = scalar_lea.vmem %s9, %s2957
      // Predicated region
      $region49: #{preact_bottleneck_pallas.8} parent=47 // pred_check
        %p2959 = pneg %p191
      $region50: #{preact_bottleneck_pallas.8} parent=47 // pred_check_branch
        %2961 = sbr.rel (%p2959) target = $region52
      $region51: #{preact_bottleneck_pallas.8} parent=47 // pred_region
        _
      $region52: #{preact_bottleneck_pallas.8} parent=47 // pred_fallthru
        _
      // Predicated region
      $region53: #{preact_bottleneck_pallas.8} parent=47 // pred_check
        %p2962 = pneg %p217
      $region54: #{preact_bottleneck_pallas.8} parent=47 // pred_check_branch
        %2964 = sbr.rel (%p2962) target = $region56
      $region55: #{preact_bottleneck_pallas.8} parent=47 // pred_region
        _
      $region56: #{preact_bottleneck_pallas.8} parent=47 // pred_fallthru
        _
      // Predicated region
      $region57: #{preact_bottleneck_pallas.8} parent=47 // pred_check
        %p2965 = pneg %p243
      $region58: #{preact_bottleneck_pallas.8} parent=47 // pred_check_branch
        %2967 = sbr.rel (%p2965) target = $region60
      $region59: #{preact_bottleneck_pallas.8} parent=47 // pred_region
        _
      $region60: #{preact_bottleneck_pallas.8} parent=47 // pred_fallthru
        _
    $region48: #{preact_bottleneck_pallas.8} parent=5 // pred_fallthru
      _
    %p2968 = scmp.le.s32.totalorder 2, %s16
    // Predicated region
    $region61: #{preact_bottleneck_pallas.8} parent=5 // pred_check
      %p2969 = pneg %p2968
    $region62: #{preact_bottleneck_pallas.8} parent=5 // pred_check_branch
      %2971 = sbr.rel (%p2969) target = $region64
    $region63: #{preact_bottleneck_pallas.8} parent=5 // pred_region
      %s2972 = ssub.s32 %s16, 2
      // Predicated region
      $region65: #{preact_bottleneck_pallas.8} parent=63 // pred_check
        %p2973 = pneg %p197
      $region66: #{preact_bottleneck_pallas.8} parent=63 // pred_check_branch
        %2975 = sbr.rel (%p2973) target = $region68
      $region67: #{preact_bottleneck_pallas.8} parent=63 // pred_region
        %p2976 = scmp.lt.s32.totalorder %s22, 1
        %s2977 = scalar_select %p2976, %s22, 1
        %s2978 = smul.addr %s2977, 8
        %s2979 = smul.addr %s2978, 4
        %s2980 = scalar_lea.vmem %s7, %s2979
      $region68: #{preact_bottleneck_pallas.8} parent=63 // pred_fallthru
        _
      // Predicated region
      $region69: #{preact_bottleneck_pallas.8} parent=63 // pred_check
        %p2981 = pneg %p223
      $region70: #{preact_bottleneck_pallas.8} parent=63 // pred_check_branch
        %2983 = sbr.rel (%p2981) target = $region72
      $region71: #{preact_bottleneck_pallas.8} parent=63 // pred_region
        %p2984 = scmp.lt.s32.totalorder %s22, 1
        %s2985 = scalar_select %p2984, %s22, 1
        %s2986 = scalar_lea.vmem %s8, %s2985
      $region72: #{preact_bottleneck_pallas.8} parent=63 // pred_fallthru
        _
      // Predicated region
      $region73: #{preact_bottleneck_pallas.8} parent=63 // pred_check
        %p2987 = pneg %p249
      $region74: #{preact_bottleneck_pallas.8} parent=63 // pred_check_branch
        %2989 = sbr.rel (%p2987) target = $region76
      $region75: #{preact_bottleneck_pallas.8} parent=63 // pred_region
        %p2990 = scmp.lt.s32.totalorder %s22, 1
        %s2991 = scalar_select %p2990, %s22, 1
        %s2992 = scalar_lea.vmem %s9, %s2991
      $region76: #{preact_bottleneck_pallas.8} parent=63 // pred_fallthru
        _
    $region64: #{preact_bottleneck_pallas.8} parent=5 // pred_fallthru
      _
  $region6: #{preact_bottleneck_pallas.8} parent=0 // loop_footer
    %s20 = sadd.s32 1, %s16
  $region7: #{preact_bottleneck_pallas.8} parent=0 // loop_footer_branch
    %15 = sbr.rel target = $region3
  $region8: #{preact_bottleneck_pallas.8} parent=0 // loop_exit
    _

</llo_original>
